<compile_context>
chip_gen: v5e
topology: v5e:2x2
jax: 0.10.0
libtpu: 0.0.40
codegen_flags: <defaults>
</compile_context>

<pallas_src>
import functools
import math

import jax
import jax.numpy as jnp
from jax import lax
from jax.experimental import pallas as pl
from jax.experimental.pallas import tpu as pltpu

GROUPS = 8
EPS = 1e-5


# ---------------------------------------------------------------------------
# In-kernel helpers
# ---------------------------------------------------------------------------
def _mxu(a, b):
    """a @ b with f32 accumulation; operands fed to the MXU as bf16 (same
    rounding DEFAULT f32 precision applies, keeps bf16-stored weights as-is)."""
    return lax.dot_general(a.astype(jnp.bfloat16), b.astype(jnp.bfloat16),
                           (((1,), (0,)), ((), ())),
                           preferred_element_type=jnp.float32)


def _mxu_nt(a, b):
    """a @ b.T with f32 accumulation (no explicit transpose materialized)."""
    return lax.dot_general(a.astype(jnp.bfloat16), b.astype(jnp.bfloat16),
                           (((1,), (1,)), ((), ())),
                           preferred_element_type=jnp.float32)


def _group_norm(x, gproj, w, b):
    """GroupNorm(GROUPS) over a (tokens, C) tile, in f32.

    gproj is the (C, C) group-averaging projection (one_hot @ one_hot.T / cs)
    precomputed in the wrapper, so per-group statistics take ONE default-
    precision MXU dot (one-pass mean / mean-square)."""
    m1 = jnp.mean(x, axis=0, keepdims=True)             # (1, C) channel mean
    m2 = jnp.mean(x * x, axis=0, keepdims=True)         # (1, C) channel mean-sq
    g = _mxu(jnp.concatenate([m1, m2], axis=0), gproj)  # (2, C) group mean / mean-sq
    gm = g[0:1, :]
    gv = jnp.maximum(g[1:2, :] - gm * gm, 0.0)
    return (x - gm) * lax.rsqrt(gv + EPS) * w + b


# ---------------------------------------------------------------------------
# Fused kernel: GN1 + SelfAttention + residual + GN2 + CrossAttention + residual
# Processes `nb` batch elements per grid step (nb == B on single-TC parts).
# ---------------------------------------------------------------------------
def attention_block_kernel(x_ref, ctx_ref, gproj_ref,
                           gn1w_ref, gn1b_ref,
                           wq1_ref, bq1_ref, wk1_ref, bk1_ref, wv1_ref, bv1_ref,
                           gamma_ref,
                           gn2w_ref, gn2b_ref,
                           wq2_ref, wk2_ref, wv2_ref,
                           hmask_ref, bsum_ref, wo_ref, bo_ref,
                           o_ref,
                           *, nb, heads, ctx_len, sa_scale, ca_scale):
    f32 = jnp.float32
    m = ctx_len

    # Constant operands hoisted out of the per-batch loop (loaded once).
    gproj = gproj_ref[...]
    gn1w, gn1b = gn1w_ref[...], gn1b_ref[...]
    gn2w, gn2b = gn2w_ref[...], gn2b_ref[...]
    bq1, bk1, bv1 = bq1_ref[...], bk1_ref[...], bv1_ref[...]
    bo = bo_ref[...]
    wq1, wk1, wv1 = wq1_ref[...], wk1_ref[...], wv1_ref[...]
    wq2, wk2, wv2 = wq2_ref[...], wk2_ref[...], wv2_ref[...]
    wo = wo_ref[...]
    hmask = hmask_ref[...]
    bsum = bsum_ref[...]
    gamma = gamma_ref[0]

    # Row h*m of the block-sum matrix is exactly head h's column indicator:
    # reuse it as the per-head column mask for the per-head softmax max.
    col_masks = [bsum[h * m:h * m + 1, :] > 0.5 for h in range(heads)]

    # nb is a static Python int (<= B, tiny), so a plain unrolled loop is fine.
    for b in range(nb):
        # Channel-major (C, n) tile straight from HBM (bf16); upcast + XLU
        # transpose in-kernel instead of a wrapper-side HBM transpose.
        x = x_ref[b].astype(f32).T                           # (n, C)

        # ---- GroupNorm 1 + single-head self-attention ----
        xn = _group_norm(x, gproj, gn1w, gn1b)
        q = _mxu(xn, wq1) + bq1                              # (n, C)
        k = _mxu(xn, wk1) + bk1
        v = _mxu(xn, wv1) + bv1
        # TODO(synk): for large H*W, tile this (n, n) score block flash-style
        # (online softmax over a KV grid axis) -- at n>=2048 the f32 scores
        # alone exceed v7x's 64 MiB VMEM.  Not needed at these shapes.
        s = _mxu_nt(q, k) * sa_scale                         # (n, n)
        s = s - jnp.max(s, axis=-1, keepdims=True)
        probs = jnp.exp(s)
        attn = probs * pl.reciprocal(jnp.sum(probs, axis=-1, keepdims=True),
                                     approx=True)
        sa = _mxu(attn, v)                                   # (n, C)
        # SelfAttention returns gamma*out + (its input == xn); block adds x.
        y = gamma * sa + xn + x                              # (n, C) residual 2

        # ---- GroupNorm 2 + multi-head cross-attention (block-diagonal heads;
        #      fine while head_dim is tiny -- switch to a heads-batched
        #      dot_general if head_dim ever reaches >=128) ----
        yn = _group_norm(y, gproj, gn2w, gn2b)
        qc = _mxu(yn, wq2)                                   # (n, C)   to_q (no bias)
        ctx = ctx_ref[b].astype(f32)                         # (m, cd)
        k2 = _mxu(ctx, wk2)                                  # (m, C)   to_k (no bias)
        v2 = _mxu(ctx, wv2)                                  # (m, C)   to_v (no bias)
        k_bd = jnp.concatenate([k2] * heads, axis=0) * hmask  # (heads*m, C)
        v_bd = jnp.concatenate([v2] * heads, axis=0) * hmask
        # One matmul gives all per-head scores: sim[:, h*m+j] = q_h . k_h[j].
        sim = _mxu_nt(qc, k_bd) * ca_scale                   # (n, heads*m)
        # Per-head row max (matches the reference per-head softmax exactly).
        shift = jnp.zeros_like(sim)
        for h in range(heads):
            mh = jnp.max(jnp.where(col_masks[h], sim, -1e30),
                         axis=-1, keepdims=True)             # (n, 1)
            shift = jnp.where(col_masks[h], mh, shift)
        pc = jnp.exp(sim - shift)
        denom = _mxu(pc, bsum)                               # per-head softmax denominators
        attn_c = pc * pl.reciprocal(denom, approx=True)
        oc = _mxu(attn_c, v_bd)                              # (n, C) == concat of heads
        oc = _mxu(oc, wo) + bo                               # to_out (with bias)

        # Store channel-major so the wrapper needs only a free reshape.
        o_ref[b] = (oc + y).T.astype(o_ref.dtype)


# ---------------------------------------------------------------------------
# Wrapper
# ---------------------------------------------------------------------------
def _is_v7x():
    try:
        kind = jax.devices()[0].device_kind.lower()
        return ("v7" in kind) or ("7x" in kind)
    except Exception:
        return False


def attention_block_forward(x, context, p):
    B, C, H, W = x.shape
    n = H * W
    m, cd = context.shape[1], context.shape[2]
    heads = p["heads"]
    d = C // heads
    cs = C // GROUPS
    bf16 = jnp.bfloat16
    f32 = jnp.float32

    # bf16 HBM storage for activations + big weights (halves DMA bytes).
    # Native channel-major layout: only a free reshape, NO HBM transpose.
    x_cn = x.reshape(B, C, n).astype(bf16)
    ctx = context.astype(bf16)

    # Small constant matrices, hoisted out of the kernel.
    oh = (jnp.arange(C)[:, None] // cs == jnp.arange(GROUPS)[None, :]).astype(f32)
    gproj = (oh @ oh.T) / cs                                   # (C, C) group-averaging
    row_head = jnp.arange(heads * m) // m
    col_head = jnp.arange(C) // d
    hmask = (row_head[:, None] == col_head[None, :]).astype(f32)   # (heads*m, C)
    bsum = (row_head[:, None] == row_head[None, :]).astype(f32)    # (heads*m, heads*m)

    # PyTorch Linear stores (out, in) -> transpose to (in, out); store bf16.
    wq1, wk1, wv1 = (p["sa_wq"].T.astype(bf16), p["sa_wk"].T.astype(bf16),
                     p["sa_wv"].T.astype(bf16))
    wq2 = p["ca_wq"].T.astype(bf16)
    wk2, wv2 = p["ca_wk"].T.astype(bf16), p["ca_wv"].T.astype(bf16)
    wo = p["ca_wo"].T.astype(bf16)
    vec = lambda a: a.reshape(1, -1).astype(f32)

    # Batch handling: whole batch in one grid step on single-TC parts; one
    # batch element per step on v7x so both TensorCores get work.
    v7x = _is_v7x()
    nb = 1 if (v7x and B > 1) else B
    grid = (B // nb,)
    # TODO(synk): on v7x verify in xprof that the batch axis really shards
    # across both TCs ("parallel" can be a codegen no-op); if not, switch to
    # pltpu.CORE_PARALLEL / pl.core_map.  Also mark the constant specs below
    # with pipeline_mode=pl.Buffered(1) in the multi-step path (they never
    # change block index, so the default double buffer is wasted VMEM).

    batch_spec = lambda shape: pl.BlockSpec((nb,) + shape,
                                            lambda i: (i,) + (0,) * len(shape))
    const_spec = lambda shape: pl.BlockSpec(shape, lambda i: (0,) * len(shape))

    in_specs = [
        batch_spec((C, n)),                                    # x (channel-major)
        batch_spec((m, cd)),                                   # context
        const_spec((C, C)),                                    # group-avg projection
        const_spec((1, C)), const_spec((1, C)),                # gn1 w, b
        const_spec((C, C)), const_spec((1, C)),                # Wq1, bq1
        const_spec((C, C)), const_spec((1, C)),                # Wk1, bk1
        const_spec((C, C)), const_spec((1, C)),                # Wv1, bv1
        pl.BlockSpec(memory_space=pltpu.MemorySpace.SMEM),     # gamma scalar
        const_spec((1, C)), const_spec((1, C)),                # gn2 w, b
        const_spec((C, C)),                                    # cross Wq
        const_spec((cd, C)), const_spec((cd, C)),              # cross Wk, Wv
        const_spec((heads * m, C)),                            # head mask
        const_spec((heads * m, heads * m)),                    # block-sum matrix
        const_spec((C, C)), const_spec((1, C)),                # Wo, bo
    ]

    kernel = functools.partial(attention_block_kernel, nb=nb, heads=heads,
                               ctx_len=m, sa_scale=C ** -0.5, ca_scale=d ** -0.5)

    # 128-MiB-VMEM parts (v4/v5e/v5p/v6e) get a generous budget; v7x (64 MiB
    # physical) is capped to leave DMA/scratch headroom.
    vmem_limit = (48 if v7x else 96) * 1024 * 1024

    z = pl.pallas_call(
        kernel,
        out_shape=jax.ShapeDtypeStruct((B, C, n), x.dtype),
        grid=grid,
        in_specs=in_specs,
        out_specs=batch_spec((C, n)),
        compiler_params=pltpu.CompilerParams(
            dimension_semantics=("parallel",),
            vmem_limit_bytes=vmem_limit,
        ),
    )(x_cn, ctx, gproj,
      vec(p["gn1_w"]), vec(p["gn1_b"]),
      wq1, vec(p["sa_bq"]), wk1, vec(p["sa_bk"]), wv1, vec(p["sa_bv"]),
      p["sa_gamma"].astype(f32).reshape(1),
      vec(p["gn2_w"]), vec(p["gn2_b"]),
      wq2, wk2, wv2, hmask, bsum, wo, vec(p["ca_bo"]))

    # Output is already channel-major: a free reshape, no HBM transpose.
    return z.reshape(B, C, H, W)


# ---------------------------------------------------------------------------
# Pure-JAX reference (mirrors the PyTorch forward) for verification
# ---------------------------------------------------------------------------
def ref_forward(x, context, p):
    B, C, H, W = x.shape
    n = H * W
    heads = p["heads"]
    d = C // heads

    def gn(t, w, b):
        tg = t.reshape(B, GROUPS, C // GROUPS, H, W)
        mean = tg.mean(axis=(2, 3, 4), keepdims=True)
        var = ((tg - mean) ** 2).mean(axis=(2, 3, 4), keepdims=True)
        tn = ((tg - mean) / jnp.sqrt(var + EPS)).reshape(B, C, H, W)
        return tn * w[None, :, None, None] + b[None, :, None, None]

    residual = x
    xn = gn(x, p["gn1_w"], p["gn1_b"])
    xf = jnp.transpose(xn.reshape(B, C, n), (0, 2, 1))
    q = xf @ p["sa_wq"].T + p["sa_bq"]
    k = xf @ p["sa_wk"].T + p["sa_bk"]
    v = xf @ p["sa_wv"].T + p["sa_bv"]
    attn = jax.nn.softmax(jnp.einsum("bic,bjc->bij", q, k) * C ** -0.5, axis=-1)
    out = jnp.einsum("bij,bjc->bic", attn, v)
    out4 = jnp.transpose(out, (0, 2, 1)).reshape(B, C, H, W)
    y = p["sa_gamma"] * out4 + xn + residual

    residual = y
    yn = gn(y, p["gn2_w"], p["gn2_b"])
    yf = jnp.transpose(yn.reshape(B, C, n), (0, 2, 1))
    q = yf @ p["ca_wq"].T
    k = context @ p["ca_wk"].T
    v = context @ p["ca_wv"].T
    split = lambda t: t.reshape(B, -1, heads, d).transpose(0, 2, 1, 3)
    qh, kh, vh = split(q), split(k), split(v)
    sim = jnp.einsum("bhid,bhjd->bhij", qh, kh) * d ** -0.5
    attn = jax.nn.softmax(sim, axis=-1)
    oh = jnp.einsum("bhij,bhjd->bhid", attn, vh)
    o = oh.transpose(0, 2, 1, 3).reshape(B, n, C)
    o = o @ p["ca_wo"].T + p["ca_bo"]
    o4 = jnp.transpose(o, (0, 2, 1)).reshape(B, C, H, W)
    return o4 + residual


# ---------------------------------------------------------------------------
if __name__ == "__main__":
    B, C, H, W = 2, 32, 8, 8          # dim=32 (divisible by 8 groups & 8 heads)
    context_dim, heads, m = 16, 8, 8  # context: (B, m, context_dim)

    key = jax.random.PRNGKey(0)
    ks = jax.random.split(key, 16)

    def lin_w(k, out_f, in_f):
        return (jax.random.normal(k, (out_f, in_f)) / math.sqrt(in_f)).astype(jnp.float32)

    params = {
        "heads": heads,
        "gn1_w": 1.0 + 0.1 * jax.random.normal(ks[0], (C,), jnp.float32),
        "gn1_b": 0.1 * jax.random.normal(ks[1], (C,), jnp.float32),
        "sa_wq": lin_w(ks[2], C, C), "sa_bq": 0.1 * jax.random.normal(ks[3], (C,), jnp.float32),
        "sa_wk": lin_w(ks[4], C, C), "sa_bk": 0.1 * jax.random.normal(ks[5], (C,), jnp.float32),
        "sa_wv": lin_w(ks[6], C, C), "sa_bv": 0.1 * jax.random.normal(ks[7], (C,), jnp.float32),
        "sa_gamma": jnp.array(1.0, dtype=jnp.float32),
        "gn2_w": 1.0 + 0.1 * jax.random.normal(ks[8], (C,), jnp.float32),
        "gn2_b": 0.1 * jax.random.normal(ks[9], (C,), jnp.float32),
        "ca_wq": lin_w(ks[10], C, C),
        "ca_wk": lin_w(ks[11], C, context_dim),
        "ca_wv": lin_w(ks[12], C, context_dim),
        "ca_wo": lin_w(ks[13], C, C),
        "ca_bo": 0.1 * jax.random.normal(ks[14], (C,), jnp.float32),
    }

    x = jax.random.normal(jax.random.fold_in(key, 100), (B, C, H, W), jnp.float32)
    context = jax.random.normal(jax.random.fold_in(key, 101), (B, m, context_dim), jnp.float32)

    out = attention_block_forward(x, context, params)
    jax.block_until_ready(out)
    assert out.shape == (B, C, H, W)

    # Reference is evaluated at the same bf16-storage-quantized activations /
    # weights the kernel uses, so the check isolates kernel numerics from the
    # (intentional) bf16 HBM storage.  Remaining error comes from single-bf16-
    # pass MXU matmuls (both sides), the bf16-operand GN statistic dot, and the
    # approximate EUP reciprocal in the softmax normalizations.
    q = lambda a: a.astype(jnp.bfloat16).astype(jnp.float32)
    params_q = dict(params)
    for name in ("sa_wq", "sa_wk", "sa_wv", "ca_wq", "ca_wk", "ca_wv", "ca_wo"):
        params_q[name] = q(params[name])
    ref = ref_forward(q(x), q(context), params_q)

    err = float(jnp.max(jnp.abs(out - ref)))
    if not bool(jnp.allclose(out, ref, rtol=2e-2, atol=2e-2)):
        raise AssertionError(f"Pallas output mismatch, max abs err = {err}")

    print("KERNEL_OK")
</pallas_src>

<mosaic_0001>
module attributes {stable_mosaic.version = 11 : i64} {
  func.func @attention_block_kernel(%arg0: i32, %arg1: memref<2x32x64xbf16, #tpu.memory_space<vmem>>, %arg2: memref<2x8x16xbf16, #tpu.memory_space<vmem>>, %arg3: memref<32x32xf32, #tpu.memory_space<vmem>>, %arg4: memref<1x32xf32, #tpu.memory_space<vmem>>, %arg5: memref<1x32xf32, #tpu.memory_space<vmem>>, %arg6: memref<32x32xbf16, #tpu.memory_space<vmem>>, %arg7: memref<1x32xf32, #tpu.memory_space<vmem>>, %arg8: memref<32x32xbf16, #tpu.memory_space<vmem>>, %arg9: memref<1x32xf32, #tpu.memory_space<vmem>>, %arg10: memref<32x32xbf16, #tpu.memory_space<vmem>>, %arg11: memref<1x32xf32, #tpu.memory_space<vmem>>, %arg12: memref<1xf32, #tpu.memory_space<smem>>, %arg13: memref<1x32xf32, #tpu.memory_space<vmem>>, %arg14: memref<1x32xf32, #tpu.memory_space<vmem>>, %arg15: memref<32x32xbf16, #tpu.memory_space<vmem>>, %arg16: memref<16x32xbf16, #tpu.memory_space<vmem>>, %arg17: memref<16x32xbf16, #tpu.memory_space<vmem>>, %arg18: memref<64x32xf32, #tpu.memory_space<vmem>>, %arg19: memref<64x64xf32, #tpu.memory_space<vmem>>, %arg20: memref<32x32xbf16, #tpu.memory_space<vmem>>, %arg21: memref<1x32xf32, #tpu.memory_space<vmem>>, %arg22: memref<2x32x64xf32, #tpu.memory_space<vmem>>) attributes {dimension_semantics = [#tpu.dimension_semantics<parallel>], iteration_bounds = array<i64: 1>, scalar_prefetch = 0 : i64, scratch_operands = 0 : i64, tpu.core_type = #tpu.core_type<tc>, window_params = [{transform_indices = @transform_0, window_bounds = array<i64: 2, 32, 64>}, {transform_indices = @transform_1, window_bounds = array<i64: 2, 8, 16>}, {pipeline_mode = #tpu.pipeline_mode<synchronous>, transform_indices = @transform_2, window_bounds = array<i64: 32, 32>}, {pipeline_mode = #tpu.pipeline_mode<synchronous>, transform_indices = @transform_3, window_bounds = array<i64: 1, 32>}, {pipeline_mode = #tpu.pipeline_mode<synchronous>, transform_indices = @transform_4, window_bounds = array<i64: 1, 32>}, {pipeline_mode = #tpu.pipeline_mode<synchronous>, transform_indices = @transform_5, window_bounds = array<i64: 32, 32>}, {pipeline_mode = #tpu.pipeline_mode<synchronous>, transform_indices = @transform_6, window_bounds = array<i64: 1, 32>}, {pipeline_mode = #tpu.pipeline_mode<synchronous>, transform_indices = @transform_7, window_bounds = array<i64: 32, 32>}, {pipeline_mode = #tpu.pipeline_mode<synchronous>, transform_indices = @transform_8, window_bounds = array<i64: 1, 32>}, {pipeline_mode = #tpu.pipeline_mode<synchronous>, transform_indices = @transform_9, window_bounds = array<i64: 32, 32>}, {pipeline_mode = #tpu.pipeline_mode<synchronous>, transform_indices = @transform_10, window_bounds = array<i64: 1, 32>}, {transform_indices = @transform_11, window_bounds = array<i64: 1>}, {pipeline_mode = #tpu.pipeline_mode<synchronous>, transform_indices = @transform_12, window_bounds = array<i64: 1, 32>}, {pipeline_mode = #tpu.pipeline_mode<synchronous>, transform_indices = @transform_13, window_bounds = array<i64: 1, 32>}, {pipeline_mode = #tpu.pipeline_mode<synchronous>, transform_indices = @transform_14, window_bounds = array<i64: 32, 32>}, {pipeline_mode = #tpu.pipeline_mode<synchronous>, transform_indices = @transform_15, window_bounds = array<i64: 16, 32>}, {pipeline_mode = #tpu.pipeline_mode<synchronous>, transform_indices = @transform_16, window_bounds = array<i64: 16, 32>}, {pipeline_mode = #tpu.pipeline_mode<synchronous>, transform_indices = @transform_17, window_bounds = array<i64: 64, 32>}, {pipeline_mode = #tpu.pipeline_mode<synchronous>, transform_indices = @transform_18, window_bounds = array<i64: 64, 64>}, {pipeline_mode = #tpu.pipeline_mode<synchronous>, transform_indices = @transform_19, window_bounds = array<i64: 32, 32>}, {pipeline_mode = #tpu.pipeline_mode<synchronous>, transform_indices = @transform_20, window_bounds = array<i64: 1, 32>}, {transform_indices = @transform_21, window_bounds = array<i64: 2, 32, 64>}]} {
    %c0 = arith.constant 0 : index
    %c0_0 = arith.constant 0 : index
    %0 = vector.load %arg3[%c0, %c0_0] : memref<32x32xf32, #tpu.memory_space<vmem>>, vector<32x32xf32>
    %c0_1 = arith.constant 0 : index
    %c0_2 = arith.constant 0 : index
    %1 = vector.load %arg4[%c0_1, %c0_2] : memref<1x32xf32, #tpu.memory_space<vmem>>, vector<1x32xf32>
    %c0_3 = arith.constant 0 : index
    %c0_4 = arith.constant 0 : index
    %2 = vector.load %arg5[%c0_3, %c0_4] : memref<1x32xf32, #tpu.memory_space<vmem>>, vector<1x32xf32>
    %c0_5 = arith.constant 0 : index
    %c0_6 = arith.constant 0 : index
    %3 = vector.load %arg13[%c0_5, %c0_6] : memref<1x32xf32, #tpu.memory_space<vmem>>, vector<1x32xf32>
    %c0_7 = arith.constant 0 : index
    %c0_8 = arith.constant 0 : index
    %4 = vector.load %arg14[%c0_7, %c0_8] : memref<1x32xf32, #tpu.memory_space<vmem>>, vector<1x32xf32>
    %c0_9 = arith.constant 0 : index
    %c0_10 = arith.constant 0 : index
    %5 = vector.load %arg7[%c0_9, %c0_10] : memref<1x32xf32, #tpu.memory_space<vmem>>, vector<1x32xf32>
    %c0_11 = arith.constant 0 : index
    %c0_12 = arith.constant 0 : index
    %6 = vector.load %arg9[%c0_11, %c0_12] : memref<1x32xf32, #tpu.memory_space<vmem>>, vector<1x32xf32>
    %c0_13 = arith.constant 0 : index
    %c0_14 = arith.constant 0 : index
    %7 = vector.load %arg11[%c0_13, %c0_14] : memref<1x32xf32, #tpu.memory_space<vmem>>, vector<1x32xf32>
    %c0_15 = arith.constant 0 : index
    %c0_16 = arith.constant 0 : index
    %8 = vector.load %arg21[%c0_15, %c0_16] : memref<1x32xf32, #tpu.memory_space<vmem>>, vector<1x32xf32>
    %c0_17 = arith.constant 0 : index
    %c0_18 = arith.constant 0 : index
    %9 = vector.load %arg6[%c0_17, %c0_18] : memref<32x32xbf16, #tpu.memory_space<vmem>>, vector<32x32xbf16>
    %c0_19 = arith.constant 0 : index
    %c0_20 = arith.constant 0 : index
    %10 = vector.load %arg8[%c0_19, %c0_20] : memref<32x32xbf16, #tpu.memory_space<vmem>>, vector<32x32xbf16>
    %c0_21 = arith.constant 0 : index
    %c0_22 = arith.constant 0 : index
    %11 = vector.load %arg10[%c0_21, %c0_22] : memref<32x32xbf16, #tpu.memory_space<vmem>>, vector<32x32xbf16>
    %c0_23 = arith.constant 0 : index
    %c0_24 = arith.constant 0 : index
    %12 = vector.load %arg15[%c0_23, %c0_24] : memref<32x32xbf16, #tpu.memory_space<vmem>>, vector<32x32xbf16>
    %c0_25 = arith.constant 0 : index
    %c0_26 = arith.constant 0 : index
    %13 = vector.load %arg16[%c0_25, %c0_26] : memref<16x32xbf16, #tpu.memory_space<vmem>>, vector<16x32xbf16>
    %c0_27 = arith.constant 0 : index
    %c0_28 = arith.constant 0 : index
    %14 = vector.load %arg17[%c0_27, %c0_28] : memref<16x32xbf16, #tpu.memory_space<vmem>>, vector<16x32xbf16>
    %c0_29 = arith.constant 0 : index
    %c0_30 = arith.constant 0 : index
    %15 = vector.load %arg20[%c0_29, %c0_30] : memref<32x32xbf16, #tpu.memory_space<vmem>>, vector<32x32xbf16>
    %c0_31 = arith.constant 0 : index
    %c0_32 = arith.constant 0 : index
    %16 = vector.load %arg18[%c0_31, %c0_32] : memref<64x32xf32, #tpu.memory_space<vmem>>, vector<64x32xf32>
    %c0_33 = arith.constant 0 : index
    %c0_34 = arith.constant 0 : index
    %17 = vector.load %arg19[%c0_33, %c0_34] : memref<64x64xf32, #tpu.memory_space<vmem>>, vector<64x64xf32>
    %c0_35 = arith.constant 0 : index
    %18 = memref.load %arg12[%c0_35] : memref<1xf32, #tpu.memory_space<smem>>
    %19 = vector.extract_strided_slice %17 {offsets = [0, 0], sizes = [1, 64], strides = [1, 1]} : vector<64x64xf32> to vector<1x64xf32>
    %cst = arith.constant 5.000000e-01 : f32
    %20 = vector.broadcast %cst : f32 to vector<1x64xf32>
    %21 = arith.cmpf ogt, %19, %20 : vector<1x64xf32>
    %22 = vector.extract_strided_slice %17 {offsets = [8, 0], sizes = [1, 64], strides = [1, 1]} : vector<64x64xf32> to vector<1x64xf32>
    %cst_36 = arith.constant 5.000000e-01 : f32
    %23 = vector.broadcast %cst_36 : f32 to vector<1x64xf32>
    %24 = arith.cmpf ogt, %22, %23 : vector<1x64xf32>
    %25 = vector.extract_strided_slice %17 {offsets = [16, 0], sizes = [1, 64], strides = [1, 1]} : vector<64x64xf32> to vector<1x64xf32>
    %cst_37 = arith.constant 5.000000e-01 : f32
    %26 = vector.broadcast %cst_37 : f32 to vector<1x64xf32>
    %27 = arith.cmpf ogt, %25, %26 : vector<1x64xf32>
    %28 = vector.extract_strided_slice %17 {offsets = [24, 0], sizes = [1, 64], strides = [1, 1]} : vector<64x64xf32> to vector<1x64xf32>
    %cst_38 = arith.constant 5.000000e-01 : f32
    %29 = vector.broadcast %cst_38 : f32 to vector<1x64xf32>
    %30 = arith.cmpf ogt, %28, %29 : vector<1x64xf32>
    %31 = vector.extract_strided_slice %17 {offsets = [32, 0], sizes = [1, 64], strides = [1, 1]} : vector<64x64xf32> to vector<1x64xf32>
    %cst_39 = arith.constant 5.000000e-01 : f32
    %32 = vector.broadcast %cst_39 : f32 to vector<1x64xf32>
    %33 = arith.cmpf ogt, %31, %32 : vector<1x64xf32>
    %34 = vector.extract_strided_slice %17 {offsets = [40, 0], sizes = [1, 64], strides = [1, 1]} : vector<64x64xf32> to vector<1x64xf32>
    %cst_40 = arith.constant 5.000000e-01 : f32
    %35 = vector.broadcast %cst_40 : f32 to vector<1x64xf32>
    %36 = arith.cmpf ogt, %34, %35 : vector<1x64xf32>
    %37 = vector.extract_strided_slice %17 {offsets = [48, 0], sizes = [1, 64], strides = [1, 1]} : vector<64x64xf32> to vector<1x64xf32>
    %cst_41 = arith.constant 5.000000e-01 : f32
    %38 = vector.broadcast %cst_41 : f32 to vector<1x64xf32>
    %39 = arith.cmpf ogt, %37, %38 : vector<1x64xf32>
    %40 = vector.extract_strided_slice %17 {offsets = [56, 0], sizes = [1, 64], strides = [1, 1]} : vector<64x64xf32> to vector<1x64xf32>
    %cst_42 = arith.constant 5.000000e-01 : f32
    %41 = vector.broadcast %cst_42 : f32 to vector<1x64xf32>
    %42 = arith.cmpf ogt, %40, %41 : vector<1x64xf32>
    %c0_43 = arith.constant 0 : index
    %c0_44 = arith.constant 0 : index
    %c0_45 = arith.constant 0 : index
    %43 = vector.load %arg1[%c0_43, %c0_44, %c0_45] : memref<2x32x64xbf16, #tpu.memory_space<vmem>>, vector<1x32x64xbf16>
    %44 = vector.shape_cast %43 : vector<1x32x64xbf16> to vector<32x64xbf16>
    %45 = arith.extf %44 : vector<32x64xbf16> to vector<32x64xf32>
    %46 = tpu.transpose %45, [1, 0] : vector<32x64xf32> -> vector<64x32xf32>
    %cst_46 = arith.constant dense<0.000000e+00> : vector<32xf32>
    %47 = vector.multi_reduction <add>, %46, %cst_46 [0] : vector<64x32xf32> to vector<32xf32>
    %48 = vector.shape_cast %47 : vector<32xf32> to vector<1x32xf32>
    %cst_47 = arith.constant 6.400000e+01 : f32
    %49 = vector.broadcast %cst_47 : f32 to vector<1x32xf32>
    %50 = arith.divf %48, %49 : vector<1x32xf32>
    %51 = arith.mulf %46, %46 : vector<64x32xf32>
    %cst_48 = arith.constant dense<0.000000e+00> : vector<32xf32>
    %52 = vector.multi_reduction <add>, %51, %cst_48 [0] : vector<64x32xf32> to vector<32xf32>
    %53 = vector.shape_cast %52 : vector<32xf32> to vector<1x32xf32>
    %cst_49 = arith.constant 6.400000e+01 : f32
    %54 = vector.broadcast %cst_49 : f32 to vector<1x32xf32>
    %55 = arith.divf %53, %54 : vector<1x32xf32>
    %56 = tpu.concatenate %50, %55 in 0 : vector<1x32xf32>, vector<1x32xf32> -> vector<2x32xf32>
    %57 = arith.truncf %56 : vector<2x32xf32> to vector<2x32xbf16>
    %58 = arith.truncf %0 : vector<32x32xf32> to vector<32x32xbf16>
    %cst_50 = arith.constant dense<0.000000e+00> : vector<2x32xf32>
    %59 = tpu.matmul %57, %58, %cst_50 {dimension_numbers = #tpu.dot_dimension_numbers<[1], [0], [0], [1], [0, 0, 1, 1], [], []>} : vector<2x32xbf16>, vector<32x32xbf16>, vector<2x32xf32> -> vector<2x32xf32>
    %60 = vector.extract_strided_slice %59 {offsets = [0, 0], sizes = [1, 32], strides = [1, 1]} : vector<2x32xf32> to vector<1x32xf32>
    %61 = vector.extract_strided_slice %59 {offsets = [1, 0], sizes = [1, 32], strides = [1, 1]} : vector<2x32xf32> to vector<1x32xf32>
    %62 = arith.mulf %60, %60 : vector<1x32xf32>
    %63 = arith.subf %61, %62 : vector<1x32xf32>
    %cst_51 = arith.constant 0.000000e+00 : f32
    %64 = vector.broadcast %cst_51 : f32 to vector<1x32xf32>
    %65 = arith.maximumf %63, %64 : vector<1x32xf32>
    %66 = vector.broadcast %60 : vector<1x32xf32> to vector<64x32xf32>
    %67 = arith.subf %46, %66 : vector<64x32xf32>
    %cst_52 = arith.constant 9.99999974E-6 : f32
    %68 = vector.broadcast %cst_52 : f32 to vector<1x32xf32>
    %69 = arith.addf %65, %68 : vector<1x32xf32>
    %70 = math.rsqrt %69 : vector<1x32xf32>
    %71 = vector.broadcast %70 : vector<1x32xf32> to vector<64x32xf32>
    %72 = arith.mulf %67, %71 : vector<64x32xf32>
    %73 = vector.broadcast %1 : vector<1x32xf32> to vector<64x32xf32>
    %74 = arith.mulf %72, %73 : vector<64x32xf32>
    %75 = vector.broadcast %2 : vector<1x32xf32> to vector<64x32xf32>
    %76 = arith.addf %74, %75 : vector<64x32xf32>
    %77 = arith.truncf %76 : vector<64x32xf32> to vector<64x32xbf16>
    %cst_53 = arith.constant dense<0.000000e+00> : vector<64x32xf32>
    %78 = tpu.matmul %77, %9, %cst_53 {dimension_numbers = #tpu.dot_dimension_numbers<[1], [0], [0], [1], [0, 0, 1, 1], [], []>} : vector<64x32xbf16>, vector<32x32xbf16>, vector<64x32xf32> -> vector<64x32xf32>
    %79 = vector.broadcast %5 : vector<1x32xf32> to vector<64x32xf32>
    %80 = arith.addf %78, %79 : vector<64x32xf32>
    %81 = arith.truncf %76 : vector<64x32xf32> to vector<64x32xbf16>
    %cst_54 = arith.constant dense<0.000000e+00> : vector<64x32xf32>
    %82 = tpu.matmul %81, %10, %cst_54 {dimension_numbers = #tpu.dot_dimension_numbers<[1], [0], [0], [1], [0, 0, 1, 1], [], []>} : vector<64x32xbf16>, vector<32x32xbf16>, vector<64x32xf32> -> vector<64x32xf32>
    %83 = vector.broadcast %6 : vector<1x32xf32> to vector<64x32xf32>
    %84 = arith.addf %82, %83 : vector<64x32xf32>
    %85 = arith.truncf %76 : vector<64x32xf32> to vector<64x32xbf16>
    %cst_55 = arith.constant dense<0.000000e+00> : vector<64x32xf32>
    %86 = tpu.matmul %85, %11, %cst_55 {dimension_numbers = #tpu.dot_dimension_numbers<[1], [0], [0], [1], [0, 0, 1, 1], [], []>} : vector<64x32xbf16>, vector<32x32xbf16>, vector<64x32xf32> -> vector<64x32xf32>
    %87 = vector.broadcast %7 : vector<1x32xf32> to vector<64x32xf32>
    %88 = arith.addf %86, %87 : vector<64x32xf32>
    %89 = arith.truncf %80 : vector<64x32xf32> to vector<64x32xbf16>
    %90 = arith.truncf %84 : vector<64x32xf32> to vector<64x32xbf16>
    %cst_56 = arith.constant dense<0.000000e+00> : vector<64x64xf32>
    %91 = tpu.matmul %89, %90, %cst_56 {dimension_numbers = #tpu.dot_dimension_numbers<[1], [1], [0], [0], [0, 0, 1, 0], [], []>} : vector<64x32xbf16>, vector<64x32xbf16>, vector<64x64xf32> -> vector<64x64xf32>
    %cst_57 = arith.constant 0.176776692 : f32
    %92 = vector.broadcast %cst_57 : f32 to vector<64x64xf32>
    %93 = arith.mulf %91, %92 : vector<64x64xf32>
    %cst_58 = arith.constant dense<0xFF800000> : vector<64xf32>
    %94 = vector.multi_reduction <maximumf>, %93, %cst_58 [1] : vector<64x64xf32> to vector<64xf32>
    %95 = vector.shape_cast %94 : vector<64xf32> to vector<64x1xf32>
    %96 = vector.broadcast %95 : vector<64x1xf32> to vector<64x64xf32>
    %97 = arith.subf %93, %96 : vector<64x64xf32>
    %98 = math.exp %97 : vector<64x64xf32>
    %cst_59 = arith.constant dense<0.000000e+00> : vector<64xf32>
    %99 = vector.multi_reduction <add>, %98, %cst_59 [1] : vector<64x64xf32> to vector<64xf32>
    %100 = vector.shape_cast %99 : vector<64xf32> to vector<64x1xf32>
    %101 = tpu.reciprocal %100 {approx = true} : vector<64x1xf32> -> vector<64x1xf32>
    %102 = vector.broadcast %101 : vector<64x1xf32> to vector<64x64xf32>
    %103 = arith.mulf %98, %102 : vector<64x64xf32>
    %104 = arith.truncf %103 : vector<64x64xf32> to vector<64x64xbf16>
    %105 = arith.truncf %88 : vector<64x32xf32> to vector<64x32xbf16>
    %cst_60 = arith.constant dense<0.000000e+00> : vector<64x32xf32>
    %106 = tpu.matmul %104, %105, %cst_60 {dimension_numbers = #tpu.dot_dimension_numbers<[1], [0], [0], [1], [0, 0, 1, 1], [], []>} : vector<64x64xbf16>, vector<64x32xbf16>, vector<64x32xf32> -> vector<64x32xf32>
    %107 = vector.broadcast %18 : f32 to vector<64x32xf32>
    %108 = arith.mulf %107, %106 : vector<64x32xf32>
    %109 = arith.addf %108, %76 : vector<64x32xf32>
    %110 = arith.addf %109, %46 : vector<64x32xf32>
    %cst_61 = arith.constant dense<0.000000e+00> : vector<32xf32>
    %111 = vector.multi_reduction <add>, %110, %cst_61 [0] : vector<64x32xf32> to vector<32xf32>
    %112 = vector.shape_cast %111 : vector<32xf32> to vector<1x32xf32>
    %cst_62 = arith.constant 6.400000e+01 : f32
    %113 = vector.broadcast %cst_62 : f32 to vector<1x32xf32>
    %114 = arith.divf %112, %113 : vector<1x32xf32>
    %115 = arith.mulf %110, %110 : vector<64x32xf32>
    %cst_63 = arith.constant dense<0.000000e+00> : vector<32xf32>
    %116 = vector.multi_reduction <add>, %115, %cst_63 [0] : vector<64x32xf32> to vector<32xf32>
    %117 = vector.shape_cast %116 : vector<32xf32> to vector<1x32xf32>
    %cst_64 = arith.constant 6.400000e+01 : f32
    %118 = vector.broadcast %cst_64 : f32 to vector<1x32xf32>
    %119 = arith.divf %117, %118 : vector<1x32xf32>
    %120 = tpu.concatenate %114, %119 in 0 : vector<1x32xf32>, vector<1x32xf32> -> vector<2x32xf32>
    %121 = arith.truncf %120 : vector<2x32xf32> to vector<2x32xbf16>
    %122 = arith.truncf %0 : vector<32x32xf32> to vector<32x32xbf16>
    %cst_65 = arith.constant dense<0.000000e+00> : vector<2x32xf32>
    %123 = tpu.matmul %121, %122, %cst_65 {dimension_numbers = #tpu.dot_dimension_numbers<[1], [0], [0], [1], [0, 0, 1, 1], [], []>} : vector<2x32xbf16>, vector<32x32xbf16>, vector<2x32xf32> -> vector<2x32xf32>
    %124 = vector.extract_strided_slice %123 {offsets = [0, 0], sizes = [1, 32], strides = [1, 1]} : vector<2x32xf32> to vector<1x32xf32>
    %125 = vector.extract_strided_slice %123 {offsets = [1, 0], sizes = [1, 32], strides = [1, 1]} : vector<2x32xf32> to vector<1x32xf32>
    %126 = arith.mulf %124, %124 : vector<1x32xf32>
    %127 = arith.subf %125, %126 : vector<1x32xf32>
    %cst_66 = arith.constant 0.000000e+00 : f32
    %128 = vector.broadcast %cst_66 : f32 to vector<1x32xf32>
    %129 = arith.maximumf %127, %128 : vector<1x32xf32>
    %130 = vector.broadcast %124 : vector<1x32xf32> to vector<64x32xf32>
    %131 = arith.subf %110, %130 : vector<64x32xf32>
    %cst_67 = arith.constant 9.99999974E-6 : f32
    %132 = vector.broadcast %cst_67 : f32 to vector<1x32xf32>
    %133 = arith.addf %129, %132 : vector<1x32xf32>
    %134 = math.rsqrt %133 : vector<1x32xf32>
    %135 = vector.broadcast %134 : vector<1x32xf32> to vector<64x32xf32>
    %136 = arith.mulf %131, %135 : vector<64x32xf32>
    %137 = vector.broadcast %3 : vector<1x32xf32> to vector<64x32xf32>
    %138 = arith.mulf %136, %137 : vector<64x32xf32>
    %139 = vector.broadcast %4 : vector<1x32xf32> to vector<64x32xf32>
    %140 = arith.addf %138, %139 : vector<64x32xf32>
    %141 = arith.truncf %140 : vector<64x32xf32> to vector<64x32xbf16>
    %cst_68 = arith.constant dense<0.000000e+00> : vector<64x32xf32>
    %142 = tpu.matmul %141, %12, %cst_68 {dimension_numbers = #tpu.dot_dimension_numbers<[1], [0], [0], [1], [0, 0, 1, 1], [], []>} : vector<64x32xbf16>, vector<32x32xbf16>, vector<64x32xf32> -> vector<64x32xf32>
    %c0_69 = arith.constant 0 : index
    %c0_70 = arith.constant 0 : index
    %c0_71 = arith.constant 0 : index
    %143 = vector.load %arg2[%c0_69, %c0_70, %c0_71] : memref<2x8x16xbf16, #tpu.memory_space<vmem>>, vector<1x8x16xbf16>
    %144 = vector.shape_cast %143 : vector<1x8x16xbf16> to vector<8x16xbf16>
    %145 = arith.extf %144 : vector<8x16xbf16> to vector<8x16xf32>
    %146 = arith.truncf %145 : vector<8x16xf32> to vector<8x16xbf16>
    %cst_72 = arith.constant dense<0.000000e+00> : vector<8x32xf32>
    %147 = tpu.matmul %146, %13, %cst_72 {dimension_numbers = #tpu.dot_dimension_numbers<[1], [0], [0], [1], [0, 0, 1, 1], [], []>} : vector<8x16xbf16>, vector<16x32xbf16>, vector<8x32xf32> -> vector<8x32xf32>
    %148 = arith.truncf %145 : vector<8x16xf32> to vector<8x16xbf16>
    %cst_73 = arith.constant dense<0.000000e+00> : vector<8x32xf32>
    %149 = tpu.matmul %148, %14, %cst_73 {dimension_numbers = #tpu.dot_dimension_numbers<[1], [0], [0], [1], [0, 0, 1, 1], [], []>} : vector<8x16xbf16>, vector<16x32xbf16>, vector<8x32xf32> -> vector<8x32xf32>
    %150 = tpu.concatenate %147, %147, %147, %147, %147, %147, %147, %147 in 0 : vector<8x32xf32>, vector<8x32xf32>, vector<8x32xf32>, vector<8x32xf32>, vector<8x32xf32>, vector<8x32xf32>, vector<8x32xf32>, vector<8x32xf32> -> vector<64x32xf32>
    %151 = arith.mulf %150, %16 : vector<64x32xf32>
    %152 = tpu.concatenate %149, %149, %149, %149, %149, %149, %149, %149 in 0 : vector<8x32xf32>, vector<8x32xf32>, vector<8x32xf32>, vector<8x32xf32>, vector<8x32xf32>, vector<8x32xf32>, vector<8x32xf32>, vector<8x32xf32> -> vector<64x32xf32>
    %153 = arith.mulf %152, %16 : vector<64x32xf32>
    %154 = arith.truncf %142 : vector<64x32xf32> to vector<64x32xbf16>
    %155 = arith.truncf %151 : vector<64x32xf32> to vector<64x32xbf16>
    %cst_74 = arith.constant dense<0.000000e+00> : vector<64x64xf32>
    %156 = tpu.matmul %154, %155, %cst_74 {dimension_numbers = #tpu.dot_dimension_numbers<[1], [1], [0], [0], [0, 0, 1, 0], [], []>} : vector<64x32xbf16>, vector<64x32xbf16>, vector<64x64xf32> -> vector<64x64xf32>
    %cst_75 = arith.constant 5.000000e-01 : f32
    %157 = vector.broadcast %cst_75 : f32 to vector<64x64xf32>
    %158 = arith.mulf %156, %157 : vector<64x64xf32>
    %cst_76 = arith.constant 0.000000e+00 : f32
    %159 = vector.broadcast %cst_76 : f32 to vector<64x64xf32>
    %cst_77 = arith.constant -1.000000e+30 : f32
    %160 = vector.shape_cast %21 : vector<1x64xi1> to vector<1x64xi1>
    %161 = vector.broadcast %160 : vector<1x64xi1> to vector<64x64xi1>
    %162 = vector.broadcast %cst_77 : f32 to vector<64x64xf32>
    %163 = arith.select %161, %158, %162 : vector<64x64xi1>, vector<64x64xf32>
    %cst_78 = arith.constant dense<0xFF800000> : vector<64xf32>
    %164 = vector.multi_reduction <maximumf>, %163, %cst_78 [1] : vector<64x64xf32> to vector<64xf32>
    %165 = vector.shape_cast %164 : vector<64xf32> to vector<64x1xf32>
    %166 = vector.shape_cast %21 : vector<1x64xi1> to vector<1x64xi1>
    %167 = vector.broadcast %166 : vector<1x64xi1> to vector<64x64xi1>
    %168 = vector.shape_cast %165 : vector<64x1xf32> to vector<64x1xf32>
    %169 = vector.broadcast %168 : vector<64x1xf32> to vector<64x64xf32>
    %170 = arith.select %167, %169, %159 : vector<64x64xi1>, vector<64x64xf32>
    %cst_79 = arith.constant -1.000000e+30 : f32
    %171 = vector.shape_cast %24 : vector<1x64xi1> to vector<1x64xi1>
    %172 = vector.broadcast %171 : vector<1x64xi1> to vector<64x64xi1>
    %173 = vector.broadcast %cst_79 : f32 to vector<64x64xf32>
    %174 = arith.select %172, %158, %173 : vector<64x64xi1>, vector<64x64xf32>
    %cst_80 = arith.constant dense<0xFF800000> : vector<64xf32>
    %175 = vector.multi_reduction <maximumf>, %174, %cst_80 [1] : vector<64x64xf32> to vector<64xf32>
    %176 = vector.shape_cast %175 : vector<64xf32> to vector<64x1xf32>
    %177 = vector.shape_cast %24 : vector<1x64xi1> to vector<1x64xi1>
    %178 = vector.broadcast %177 : vector<1x64xi1> to vector<64x64xi1>
    %179 = vector.shape_cast %176 : vector<64x1xf32> to vector<64x1xf32>
    %180 = vector.broadcast %179 : vector<64x1xf32> to vector<64x64xf32>
    %181 = arith.select %178, %180, %170 : vector<64x64xi1>, vector<64x64xf32>
    %cst_81 = arith.constant -1.000000e+30 : f32
    %182 = vector.shape_cast %27 : vector<1x64xi1> to vector<1x64xi1>
    %183 = vector.broadcast %182 : vector<1x64xi1> to vector<64x64xi1>
    %184 = vector.broadcast %cst_81 : f32 to vector<64x64xf32>
    %185 = arith.select %183, %158, %184 : vector<64x64xi1>, vector<64x64xf32>
    %cst_82 = arith.constant dense<0xFF800000> : vector<64xf32>
    %186 = vector.multi_reduction <maximumf>, %185, %cst_82 [1] : vector<64x64xf32> to vector<64xf32>
    %187 = vector.shape_cast %186 : vector<64xf32> to vector<64x1xf32>
    %188 = vector.shape_cast %27 : vector<1x64xi1> to vector<1x64xi1>
    %189 = vector.broadcast %188 : vector<1x64xi1> to vector<64x64xi1>
    %190 = vector.shape_cast %187 : vector<64x1xf32> to vector<64x1xf32>
    %191 = vector.broadcast %190 : vector<64x1xf32> to vector<64x64xf32>
    %192 = arith.select %189, %191, %181 : vector<64x64xi1>, vector<64x64xf32>
    %cst_83 = arith.constant -1.000000e+30 : f32
    %193 = vector.shape_cast %30 : vector<1x64xi1> to vector<1x64xi1>
    %194 = vector.broadcast %193 : vector<1x64xi1> to vector<64x64xi1>
    %195 = vector.broadcast %cst_83 : f32 to vector<64x64xf32>
    %196 = arith.select %194, %158, %195 : vector<64x64xi1>, vector<64x64xf32>
    %cst_84 = arith.constant dense<0xFF800000> : vector<64xf32>
    %197 = vector.multi_reduction <maximumf>, %196, %cst_84 [1] : vector<64x64xf32> to vector<64xf32>
    %198 = vector.shape_cast %197 : vector<64xf32> to vector<64x1xf32>
    %199 = vector.shape_cast %30 : vector<1x64xi1> to vector<1x64xi1>
    %200 = vector.broadcast %199 : vector<1x64xi1> to vector<64x64xi1>
    %201 = vector.shape_cast %198 : vector<64x1xf32> to vector<64x1xf32>
    %202 = vector.broadcast %201 : vector<64x1xf32> to vector<64x64xf32>
    %203 = arith.select %200, %202, %192 : vector<64x64xi1>, vector<64x64xf32>
    %cst_85 = arith.constant -1.000000e+30 : f32
    %204 = vector.shape_cast %33 : vector<1x64xi1> to vector<1x64xi1>
    %205 = vector.broadcast %204 : vector<1x64xi1> to vector<64x64xi1>
    %206 = vector.broadcast %cst_85 : f32 to vector<64x64xf32>
    %207 = arith.select %205, %158, %206 : vector<64x64xi1>, vector<64x64xf32>
    %cst_86 = arith.constant dense<0xFF800000> : vector<64xf32>
    %208 = vector.multi_reduction <maximumf>, %207, %cst_86 [1] : vector<64x64xf32> to vector<64xf32>
    %209 = vector.shape_cast %208 : vector<64xf32> to vector<64x1xf32>
    %210 = vector.shape_cast %33 : vector<1x64xi1> to vector<1x64xi1>
    %211 = vector.broadcast %210 : vector<1x64xi1> to vector<64x64xi1>
    %212 = vector.shape_cast %209 : vector<64x1xf32> to vector<64x1xf32>
    %213 = vector.broadcast %212 : vector<64x1xf32> to vector<64x64xf32>
    %214 = arith.select %211, %213, %203 : vector<64x64xi1>, vector<64x64xf32>
    %cst_87 = arith.constant -1.000000e+30 : f32
    %215 = vector.shape_cast %36 : vector<1x64xi1> to vector<1x64xi1>
    %216 = vector.broadcast %215 : vector<1x64xi1> to vector<64x64xi1>
    %217 = vector.broadcast %cst_87 : f32 to vector<64x64xf32>
    %218 = arith.select %216, %158, %217 : vector<64x64xi1>, vector<64x64xf32>
    %cst_88 = arith.constant dense<0xFF800000> : vector<64xf32>
    %219 = vector.multi_reduction <maximumf>, %218, %cst_88 [1] : vector<64x64xf32> to vector<64xf32>
    %220 = vector.shape_cast %219 : vector<64xf32> to vector<64x1xf32>
    %221 = vector.shape_cast %36 : vector<1x64xi1> to vector<1x64xi1>
    %222 = vector.broadcast %221 : vector<1x64xi1> to vector<64x64xi1>
    %223 = vector.shape_cast %220 : vector<64x1xf32> to vector<64x1xf32>
    %224 = vector.broadcast %223 : vector<64x1xf32> to vector<64x64xf32>
    %225 = arith.select %222, %224, %214 : vector<64x64xi1>, vector<64x64xf32>
    %cst_89 = arith.constant -1.000000e+30 : f32
    %226 = vector.shape_cast %39 : vector<1x64xi1> to vector<1x64xi1>
    %227 = vector.broadcast %226 : vector<1x64xi1> to vector<64x64xi1>
    %228 = vector.broadcast %cst_89 : f32 to vector<64x64xf32>
    %229 = arith.select %227, %158, %228 : vector<64x64xi1>, vector<64x64xf32>
    %cst_90 = arith.constant dense<0xFF800000> : vector<64xf32>
    %230 = vector.multi_reduction <maximumf>, %229, %cst_90 [1] : vector<64x64xf32> to vector<64xf32>
    %231 = vector.shape_cast %230 : vector<64xf32> to vector<64x1xf32>
    %232 = vector.shape_cast %39 : vector<1x64xi1> to vector<1x64xi1>
    %233 = vector.broadcast %232 : vector<1x64xi1> to vector<64x64xi1>
    %234 = vector.shape_cast %231 : vector<64x1xf32> to vector<64x1xf32>
    %235 = vector.broadcast %234 : vector<64x1xf32> to vector<64x64xf32>
    %236 = arith.select %233, %235, %225 : vector<64x64xi1>, vector<64x64xf32>
    %cst_91 = arith.constant -1.000000e+30 : f32
    %237 = vector.shape_cast %42 : vector<1x64xi1> to vector<1x64xi1>
    %238 = vector.broadcast %237 : vector<1x64xi1> to vector<64x64xi1>
    %239 = vector.broadcast %cst_91 : f32 to vector<64x64xf32>
    %240 = arith.select %238, %158, %239 : vector<64x64xi1>, vector<64x64xf32>
    %cst_92 = arith.constant dense<0xFF800000> : vector<64xf32>
    %241 = vector.multi_reduction <maximumf>, %240, %cst_92 [1] : vector<64x64xf32> to vector<64xf32>
    %242 = vector.shape_cast %241 : vector<64xf32> to vector<64x1xf32>
    %243 = vector.shape_cast %42 : vector<1x64xi1> to vector<1x64xi1>
    %244 = vector.broadcast %243 : vector<1x64xi1> to vector<64x64xi1>
    %245 = vector.shape_cast %242 : vector<64x1xf32> to vector<64x1xf32>
    %246 = vector.broadcast %245 : vector<64x1xf32> to vector<64x64xf32>
    %247 = arith.select %244, %246, %236 : vector<64x64xi1>, vector<64x64xf32>
    %248 = arith.subf %158, %247 : vector<64x64xf32>
    %249 = math.exp %248 : vector<64x64xf32>
    %250 = arith.truncf %249 : vector<64x64xf32> to vector<64x64xbf16>
    %251 = arith.truncf %17 : vector<64x64xf32> to vector<64x64xbf16>
    %cst_93 = arith.constant dense<0.000000e+00> : vector<64x64xf32>
    %252 = tpu.matmul %250, %251, %cst_93 {dimension_numbers = #tpu.dot_dimension_numbers<[1], [0], [0], [1], [0, 0, 1, 1], [], []>} : vector<64x64xbf16>, vector<64x64xbf16>, vector<64x64xf32> -> vector<64x64xf32>
    %253 = tpu.reciprocal %252 {approx = true} : vector<64x64xf32> -> vector<64x64xf32>
    %254 = arith.mulf %249, %253 : vector<64x64xf32>
    %255 = arith.truncf %254 : vector<64x64xf32> to vector<64x64xbf16>
    %256 = arith.truncf %153 : vector<64x32xf32> to vector<64x32xbf16>
    %cst_94 = arith.constant dense<0.000000e+00> : vector<64x32xf32>
    %257 = tpu.matmul %255, %256, %cst_94 {dimension_numbers = #tpu.dot_dimension_numbers<[1], [0], [0], [1], [0, 0, 1, 1], [], []>} : vector<64x64xbf16>, vector<64x32xbf16>, vector<64x32xf32> -> vector<64x32xf32>
    %258 = arith.truncf %257 : vector<64x32xf32> to vector<64x32xbf16>
    %cst_95 = arith.constant dense<0.000000e+00> : vector<64x32xf32>
    %259 = tpu.matmul %258, %15, %cst_95 {dimension_numbers = #tpu.dot_dimension_numbers<[1], [0], [0], [1], [0, 0, 1, 1], [], []>} : vector<64x32xbf16>, vector<32x32xbf16>, vector<64x32xf32> -> vector<64x32xf32>
    %260 = vector.broadcast %8 : vector<1x32xf32> to vector<64x32xf32>
    %261 = arith.addf %259, %260 : vector<64x32xf32>
    %262 = arith.addf %261, %110 : vector<64x32xf32>
    %263 = tpu.transpose %262, [1, 0] : vector<64x32xf32> -> vector<32x64xf32>
    %c0_96 = arith.constant 0 : index
    %c0_97 = arith.constant 0 : index
    %c0_98 = arith.constant 0 : index
    %264 = vector.load %arg22[%c0_96, %c0_97, %c0_98] : memref<2x32x64xf32, #tpu.memory_space<vmem>>, vector<1x32x64xf32>
    %265 = vector.shape_cast %264 : vector<1x32x64xf32> to vector<32x64xf32>
    %266 = vector.shape_cast %263 : vector<32x64xf32> to vector<1x32x64xf32>
    tpu.vector_store %arg22[%c0_96, %c0_97, %c0_98], %266 {strides = array<i32>} : memref<2x32x64xf32, #tpu.memory_space<vmem>>, vector<1x32x64xf32>,
    %c1 = arith.constant 1 : index
    %c0_99 = arith.constant 0 : index
    %c0_100 = arith.constant 0 : index
    %267 = vector.load %arg1[%c1, %c0_99, %c0_100] : memref<2x32x64xbf16, #tpu.memory_space<vmem>>, vector<1x32x64xbf16>
    %268 = vector.shape_cast %267 : vector<1x32x64xbf16> to vector<32x64xbf16>
    %269 = arith.extf %268 : vector<32x64xbf16> to vector<32x64xf32>
    %270 = tpu.transpose %269, [1, 0] : vector<32x64xf32> -> vector<64x32xf32>
    %cst_101 = arith.constant dense<0.000000e+00> : vector<32xf32>
    %271 = vector.multi_reduction <add>, %270, %cst_101 [0] : vector<64x32xf32> to vector<32xf32>
    %272 = vector.shape_cast %271 : vector<32xf32> to vector<1x32xf32>
    %cst_102 = arith.constant 6.400000e+01 : f32
    %273 = vector.broadcast %cst_102 : f32 to vector<1x32xf32>
    %274 = arith.divf %272, %273 : vector<1x32xf32>
    %275 = arith.mulf %270, %270 : vector<64x32xf32>
    %cst_103 = arith.constant dense<0.000000e+00> : vector<32xf32>
    %276 = vector.multi_reduction <add>, %275, %cst_103 [0] : vector<64x32xf32> to vector<32xf32>
    %277 = vector.shape_cast %276 : vector<32xf32> to vector<1x32xf32>
    %cst_104 = arith.constant 6.400000e+01 : f32
    %278 = vector.broadcast %cst_104 : f32 to vector<1x32xf32>
    %279 = arith.divf %277, %278 : vector<1x32xf32>
    %280 = tpu.concatenate %274, %279 in 0 : vector<1x32xf32>, vector<1x32xf32> -> vector<2x32xf32>
    %281 = arith.truncf %280 : vector<2x32xf32> to vector<2x32xbf16>
    %282 = arith.truncf %0 : vector<32x32xf32> to vector<32x32xbf16>
    %cst_105 = arith.constant dense<0.000000e+00> : vector<2x32xf32>
    %283 = tpu.matmul %281, %282, %cst_105 {dimension_numbers = #tpu.dot_dimension_numbers<[1], [0], [0], [1], [0, 0, 1, 1], [], []>} : vector<2x32xbf16>, vector<32x32xbf16>, vector<2x32xf32> -> vector<2x32xf32>
    %284 = vector.extract_strided_slice %283 {offsets = [0, 0], sizes = [1, 32], strides = [1, 1]} : vector<2x32xf32> to vector<1x32xf32>
    %285 = vector.extract_strided_slice %283 {offsets = [1, 0], sizes = [1, 32], strides = [1, 1]} : vector<2x32xf32> to vector<1x32xf32>
    %286 = arith.mulf %284, %284 : vector<1x32xf32>
    %287 = arith.subf %285, %286 : vector<1x32xf32>
    %cst_106 = arith.constant 0.000000e+00 : f32
    %288 = vector.broadcast %cst_106 : f32 to vector<1x32xf32>
    %289 = arith.maximumf %287, %288 : vector<1x32xf32>
    %290 = vector.broadcast %284 : vector<1x32xf32> to vector<64x32xf32>
    %291 = arith.subf %270, %290 : vector<64x32xf32>
    %cst_107 = arith.constant 9.99999974E-6 : f32
    %292 = vector.broadcast %cst_107 : f32 to vector<1x32xf32>
    %293 = arith.addf %289, %292 : vector<1x32xf32>
    %294 = math.rsqrt %293 : vector<1x32xf32>
    %295 = vector.broadcast %294 : vector<1x32xf32> to vector<64x32xf32>
    %296 = arith.mulf %291, %295 : vector<64x32xf32>
    %297 = vector.broadcast %1 : vector<1x32xf32> to vector<64x32xf32>
    %298 = arith.mulf %296, %297 : vector<64x32xf32>
    %299 = vector.broadcast %2 : vector<1x32xf32> to vector<64x32xf32>
    %300 = arith.addf %298, %299 : vector<64x32xf32>
    %301 = arith.truncf %300 : vector<64x32xf32> to vector<64x32xbf16>
    %cst_108 = arith.constant dense<0.000000e+00> : vector<64x32xf32>
    %302 = tpu.matmul %301, %9, %cst_108 {dimension_numbers = #tpu.dot_dimension_numbers<[1], [0], [0], [1], [0, 0, 1, 1], [], []>} : vector<64x32xbf16>, vector<32x32xbf16>, vector<64x32xf32> -> vector<64x32xf32>
    %303 = vector.broadcast %5 : vector<1x32xf32> to vector<64x32xf32>
    %304 = arith.addf %302, %303 : vector<64x32xf32>
    %305 = arith.truncf %300 : vector<64x32xf32> to vector<64x32xbf16>
    %cst_109 = arith.constant dense<0.000000e+00> : vector<64x32xf32>
    %306 = tpu.matmul %305, %10, %cst_109 {dimension_numbers = #tpu.dot_dimension_numbers<[1], [0], [0], [1], [0, 0, 1, 1], [], []>} : vector<64x32xbf16>, vector<32x32xbf16>, vector<64x32xf32> -> vector<64x32xf32>
    %307 = vector.broadcast %6 : vector<1x32xf32> to vector<64x32xf32>
    %308 = arith.addf %306, %307 : vector<64x32xf32>
    %309 = arith.truncf %300 : vector<64x32xf32> to vector<64x32xbf16>
    %cst_110 = arith.constant dense<0.000000e+00> : vector<64x32xf32>
    %310 = tpu.matmul %309, %11, %cst_110 {dimension_numbers = #tpu.dot_dimension_numbers<[1], [0], [0], [1], [0, 0, 1, 1], [], []>} : vector<64x32xbf16>, vector<32x32xbf16>, vector<64x32xf32> -> vector<64x32xf32>
    %311 = vector.broadcast %7 : vector<1x32xf32> to vector<64x32xf32>
    %312 = arith.addf %310, %311 : vector<64x32xf32>
    %313 = arith.truncf %304 : vector<64x32xf32> to vector<64x32xbf16>
    %314 = arith.truncf %308 : vector<64x32xf32> to vector<64x32xbf16>
    %cst_111 = arith.constant dense<0.000000e+00> : vector<64x64xf32>
    %315 = tpu.matmul %313, %314, %cst_111 {dimension_numbers = #tpu.dot_dimension_numbers<[1], [1], [0], [0], [0, 0, 1, 0], [], []>} : vector<64x32xbf16>, vector<64x32xbf16>, vector<64x64xf32> -> vector<64x64xf32>
    %cst_112 = arith.constant 0.176776692 : f32
    %316 = vector.broadcast %cst_112 : f32 to vector<64x64xf32>
    %317 = arith.mulf %315, %316 : vector<64x64xf32>
    %cst_113 = arith.constant dense<0xFF800000> : vector<64xf32>
    %318 = vector.multi_reduction <maximumf>, %317, %cst_113 [1] : vector<64x64xf32> to vector<64xf32>
    %319 = vector.shape_cast %318 : vector<64xf32> to vector<64x1xf32>
    %320 = vector.broadcast %319 : vector<64x1xf32> to vector<64x64xf32>
    %321 = arith.subf %317, %320 : vector<64x64xf32>
    %322 = math.exp %321 : vector<64x64xf32>
    %cst_114 = arith.constant dense<0.000000e+00> : vector<64xf32>
    %323 = vector.multi_reduction <add>, %322, %cst_114 [1] : vector<64x64xf32> to vector<64xf32>
    %324 = vector.shape_cast %323 : vector<64xf32> to vector<64x1xf32>
    %325 = tpu.reciprocal %324 {approx = true} : vector<64x1xf32> -> vector<64x1xf32>
    %326 = vector.broadcast %325 : vector<64x1xf32> to vector<64x64xf32>
    %327 = arith.mulf %322, %326 : vector<64x64xf32>
    %328 = arith.truncf %327 : vector<64x64xf32> to vector<64x64xbf16>
    %329 = arith.truncf %312 : vector<64x32xf32> to vector<64x32xbf16>
    %cst_115 = arith.constant dense<0.000000e+00> : vector<64x32xf32>
    %330 = tpu.matmul %328, %329, %cst_115 {dimension_numbers = #tpu.dot_dimension_numbers<[1], [0], [0], [1], [0, 0, 1, 1], [], []>} : vector<64x64xbf16>, vector<64x32xbf16>, vector<64x32xf32> -> vector<64x32xf32>
    %331 = vector.broadcast %18 : f32 to vector<64x32xf32>
    %332 = arith.mulf %331, %330 : vector<64x32xf32>
    %333 = arith.addf %332, %300 : vector<64x32xf32>
    %334 = arith.addf %333, %270 : vector<64x32xf32>
    %cst_116 = arith.constant dense<0.000000e+00> : vector<32xf32>
    %335 = vector.multi_reduction <add>, %334, %cst_116 [0] : vector<64x32xf32> to vector<32xf32>
    %336 = vector.shape_cast %335 : vector<32xf32> to vector<1x32xf32>
    %cst_117 = arith.constant 6.400000e+01 : f32
    %337 = vector.broadcast %cst_117 : f32 to vector<1x32xf32>
    %338 = arith.divf %336, %337 : vector<1x32xf32>
    %339 = arith.mulf %334, %334 : vector<64x32xf32>
    %cst_118 = arith.constant dense<0.000000e+00> : vector<32xf32>
    %340 = vector.multi_reduction <add>, %339, %cst_118 [0] : vector<64x32xf32> to vector<32xf32>
    %341 = vector.shape_cast %340 : vector<32xf32> to vector<1x32xf32>
    %cst_119 = arith.constant 6.400000e+01 : f32
    %342 = vector.broadcast %cst_119 : f32 to vector<1x32xf32>
    %343 = arith.divf %341, %342 : vector<1x32xf32>
    %344 = tpu.concatenate %338, %343 in 0 : vector<1x32xf32>, vector<1x32xf32> -> vector<2x32xf32>
    %345 = arith.truncf %344 : vector<2x32xf32> to vector<2x32xbf16>
    %346 = arith.truncf %0 : vector<32x32xf32> to vector<32x32xbf16>
    %cst_120 = arith.constant dense<0.000000e+00> : vector<2x32xf32>
    %347 = tpu.matmul %345, %346, %cst_120 {dimension_numbers = #tpu.dot_dimension_numbers<[1], [0], [0], [1], [0, 0, 1, 1], [], []>} : vector<2x32xbf16>, vector<32x32xbf16>, vector<2x32xf32> -> vector<2x32xf32>
    %348 = vector.extract_strided_slice %347 {offsets = [0, 0], sizes = [1, 32], strides = [1, 1]} : vector<2x32xf32> to vector<1x32xf32>
    %349 = vector.extract_strided_slice %347 {offsets = [1, 0], sizes = [1, 32], strides = [1, 1]} : vector<2x32xf32> to vector<1x32xf32>
    %350 = arith.mulf %348, %348 : vector<1x32xf32>
    %351 = arith.subf %349, %350 : vector<1x32xf32>
    %cst_121 = arith.constant 0.000000e+00 : f32
    %352 = vector.broadcast %cst_121 : f32 to vector<1x32xf32>
    %353 = arith.maximumf %351, %352 : vector<1x32xf32>
    %354 = vector.broadcast %348 : vector<1x32xf32> to vector<64x32xf32>
    %355 = arith.subf %334, %354 : vector<64x32xf32>
    %cst_122 = arith.constant 9.99999974E-6 : f32
    %356 = vector.broadcast %cst_122 : f32 to vector<1x32xf32>
    %357 = arith.addf %353, %356 : vector<1x32xf32>
    %358 = math.rsqrt %357 : vector<1x32xf32>
    %359 = vector.broadcast %358 : vector<1x32xf32> to vector<64x32xf32>
    %360 = arith.mulf %355, %359 : vector<64x32xf32>
    %361 = vector.broadcast %3 : vector<1x32xf32> to vector<64x32xf32>
    %362 = arith.mulf %360, %361 : vector<64x32xf32>
    %363 = vector.broadcast %4 : vector<1x32xf32> to vector<64x32xf32>
    %364 = arith.addf %362, %363 : vector<64x32xf32>
    %365 = arith.truncf %364 : vector<64x32xf32> to vector<64x32xbf16>
    %cst_123 = arith.constant dense<0.000000e+00> : vector<64x32xf32>
    %366 = tpu.matmul %365, %12, %cst_123 {dimension_numbers = #tpu.dot_dimension_numbers<[1], [0], [0], [1], [0, 0, 1, 1], [], []>} : vector<64x32xbf16>, vector<32x32xbf16>, vector<64x32xf32> -> vector<64x32xf32>
    %c1_124 = arith.constant 1 : index
    %c0_125 = arith.constant 0 : index
    %c0_126 = arith.constant 0 : index
    %367 = vector.load %arg2[%c1_124, %c0_125, %c0_126] : memref<2x8x16xbf16, #tpu.memory_space<vmem>>, vector<1x8x16xbf16>
    %368 = vector.shape_cast %367 : vector<1x8x16xbf16> to vector<8x16xbf16>
    %369 = arith.extf %368 : vector<8x16xbf16> to vector<8x16xf32>
    %370 = arith.truncf %369 : vector<8x16xf32> to vector<8x16xbf16>
    %cst_127 = arith.constant dense<0.000000e+00> : vector<8x32xf32>
    %371 = tpu.matmul %370, %13, %cst_127 {dimension_numbers = #tpu.dot_dimension_numbers<[1], [0], [0], [1], [0, 0, 1, 1], [], []>} : vector<8x16xbf16>, vector<16x32xbf16>, vector<8x32xf32> -> vector<8x32xf32>
    %372 = arith.truncf %369 : vector<8x16xf32> to vector<8x16xbf16>
    %cst_128 = arith.constant dense<0.000000e+00> : vector<8x32xf32>
    %373 = tpu.matmul %372, %14, %cst_128 {dimension_numbers = #tpu.dot_dimension_numbers<[1], [0], [0], [1], [0, 0, 1, 1], [], []>} : vector<8x16xbf16>, vector<16x32xbf16>, vector<8x32xf32> -> vector<8x32xf32>
    %374 = tpu.concatenate %371, %371, %371, %371, %371, %371, %371, %371 in 0 : vector<8x32xf32>, vector<8x32xf32>, vector<8x32xf32>, vector<8x32xf32>, vector<8x32xf32>, vector<8x32xf32>, vector<8x32xf32>, vector<8x32xf32> -> vector<64x32xf32>
    %375 = arith.mulf %374, %16 : vector<64x32xf32>
    %376 = tpu.concatenate %373, %373, %373, %373, %373, %373, %373, %373 in 0 : vector<8x32xf32>, vector<8x32xf32>, vector<8x32xf32>, vector<8x32xf32>, vector<8x32xf32>, vector<8x32xf32>, vector<8x32xf32>, vector<8x32xf32> -> vector<64x32xf32>
    %377 = arith.mulf %376, %16 : vector<64x32xf32>
    %378 = arith.truncf %366 : vector<64x32xf32> to vector<64x32xbf16>
    %379 = arith.truncf %375 : vector<64x32xf32> to vector<64x32xbf16>
    %cst_129 = arith.constant dense<0.000000e+00> : vector<64x64xf32>
    %380 = tpu.matmul %378, %379, %cst_129 {dimension_numbers = #tpu.dot_dimension_numbers<[1], [1], [0], [0], [0, 0, 1, 0], [], []>} : vector<64x32xbf16>, vector<64x32xbf16>, vector<64x64xf32> -> vector<64x64xf32>
    %cst_130 = arith.constant 5.000000e-01 : f32
    %381 = vector.broadcast %cst_130 : f32 to vector<64x64xf32>
    %382 = arith.mulf %380, %381 : vector<64x64xf32>
    %cst_131 = arith.constant 0.000000e+00 : f32
    %383 = vector.broadcast %cst_131 : f32 to vector<64x64xf32>
    %cst_132 = arith.constant -1.000000e+30 : f32
    %384 = vector.shape_cast %21 : vector<1x64xi1> to vector<1x64xi1>
    %385 = vector.broadcast %384 : vector<1x64xi1> to vector<64x64xi1>
    %386 = vector.broadcast %cst_132 : f32 to vector<64x64xf32>
    %387 = arith.select %385, %382, %386 : vector<64x64xi1>, vector<64x64xf32>
    %cst_133 = arith.constant dense<0xFF800000> : vector<64xf32>
    %388 = vector.multi_reduction <maximumf>, %387, %cst_133 [1] : vector<64x64xf32> to vector<64xf32>
    %389 = vector.shape_cast %388 : vector<64xf32> to vector<64x1xf32>
    %390 = vector.shape_cast %21 : vector<1x64xi1> to vector<1x64xi1>
    %391 = vector.broadcast %390 : vector<1x64xi1> to vector<64x64xi1>
    %392 = vector.shape_cast %389 : vector<64x1xf32> to vector<64x1xf32>
    %393 = vector.broadcast %392 : vector<64x1xf32> to vector<64x64xf32>
    %394 = arith.select %391, %393, %383 : vector<64x64xi1>, vector<64x64xf32>
    %cst_134 = arith.constant -1.000000e+30 : f32
    %395 = vector.shape_cast %24 : vector<1x64xi1> to vector<1x64xi1>
    %396 = vector.broadcast %395 : vector<1x64xi1> to vector<64x64xi1>
    %397 = vector.broadcast %cst_134 : f32 to vector<64x64xf32>
    %398 = arith.select %396, %382, %397 : vector<64x64xi1>, vector<64x64xf32>
    %cst_135 = arith.constant dense<0xFF800000> : vector<64xf32>
    %399 = vector.multi_reduction <maximumf>, %398, %cst_135 [1] : vector<64x64xf32> to vector<64xf32>
    %400 = vector.shape_cast %399 : vector<64xf32> to vector<64x1xf32>
    %401 = vector.shape_cast %24 : vector<1x64xi1> to vector<1x64xi1>
    %402 = vector.broadcast %401 : vector<1x64xi1> to vector<64x64xi1>
    %403 = vector.shape_cast %400 : vector<64x1xf32> to vector<64x1xf32>
    %404 = vector.broadcast %403 : vector<64x1xf32> to vector<64x64xf32>
    %405 = arith.select %402, %404, %394 : vector<64x64xi1>, vector<64x64xf32>
    %cst_136 = arith.constant -1.000000e+30 : f32
    %406 = vector.shape_cast %27 : vector<1x64xi1> to vector<1x64xi1>
    %407 = vector.broadcast %406 : vector<1x64xi1> to vector<64x64xi1>
    %408 = vector.broadcast %cst_136 : f32 to vector<64x64xf32>
    %409 = arith.select %407, %382, %408 : vector<64x64xi1>, vector<64x64xf32>
    %cst_137 = arith.constant dense<0xFF800000> : vector<64xf32>
    %410 = vector.multi_reduction <maximumf>, %409, %cst_137 [1] : vector<64x64xf32> to vector<64xf32>
    %411 = vector.shape_cast %410 : vector<64xf32> to vector<64x1xf32>
    %412 = vector.shape_cast %27 : vector<1x64xi1> to vector<1x64xi1>
    %413 = vector.broadcast %412 : vector<1x64xi1> to vector<64x64xi1>
    %414 = vector.shape_cast %411 : vector<64x1xf32> to vector<64x1xf32>
    %415 = vector.broadcast %414 : vector<64x1xf32> to vector<64x64xf32>
    %416 = arith.select %413, %415, %405 : vector<64x64xi1>, vector<64x64xf32>
    %cst_138 = arith.constant -1.000000e+30 : f32
    %417 = vector.shape_cast %30 : vector<1x64xi1> to vector<1x64xi1>
    %418 = vector.broadcast %417 : vector<1x64xi1> to vector<64x64xi1>
    %419 = vector.broadcast %cst_138 : f32 to vector<64x64xf32>
    %420 = arith.select %418, %382, %419 : vector<64x64xi1>, vector<64x64xf32>
    %cst_139 = arith.constant dense<0xFF800000> : vector<64xf32>
    %421 = vector.multi_reduction <maximumf>, %420, %cst_139 [1] : vector<64x64xf32> to vector<64xf32>
    %422 = vector.shape_cast %421 : vector<64xf32> to vector<64x1xf32>
    %423 = vector.shape_cast %30 : vector<1x64xi1> to vector<1x64xi1>
    %424 = vector.broadcast %423 : vector<1x64xi1> to vector<64x64xi1>
    %425 = vector.shape_cast %422 : vector<64x1xf32> to vector<64x1xf32>
    %426 = vector.broadcast %425 : vector<64x1xf32> to vector<64x64xf32>
    %427 = arith.select %424, %426, %416 : vector<64x64xi1>, vector<64x64xf32>
    %cst_140 = arith.constant -1.000000e+30 : f32
    %428 = vector.shape_cast %33 : vector<1x64xi1> to vector<1x64xi1>
    %429 = vector.broadcast %428 : vector<1x64xi1> to vector<64x64xi1>
    %430 = vector.broadcast %cst_140 : f32 to vector<64x64xf32>
    %431 = arith.select %429, %382, %430 : vector<64x64xi1>, vector<64x64xf32>
    %cst_141 = arith.constant dense<0xFF800000> : vector<64xf32>
    %432 = vector.multi_reduction <maximumf>, %431, %cst_141 [1] : vector<64x64xf32> to vector<64xf32>
    %433 = vector.shape_cast %432 : vector<64xf32> to vector<64x1xf32>
    %434 = vector.shape_cast %33 : vector<1x64xi1> to vector<1x64xi1>
    %435 = vector.broadcast %434 : vector<1x64xi1> to vector<64x64xi1>
    %436 = vector.shape_cast %433 : vector<64x1xf32> to vector<64x1xf32>
    %437 = vector.broadcast %436 : vector<64x1xf32> to vector<64x64xf32>
    %438 = arith.select %435, %437, %427 : vector<64x64xi1>, vector<64x64xf32>
    %cst_142 = arith.constant -1.000000e+30 : f32
    %439 = vector.shape_cast %36 : vector<1x64xi1> to vector<1x64xi1>
    %440 = vector.broadcast %439 : vector<1x64xi1> to vector<64x64xi1>
    %441 = vector.broadcast %cst_142 : f32 to vector<64x64xf32>
    %442 = arith.select %440, %382, %441 : vector<64x64xi1>, vector<64x64xf32>
    %cst_143 = arith.constant dense<0xFF800000> : vector<64xf32>
    %443 = vector.multi_reduction <maximumf>, %442, %cst_143 [1] : vector<64x64xf32> to vector<64xf32>
    %444 = vector.shape_cast %443 : vector<64xf32> to vector<64x1xf32>
    %445 = vector.shape_cast %36 : vector<1x64xi1> to vector<1x64xi1>
    %446 = vector.broadcast %445 : vector<1x64xi1> to vector<64x64xi1>
    %447 = vector.shape_cast %444 : vector<64x1xf32> to vector<64x1xf32>
    %448 = vector.broadcast %447 : vector<64x1xf32> to vector<64x64xf32>
    %449 = arith.select %446, %448, %438 : vector<64x64xi1>, vector<64x64xf32>
    %cst_144 = arith.constant -1.000000e+30 : f32
    %450 = vector.shape_cast %39 : vector<1x64xi1> to vector<1x64xi1>
    %451 = vector.broadcast %450 : vector<1x64xi1> to vector<64x64xi1>
    %452 = vector.broadcast %cst_144 : f32 to vector<64x64xf32>
    %453 = arith.select %451, %382, %452 : vector<64x64xi1>, vector<64x64xf32>
    %cst_145 = arith.constant dense<0xFF800000> : vector<64xf32>
    %454 = vector.multi_reduction <maximumf>, %453, %cst_145 [1] : vector<64x64xf32> to vector<64xf32>
    %455 = vector.shape_cast %454 : vector<64xf32> to vector<64x1xf32>
    %456 = vector.shape_cast %39 : vector<1x64xi1> to vector<1x64xi1>
    %457 = vector.broadcast %456 : vector<1x64xi1> to vector<64x64xi1>
    %458 = vector.shape_cast %455 : vector<64x1xf32> to vector<64x1xf32>
    %459 = vector.broadcast %458 : vector<64x1xf32> to vector<64x64xf32>
    %460 = arith.select %457, %459, %449 : vector<64x64xi1>, vector<64x64xf32>
    %cst_146 = arith.constant -1.000000e+30 : f32
    %461 = vector.shape_cast %42 : vector<1x64xi1> to vector<1x64xi1>
    %462 = vector.broadcast %461 : vector<1x64xi1> to vector<64x64xi1>
    %463 = vector.broadcast %cst_146 : f32 to vector<64x64xf32>
    %464 = arith.select %462, %382, %463 : vector<64x64xi1>, vector<64x64xf32>
    %cst_147 = arith.constant dense<0xFF800000> : vector<64xf32>
    %465 = vector.multi_reduction <maximumf>, %464, %cst_147 [1] : vector<64x64xf32> to vector<64xf32>
    %466 = vector.shape_cast %465 : vector<64xf32> to vector<64x1xf32>
    %467 = vector.shape_cast %42 : vector<1x64xi1> to vector<1x64xi1>
    %468 = vector.broadcast %467 : vector<1x64xi1> to vector<64x64xi1>
    %469 = vector.shape_cast %466 : vector<64x1xf32> to vector<64x1xf32>
    %470 = vector.broadcast %469 : vector<64x1xf32> to vector<64x64xf32>
    %471 = arith.select %468, %470, %460 : vector<64x64xi1>, vector<64x64xf32>
    %472 = arith.subf %382, %471 : vector<64x64xf32>
    %473 = math.exp %472 : vector<64x64xf32>
    %474 = arith.truncf %473 : vector<64x64xf32> to vector<64x64xbf16>
    %475 = arith.truncf %17 : vector<64x64xf32> to vector<64x64xbf16>
    %cst_148 = arith.constant dense<0.000000e+00> : vector<64x64xf32>
    %476 = tpu.matmul %474, %475, %cst_148 {dimension_numbers = #tpu.dot_dimension_numbers<[1], [0], [0], [1], [0, 0, 1, 1], [], []>} : vector<64x64xbf16>, vector<64x64xbf16>, vector<64x64xf32> -> vector<64x64xf32>
    %477 = tpu.reciprocal %476 {approx = true} : vector<64x64xf32> -> vector<64x64xf32>
    %478 = arith.mulf %473, %477 : vector<64x64xf32>
    %479 = arith.truncf %478 : vector<64x64xf32> to vector<64x64xbf16>
    %480 = arith.truncf %377 : vector<64x32xf32> to vector<64x32xbf16>
    %cst_149 = arith.constant dense<0.000000e+00> : vector<64x32xf32>
    %481 = tpu.matmul %479, %480, %cst_149 {dimension_numbers = #tpu.dot_dimension_numbers<[1], [0], [0], [1], [0, 0, 1, 1], [], []>} : vector<64x64xbf16>, vector<64x32xbf16>, vector<64x32xf32> -> vector<64x32xf32>
    %482 = arith.truncf %481 : vector<64x32xf32> to vector<64x32xbf16>
    %cst_150 = arith.constant dense<0.000000e+00> : vector<64x32xf32>
    %483 = tpu.matmul %482, %15, %cst_150 {dimension_numbers = #tpu.dot_dimension_numbers<[1], [0], [0], [1], [0, 0, 1, 1], [], []>} : vector<64x32xbf16>, vector<32x32xbf16>, vector<64x32xf32> -> vector<64x32xf32>
    %484 = vector.broadcast %8 : vector<1x32xf32> to vector<64x32xf32>
    %485 = arith.addf %483, %484 : vector<64x32xf32>
    %486 = arith.addf %485, %334 : vector<64x32xf32>
    %487 = tpu.transpose %486, [1, 0] : vector<64x32xf32> -> vector<32x64xf32>
    %c1_151 = arith.constant 1 : index
    %c0_152 = arith.constant 0 : index
    %c0_153 = arith.constant 0 : index
    %488 = vector.load %arg22[%c1_151, %c0_152, %c0_153] : memref<2x32x64xf32, #tpu.memory_space<vmem>>, vector<1x32x64xf32>
    %489 = vector.shape_cast %488 : vector<1x32x64xf32> to vector<32x64xf32>
    %490 = vector.shape_cast %487 : vector<32x64xf32> to vector<1x32x64xf32>
    tpu.vector_store %arg22[%c1_151, %c0_152, %c0_153], %490 {strides = array<i32>} : memref<2x32x64xf32, #tpu.memory_space<vmem>>, vector<1x32x64xf32>,
    return
  }
  func.func @transform_0(%arg0: i32) -> (i32, i32, i32) {
    %c0_i32 = arith.constant 0 : i32
    %c0_i32_0 = arith.constant 0 : i32
    %c0_i32_1 = arith.constant 0 : i32
    return %arg0, %c0_i32, %c0_i32_0 : i32, i32, i32
  }
  func.func @transform_1(%arg0: i32) -> (i32, i32, i32) {
    %c0_i32 = arith.constant 0 : i32
    %c0_i32_0 = arith.constant 0 : i32
    %c0_i32_1 = arith.constant 0 : i32
    return %arg0, %c0_i32, %c0_i32_0 : i32, i32, i32
  }
  func.func @transform_2(%arg0: i32) -> (i32, i32) {
    %c0_i32 = arith.constant 0 : i32
    %c0_i32_0 = arith.constant 0 : i32
    %c0_i32_1 = arith.constant 0 : i32
    return %c0_i32, %c0_i32_0 : i32, i32
  }
  func.func @transform_3(%arg0: i32) -> (i32, i32) {
    %c0_i32 = arith.constant 0 : i32
    %c0_i32_0 = arith.constant 0 : i32
    %c0_i32_1 = arith.constant 0 : i32
    return %c0_i32, %c0_i32_0 : i32, i32
  }
  func.func @transform_4(%arg0: i32) -> (i32, i32) {
    %c0_i32 = arith.constant 0 : i32
    %c0_i32_0 = arith.constant 0 : i32
    %c0_i32_1 = arith.constant 0 : i32
    return %c0_i32, %c0_i32_0 : i32, i32
  }
  func.func @transform_5(%arg0: i32) -> (i32, i32) {
    %c0_i32 = arith.constant 0 : i32
    %c0_i32_0 = arith.constant 0 : i32
    %c0_i32_1 = arith.constant 0 : i32
    return %c0_i32, %c0_i32_0 : i32, i32
  }
  func.func @transform_6(%arg0: i32) -> (i32, i32) {
    %c0_i32 = arith.constant 0 : i32
    %c0_i32_0 = arith.constant 0 : i32
    %c0_i32_1 = arith.constant 0 : i32
    return %c0_i32, %c0_i32_0 : i32, i32
  }
  func.func @transform_7(%arg0: i32) -> (i32, i32) {
    %c0_i32 = arith.constant 0 : i32
    %c0_i32_0 = arith.constant 0 : i32
    %c0_i32_1 = arith.constant 0 : i32
    return %c0_i32, %c0_i32_0 : i32, i32
  }
  func.func @transform_8(%arg0: i32) -> (i32, i32) {
    %c0_i32 = arith.constant 0 : i32
    %c0_i32_0 = arith.constant 0 : i32
    %c0_i32_1 = arith.constant 0 : i32
    return %c0_i32, %c0_i32_0 : i32, i32
  }
  func.func @transform_9(%arg0: i32) -> (i32, i32) {
    %c0_i32 = arith.constant 0 : i32
    %c0_i32_0 = arith.constant 0 : i32
    %c0_i32_1 = arith.constant 0 : i32
    return %c0_i32, %c0_i32_0 : i32, i32
  }
  func.func @transform_10(%arg0: i32) -> (i32, i32) {
    %c0_i32 = arith.constant 0 : i32
    %c0_i32_0 = arith.constant 0 : i32
    %c0_i32_1 = arith.constant 0 : i32
    return %c0_i32, %c0_i32_0 : i32, i32
  }
  func.func @transform_11(%arg0: i32) -> i32 {
    %c0_i32 = arith.constant 0 : i32
    %c0_i32_0 = arith.constant 0 : i32
    return %c0_i32 : i32
  }
  func.func @transform_12(%arg0: i32) -> (i32, i32) {
    %c0_i32 = arith.constant 0 : i32
    %c0_i32_0 = arith.constant 0 : i32
    %c0_i32_1 = arith.constant 0 : i32
    return %c0_i32, %c0_i32_0 : i32, i32
  }
  func.func @transform_13(%arg0: i32) -> (i32, i32) {
    %c0_i32 = arith.constant 0 : i32
    %c0_i32_0 = arith.constant 0 : i32
    %c0_i32_1 = arith.constant 0 : i32
    return %c0_i32, %c0_i32_0 : i32, i32
  }
  func.func @transform_14(%arg0: i32) -> (i32, i32) {
    %c0_i32 = arith.constant 0 : i32
    %c0_i32_0 = arith.constant 0 : i32
    %c0_i32_1 = arith.constant 0 : i32
    return %c0_i32, %c0_i32_0 : i32, i32
  }
  func.func @transform_15(%arg0: i32) -> (i32, i32) {
    %c0_i32 = arith.constant 0 : i32
    %c0_i32_0 = arith.constant 0 : i32
    %c0_i32_1 = arith.constant 0 : i32
    return %c0_i32, %c0_i32_0 : i32, i32
  }
  func.func @transform_16(%arg0: i32) -> (i32, i32) {
    %c0_i32 = arith.constant 0 : i32
    %c0_i32_0 = arith.constant 0 : i32
    %c0_i32_1 = arith.constant 0 : i32
    return %c0_i32, %c0_i32_0 : i32, i32
  }
  func.func @transform_17(%arg0: i32) -> (i32, i32) {
    %c0_i32 = arith.constant 0 : i32
    %c0_i32_0 = arith.constant 0 : i32
    %c0_i32_1 = arith.constant 0 : i32
    return %c0_i32, %c0_i32_0 : i32, i32
  }
  func.func @transform_18(%arg0: i32) -> (i32, i32) {
    %c0_i32 = arith.constant 0 : i32
    %c0_i32_0 = arith.constant 0 : i32
    %c0_i32_1 = arith.constant 0 : i32
    return %c0_i32, %c0_i32_0 : i32, i32
  }
  func.func @transform_19(%arg0: i32) -> (i32, i32) {
    %c0_i32 = arith.constant 0 : i32
    %c0_i32_0 = arith.constant 0 : i32
    %c0_i32_1 = arith.constant 0 : i32
    return %c0_i32, %c0_i32_0 : i32, i32
  }
  func.func @transform_20(%arg0: i32) -> (i32, i32) {
    %c0_i32 = arith.constant 0 : i32
    %c0_i32_0 = arith.constant 0 : i32
    %c0_i32_1 = arith.constant 0 : i32
    return %c0_i32, %c0_i32_0 : i32, i32
  }
  func.func @transform_21(%arg0: i32) -> (i32, i32, i32) {
    %c0_i32 = arith.constant 0 : i32
    %c0_i32_0 = arith.constant 0 : i32
    %c0_i32_1 = arith.constant 0 : i32
    return %arg0, %c0_i32, %c0_i32_0 : i32, i32, i32
  }
}

</mosaic_0001>

<llo_original>
// kernel: tpu_custom_call.1
$region0: #{tpu_custom_call.1}
  #allocation0 [shape = 'u32[]', space=smem, size = 0x4, offset = 0x4, fixed_abs, tag = 'smem constant byte address 0x4 - core index']
  #allocation1 [shape = 'u32[72,128]{1,0:T(1,128)}', space=vmem, size = 0x9000, scoped, tag = 'internal scratch']
  #allocation2 [shape = 'f32[1]{0:T(128)S(6)}', space=smem, size = 0x200, scoped, tag = 'scoped memory for tpu_custom_call.1']
  %s0 = inlined_call_operand.vmem [shape: bf16[2,32,64], index: 0, kind: input, shape index: {}]
  %s1 = inlined_call_operand.hbm [shape: bf16[2,8,16], index: 1, kind: input, shape index: {}]
  %s2 = inlined_call_operand.hbm [shape: f32[32,32], index: 2, kind: input, shape index: {}]
  %s3 = inlined_call_operand.vmem [shape: f32[1,32], index: 3, kind: input, shape index: {}]
  %s4 = inlined_call_operand.vmem [shape: f32[1,32], index: 4, kind: input, shape index: {}]
  %s5 = inlined_call_operand.vmem [shape: bf16[32,32], index: 5, kind: input, shape index: {}]
  %s6 = inlined_call_operand.hbm [shape: f32[1,32], index: 6, kind: input, shape index: {}]
  %s7 = inlined_call_operand.hbm [shape: bf16[32,32], index: 7, kind: input, shape index: {}]
  %s8 = inlined_call_operand.hbm [shape: f32[1,32], index: 8, kind: input, shape index: {}]
  %s9 = inlined_call_operand.hbm [shape: bf16[32,32], index: 9, kind: input, shape index: {}]
  %s10 = inlined_call_operand.hbm [shape: f32[1,32], index: 10, kind: input, shape index: {}]
  %s11 = inlined_call_operand.<no memory space> [shape: f32[1], index: 11, kind: input, shape index: {}]
  %s12 = inlined_call_operand.hbm [shape: f32[1,32], index: 12, kind: input, shape index: {}]
  %s13 = inlined_call_operand.hbm [shape: f32[1,32], index: 13, kind: input, shape index: {}]
  %s14 = inlined_call_operand.hbm [shape: bf16[32,32], index: 14, kind: input, shape index: {}]
  %s15 = inlined_call_operand.hbm [shape: bf16[16,32], index: 15, kind: input, shape index: {}]
  %s16 = inlined_call_operand.hbm [shape: bf16[16,32], index: 16, kind: input, shape index: {}]
  %s17 = inlined_call_operand.vmem [shape: f32[64,32], index: 17, kind: input, shape index: {}]
  %s18 = inlined_call_operand.vmem [shape: f32[64,64], index: 18, kind: input, shape index: {}]
  %s19 = inlined_call_operand.hbm [shape: bf16[32,32], index: 19, kind: input, shape index: {}]
  %s20 = inlined_call_operand.vmem [shape: f32[1,32], index: 20, kind: input, shape index: {}]
  %s21 = inlined_call_operand.hbm [shape: f32[2,32,64], index: 21, kind: output, shape index: {}]
  %s22 = sld [smem:[#allocation0]]
  $region146: #{tpu_custom_call.1} parent=0
    _
  %s24 = ssub.s32 1, %s22
  %s25 = scalar_select 0, %s24, %s22
  %26 = sst [smem:[#allocation2]] %s11
  $region1: #{tpu_custom_call.1} parent=0
    #allocation3 [shape = 'u8[4096]{0}', space=vmem, size = 0x1000, scoped, tag = 'input window, operand 1, single buffered']
    #allocation4 [shape = 's32[1]{0}', space=sflag, size = 0x4, scoped, tag = 'scoped memory for tpu_custom_call.1']
    #allocation5 [shape = 's32[1]{0}', space=sflag, size = 0x4, scoped, tag = 'scoped memory for tpu_custom_call.1']
    #allocation6 [shape = 'u8[16384]{0}', space=vmem, size = 0x4000, scoped, tag = 'input window, operand 2, single buffered']
    #allocation7 [shape = 's32[1]{0}', space=sflag, size = 0x4, scoped, tag = 'scoped memory for tpu_custom_call.1']
    #allocation8 [shape = 'u8[512]{0}', space=vmem, size = 0x400, scoped, tag = 'input window, operand 6, single buffered']
    #allocation9 [shape = 'u8[8192]{0}', space=vmem, size = 0x2000, scoped, tag = 'input window, operand 7, single buffered']
    #allocation10 [shape = 's32[1]{0}', space=sflag, size = 0x4, scoped, tag = 'scoped memory for tpu_custom_call.1']
    #allocation11 [shape = 'u8[512]{0}', space=vmem, size = 0x400, scoped, tag = 'input window, operand 8, single buffered']
    #allocation12 [shape = 'u8[8192]{0}', space=vmem, size = 0x2000, scoped, tag = 'input window, operand 9, single buffered']
    #allocation13 [shape = 's32[1]{0}', space=sflag, size = 0x4, scoped, tag = 'scoped memory for tpu_custom_call.1']
    #allocation14 [shape = 'u8[512]{0}', space=vmem, size = 0x400, scoped, tag = 'input window, operand 10, single buffered']
    #allocation15 [shape = 'u8[512]{0}', space=vmem, size = 0x400, scoped, tag = 'input window, operand 12, single buffered']
    #allocation16 [shape = 's32[1]{0}', space=sflag, size = 0x4, scoped, tag = 'scoped memory for tpu_custom_call.1']
    #allocation17 [shape = 'u8[512]{0}', space=vmem, size = 0x400, scoped, tag = 'input window, operand 13, single buffered']
    #allocation18 [shape = 'u8[8192]{0}', space=vmem, size = 0x2000, scoped, tag = 'input window, operand 14, single buffered']
    #allocation19 [shape = 's32[1]{0}', space=sflag, size = 0x4, scoped, tag = 'scoped memory for tpu_custom_call.1']
    #allocation20 [shape = 'u8[4096]{0}', space=vmem, size = 0x1000, scoped, tag = 'input window, operand 15, single buffered']
    #allocation21 [shape = 'u8[4096]{0}', space=vmem, size = 0x1000, scoped, tag = 'input window, operand 16, single buffered']
    #allocation22 [shape = 's32[1]{0}', space=sflag, size = 0x4, scoped, tag = 'scoped memory for tpu_custom_call.1']
    #allocation23 [shape = 'u8[8192]{0}', space=vmem, size = 0x2000, scoped, tag = 'input window, operand 19, single buffered']
    #allocation24 [shape = 'u8[32768]{0}', space=vmem, size = 0x8000, scoped, tag = 'output window, operand 0, single buffered']
    %27 = vsyncpa [#allocation4], 0
    %28 = vsyncpa [#allocation7], 0
    %29 = vsyncpa [#allocation10], 0
    %30 = vsyncpa [#allocation13], 0
    %31 = vsyncpa [#allocation16], 0
    %32 = vsyncpa [#allocation19], 0
    %33 = vsyncpa [#allocation22], 0
    %34 = vsyncpa [#allocation5], 0
    // Predicated region
    $region2: #{tpu_custom_call.1} parent=1 // pred_check
      _
    $region3: #{tpu_custom_call.1} parent=1 // pred_check_branch
      %36 = sbr.rel (0) target = $region5
    $region4: #{tpu_custom_call.1} parent=1 // pred_region
      _
    $region5: #{tpu_custom_call.1} parent=1 // pred_fallthru
      _
    // Predicated region
    $region6: #{tpu_custom_call.1} parent=1 // pred_check
      _
    $region7: #{tpu_custom_call.1} parent=1 // pred_check_branch
      %38 = sbr.rel (0) target = $region9
    $region8: #{tpu_custom_call.1} parent=1 // pred_region
      %40 = vsyncadd [#allocation4], 0
      %s41 = sshll.u32 %s1, 4
      %s42 = int_to_ptr.hbm [resolvable:$true] %s41
      %s43 = sshll.u32 [#allocation3], 4
      %s44 = int_to_ptr.vmem [resolvable:$true] %s43
      %49 = dma.hbm_to_vmem [thread:$0]  %s42, 128, %s44, [#allocation4], 64, 64, 4
    $region9: #{tpu_custom_call.1} parent=1 // pred_fallthru
      _
    // Predicated region
    $region10: #{tpu_custom_call.1} parent=1 // pred_check
      _
    $region11: #{tpu_custom_call.1} parent=1 // pred_check_branch
      %51 = sbr.rel (0) target = $region13
    $region12: #{tpu_custom_call.1} parent=1 // pred_region
      %53 = vsyncadd [#allocation7], 0
      %s54 = sshll.u32 %s2, 4
      %s55 = int_to_ptr.hbm [resolvable:$true] %s54
      %s56 = sshll.u32 [#allocation6], 4
      %s57 = int_to_ptr.vmem [resolvable:$true] %s56
      %62 = dma.hbm_to_vmem [thread:$0]  %s55, 512, %s57, [#allocation7], 128, 128, 8
    $region13: #{tpu_custom_call.1} parent=1 // pred_fallthru
      _
    // Predicated region
    $region14: #{tpu_custom_call.1} parent=1 // pred_check
      _
    $region15: #{tpu_custom_call.1} parent=1 // pred_check_branch
      %64 = sbr.rel (0) target = $region17
    $region16: #{tpu_custom_call.1} parent=1 // pred_region
      _
    $region17: #{tpu_custom_call.1} parent=1 // pred_fallthru
      _
    // Predicated region
    $region18: #{tpu_custom_call.1} parent=1 // pred_check
      _
    $region19: #{tpu_custom_call.1} parent=1 // pred_check_branch
      %66 = sbr.rel (0) target = $region21
    $region20: #{tpu_custom_call.1} parent=1 // pred_region
      _
    $region21: #{tpu_custom_call.1} parent=1 // pred_fallthru
      _
    // Predicated region
    $region22: #{tpu_custom_call.1} parent=1 // pred_check
      _
    $region23: #{tpu_custom_call.1} parent=1 // pred_check_branch
      %68 = sbr.rel (0) target = $region25
    $region24: #{tpu_custom_call.1} parent=1 // pred_region
      _
    $region25: #{tpu_custom_call.1} parent=1 // pred_fallthru
      _
    // Predicated region
    $region26: #{tpu_custom_call.1} parent=1 // pred_check
      _
    $region27: #{tpu_custom_call.1} parent=1 // pred_check_branch
      %70 = sbr.rel (0) target = $region29
    $region28: #{tpu_custom_call.1} parent=1 // pred_region
      %72 = vsyncadd [#allocation7], 0
      %s74 = sshll.u32 %s6, 4
      %s75 = int_to_ptr.hbm [resolvable:$true] %s74
      %s76 = sshll.u32 [#allocation8], 4
      %s77 = int_to_ptr.vmem [resolvable:$true] %s76
      %79 = dma.hbm_to_vmem [thread:$0]  %s75, 16, %s77, [#allocation7]
    $region29: #{tpu_custom_call.1} parent=1 // pred_fallthru
      _
    // Predicated region
    $region30: #{tpu_custom_call.1} parent=1 // pred_check
      _
    $region31: #{tpu_custom_call.1} parent=1 // pred_check_branch
      %81 = sbr.rel (0) target = $region33
    $region32: #{tpu_custom_call.1} parent=1 // pred_region
      %83 = vsyncadd [#allocation10], 0
      %s84 = sshll.u32 %s7, 4
      %s85 = int_to_ptr.hbm [resolvable:$true] %s84
      %s86 = sshll.u32 [#allocation9], 4
      %s87 = int_to_ptr.vmem [resolvable:$true] %s86
      %92 = dma.hbm_to_vmem [thread:$0]  %s85, 256, %s87, [#allocation10], 64, 64, 4
    $region33: #{tpu_custom_call.1} parent=1 // pred_fallthru
      _
    // Predicated region
    $region34: #{tpu_custom_call.1} parent=1 // pred_check
      _
    $region35: #{tpu_custom_call.1} parent=1 // pred_check_branch
      %94 = sbr.rel (0) target = $region37
    $region36: #{tpu_custom_call.1} parent=1 // pred_region
      %96 = vsyncadd [#allocation10], 0
      %s98 = sshll.u32 %s8, 4
      %s99 = int_to_ptr.hbm [resolvable:$true] %s98
      %s100 = sshll.u32 [#allocation11], 4
      %s101 = int_to_ptr.vmem [resolvable:$true] %s100
      %103 = dma.hbm_to_vmem [thread:$0]  %s99, 16, %s101, [#allocation10]
    $region37: #{tpu_custom_call.1} parent=1 // pred_fallthru
      _
    // Predicated region
    $region38: #{tpu_custom_call.1} parent=1 // pred_check
      _
    $region39: #{tpu_custom_call.1} parent=1 // pred_check_branch
      %105 = sbr.rel (0) target = $region41
    $region40: #{tpu_custom_call.1} parent=1 // pred_region
      %107 = vsyncadd [#allocation13], 0
      %s108 = sshll.u32 %s9, 4
      %s109 = int_to_ptr.hbm [resolvable:$true] %s108
      %s110 = sshll.u32 [#allocation12], 4
      %s111 = int_to_ptr.vmem [resolvable:$true] %s110
      %116 = dma.hbm_to_vmem [thread:$0]  %s109, 256, %s111, [#allocation13], 64, 64, 4
    $region41: #{tpu_custom_call.1} parent=1 // pred_fallthru
      _
    // Predicated region
    $region42: #{tpu_custom_call.1} parent=1 // pred_check
      _
    $region43: #{tpu_custom_call.1} parent=1 // pred_check_branch
      %118 = sbr.rel (0) target = $region45
    $region44: #{tpu_custom_call.1} parent=1 // pred_region
      %120 = vsyncadd [#allocation13], 0
      %s122 = sshll.u32 %s10, 4
      %s123 = int_to_ptr.hbm [resolvable:$true] %s122
      %s124 = sshll.u32 [#allocation14], 4
      %s125 = int_to_ptr.vmem [resolvable:$true] %s124
      %127 = dma.hbm_to_vmem [thread:$0]  %s123, 16, %s125, [#allocation13]
    $region45: #{tpu_custom_call.1} parent=1 // pred_fallthru
      _
    // Predicated region
    $region46: #{tpu_custom_call.1} parent=1 // pred_check
      _
    $region47: #{tpu_custom_call.1} parent=1 // pred_check_branch
      %129 = sbr.rel (0) target = $region49
    $region48: #{tpu_custom_call.1} parent=1 // pred_region
      _
    $region49: #{tpu_custom_call.1} parent=1 // pred_fallthru
      _
    // Predicated region
    $region50: #{tpu_custom_call.1} parent=1 // pred_check
      _
    $region51: #{tpu_custom_call.1} parent=1 // pred_check_branch
      %131 = sbr.rel (0) target = $region53
    $region52: #{tpu_custom_call.1} parent=1 // pred_region
      %133 = vsyncadd [#allocation16], 0
      %s135 = sshll.u32 %s12, 4
      %s136 = int_to_ptr.hbm [resolvable:$true] %s135
      %s137 = sshll.u32 [#allocation15], 4
      %s138 = int_to_ptr.vmem [resolvable:$true] %s137
      %140 = dma.hbm_to_vmem [thread:$0]  %s136, 16, %s138, [#allocation16]
    $region53: #{tpu_custom_call.1} parent=1 // pred_fallthru
      _
    // Predicated region
    $region54: #{tpu_custom_call.1} parent=1 // pred_check
      _
    $region55: #{tpu_custom_call.1} parent=1 // pred_check_branch
      %142 = sbr.rel (0) target = $region57
    $region56: #{tpu_custom_call.1} parent=1 // pred_region
      %144 = vsyncadd [#allocation16], 0
      %s146 = sshll.u32 %s13, 4
      %s147 = int_to_ptr.hbm [resolvable:$true] %s146
      %s148 = sshll.u32 [#allocation17], 4
      %s149 = int_to_ptr.vmem [resolvable:$true] %s148
      %151 = dma.hbm_to_vmem [thread:$0]  %s147, 16, %s149, [#allocation16]
    $region57: #{tpu_custom_call.1} parent=1 // pred_fallthru
      _
    // Predicated region
    $region58: #{tpu_custom_call.1} parent=1 // pred_check
      _
    $region59: #{tpu_custom_call.1} parent=1 // pred_check_branch
      %153 = sbr.rel (0) target = $region61
    $region60: #{tpu_custom_call.1} parent=1 // pred_region
      %155 = vsyncadd [#allocation19], 0
      %s156 = sshll.u32 %s14, 4
      %s157 = int_to_ptr.hbm [resolvable:$true] %s156
      %s158 = sshll.u32 [#allocation18], 4
      %s159 = int_to_ptr.vmem [resolvable:$true] %s158
      %164 = dma.hbm_to_vmem [thread:$0]  %s157, 256, %s159, [#allocation19], 64, 64, 4
    $region61: #{tpu_custom_call.1} parent=1 // pred_fallthru
      _
    // Predicated region
    $region62: #{tpu_custom_call.1} parent=1 // pred_check
      _
    $region63: #{tpu_custom_call.1} parent=1 // pred_check_branch
      %166 = sbr.rel (0) target = $region65
    $region64: #{tpu_custom_call.1} parent=1 // pred_region
      %168 = vsyncadd [#allocation19], 0
      %s169 = sshll.u32 %s15, 4
      %s170 = int_to_ptr.hbm [resolvable:$true] %s169
      %s171 = sshll.u32 [#allocation20], 4
      %s172 = int_to_ptr.vmem [resolvable:$true] %s171
      %177 = dma.hbm_to_vmem [thread:$0]  %s170, 128, %s172, [#allocation19], 64, 64, 4
    $region65: #{tpu_custom_call.1} parent=1 // pred_fallthru
      _
    // Predicated region
    $region66: #{tpu_custom_call.1} parent=1 // pred_check
      _
    $region67: #{tpu_custom_call.1} parent=1 // pred_check_branch
      %179 = sbr.rel (0) target = $region69
    $region68: #{tpu_custom_call.1} parent=1 // pred_region
      %181 = vsyncadd [#allocation22], 0
      %s182 = sshll.u32 %s16, 4
      %s183 = int_to_ptr.hbm [resolvable:$true] %s182
      %s184 = sshll.u32 [#allocation21], 4
      %s185 = int_to_ptr.vmem [resolvable:$true] %s184
      %190 = dma.hbm_to_vmem [thread:$0]  %s183, 128, %s185, [#allocation22], 64, 64, 4
    $region69: #{tpu_custom_call.1} parent=1 // pred_fallthru
      _
    // Predicated region
    $region70: #{tpu_custom_call.1} parent=1 // pred_check
      _
    $region71: #{tpu_custom_call.1} parent=1 // pred_check_branch
      %192 = sbr.rel (0) target = $region73
    $region72: #{tpu_custom_call.1} parent=1 // pred_region
      _
    $region73: #{tpu_custom_call.1} parent=1 // pred_fallthru
      _
    // Predicated region
    $region74: #{tpu_custom_call.1} parent=1 // pred_check
      _
    $region75: #{tpu_custom_call.1} parent=1 // pred_check_branch
      %194 = sbr.rel (0) target = $region77
    $region76: #{tpu_custom_call.1} parent=1 // pred_region
      _
    $region77: #{tpu_custom_call.1} parent=1 // pred_fallthru
      _
    // Predicated region
    $region78: #{tpu_custom_call.1} parent=1 // pred_check
      _
    $region79: #{tpu_custom_call.1} parent=1 // pred_check_branch
      %196 = sbr.rel (0) target = $region81
    $region80: #{tpu_custom_call.1} parent=1 // pred_region
      %198 = vsyncadd [#allocation22], 0
      %s199 = sshll.u32 %s19, 4
      %s200 = int_to_ptr.hbm [resolvable:$true] %s199
      %s201 = sshll.u32 [#allocation23], 4
      %s202 = int_to_ptr.vmem [resolvable:$true] %s201
      %207 = dma.hbm_to_vmem [thread:$0]  %s200, 256, %s202, [#allocation22], 64, 64, 4
    $region81: #{tpu_custom_call.1} parent=1 // pred_fallthru
      _
    // Predicated region
    $region82: #{tpu_custom_call.1} parent=1 // pred_check
      _
    $region83: #{tpu_custom_call.1} parent=1 // pred_check_branch
      %209 = sbr.rel (0) target = $region85
    $region84: #{tpu_custom_call.1} parent=1 // pred_region
      _
    $region85: #{tpu_custom_call.1} parent=1 // pred_fallthru
      _
    // Predicated region
    $region86: #{tpu_custom_call.1} parent=1 // pred_check
      _
    $region87: #{tpu_custom_call.1} parent=1 // pred_check_branch
      %211 = sbr.rel (0) target = $region89
    $region88: #{tpu_custom_call.1} parent=1 // pred_region
      %213 = dma.done [#allocation4], 128
    $region89: #{tpu_custom_call.1} parent=1 // pred_fallthru
      _
    // Predicated region
    $region90: #{tpu_custom_call.1} parent=1 // pred_check
      _
    $region91: #{tpu_custom_call.1} parent=1 // pred_check_branch
      %215 = sbr.rel (0) target = $region93
    $region92: #{tpu_custom_call.1} parent=1 // pred_region
      %217 = dma.done [#allocation7], 512
    $region93: #{tpu_custom_call.1} parent=1 // pred_fallthru
      _
    // Predicated region
    $region94: #{tpu_custom_call.1} parent=1 // pred_check
      _
    $region95: #{tpu_custom_call.1} parent=1 // pred_check_branch
      %219 = sbr.rel (0) target = $region97
    $region96: #{tpu_custom_call.1} parent=1 // pred_region
      %221 = dma.done [#allocation7], 16
    $region97: #{tpu_custom_call.1} parent=1 // pred_fallthru
      _
    // Predicated region
    $region98: #{tpu_custom_call.1} parent=1 // pred_check
      _
    $region99: #{tpu_custom_call.1} parent=1 // pred_check_branch
      %223 = sbr.rel (0) target = $region101
    $region100: #{tpu_custom_call.1} parent=1 // pred_region
      %225 = dma.done [#allocation10], 256
    $region101: #{tpu_custom_call.1} parent=1 // pred_fallthru
      _
    // Predicated region
    $region102: #{tpu_custom_call.1} parent=1 // pred_check
      _
    $region103: #{tpu_custom_call.1} parent=1 // pred_check_branch
      %227 = sbr.rel (0) target = $region105
    $region104: #{tpu_custom_call.1} parent=1 // pred_region
      %229 = dma.done [#allocation10], 16
    $region105: #{tpu_custom_call.1} parent=1 // pred_fallthru
      _
    // Predicated region
    $region106: #{tpu_custom_call.1} parent=1 // pred_check
      _
    $region107: #{tpu_custom_call.1} parent=1 // pred_check_branch
      %231 = sbr.rel (0) target = $region109
    $region108: #{tpu_custom_call.1} parent=1 // pred_region
      %233 = dma.done [#allocation13], 256
    $region109: #{tpu_custom_call.1} parent=1 // pred_fallthru
      _
    // Predicated region
    $region110: #{tpu_custom_call.1} parent=1 // pred_check
      _
    $region111: #{tpu_custom_call.1} parent=1 // pred_check_branch
      %235 = sbr.rel (0) target = $region113
    $region112: #{tpu_custom_call.1} parent=1 // pred_region
      %237 = dma.done [#allocation13], 16
    $region113: #{tpu_custom_call.1} parent=1 // pred_fallthru
      _
    // Predicated region
    $region114: #{tpu_custom_call.1} parent=1 // pred_check
      _
    $region115: #{tpu_custom_call.1} parent=1 // pred_check_branch
      %239 = sbr.rel (0) target = $region117
    $region116: #{tpu_custom_call.1} parent=1 // pred_region
      %241 = dma.done [#allocation16], 16
    $region117: #{tpu_custom_call.1} parent=1 // pred_fallthru
      _
    // Predicated region
    $region118: #{tpu_custom_call.1} parent=1 // pred_check
      _
    $region119: #{tpu_custom_call.1} parent=1 // pred_check_branch
      %243 = sbr.rel (0) target = $region121
    $region120: #{tpu_custom_call.1} parent=1 // pred_region
      %245 = dma.done [#allocation16], 16
    $region121: #{tpu_custom_call.1} parent=1 // pred_fallthru
      _
    // Predicated region
    $region122: #{tpu_custom_call.1} parent=1 // pred_check
      _
    $region123: #{tpu_custom_call.1} parent=1 // pred_check_branch
      %247 = sbr.rel (0) target = $region125
    $region124: #{tpu_custom_call.1} parent=1 // pred_region
      %249 = dma.done [#allocation19], 256
    $region125: #{tpu_custom_call.1} parent=1 // pred_fallthru
      _
    // Predicated region
    $region126: #{tpu_custom_call.1} parent=1 // pred_check
      _
    $region127: #{tpu_custom_call.1} parent=1 // pred_check_branch
      %251 = sbr.rel (0) target = $region129
    $region128: #{tpu_custom_call.1} parent=1 // pred_region
      %253 = dma.done [#allocation19], 128
    $region129: #{tpu_custom_call.1} parent=1 // pred_fallthru
      _
    // Predicated region
    $region130: #{tpu_custom_call.1} parent=1 // pred_check
      _
    $region131: #{tpu_custom_call.1} parent=1 // pred_check_branch
      %255 = sbr.rel (0) target = $region133
    $region132: #{tpu_custom_call.1} parent=1 // pred_region
      %257 = dma.done [#allocation22], 128
    $region133: #{tpu_custom_call.1} parent=1 // pred_fallthru
      _
    // Predicated region
    $region134: #{tpu_custom_call.1} parent=1 // pred_check
      _
    $region135: #{tpu_custom_call.1} parent=1 // pred_check_branch
      %259 = sbr.rel (0) target = $region137
    $region136: #{tpu_custom_call.1} parent=1 // pred_region
      %261 = dma.done [#allocation22], 256
    $region137: #{tpu_custom_call.1} parent=1 // pred_fallthru
      _
    %v263 = vld [vmem:[#allocation6] sm:$0xff]
    %v264 = vld [vmem:[#allocation6 + $0x8] sm:$0xff]
    %v265 = vld [vmem:[#allocation6 + $0x10] sm:$0xff]
    %v266 = vld [vmem:[#allocation6 + $0x18] sm:$0xff]
    %v267 = vld [vmem:[%s3] sm:$0x1]
    %v268 = vld [vmem:[%s4] sm:$0x1]
    %v269 = vld [vmem:[#allocation15] sm:$0x1]
    %v270 = vld [vmem:[#allocation17] sm:$0x1]
    %v271 = vld [vmem:[#allocation8] sm:$0x1]
    %v272 = vld [vmem:[#allocation11] sm:$0x1]
    %v273 = vld [vmem:[#allocation14] sm:$0x1]
    %v274 = vld [vmem:[%s20] sm:$0x1]
    %v275 = vld [vmem:[%s5] sm:$0xf]
    %v276 = vld [vmem:[%s5 + $0x4] sm:$0xf]
    %v277 = vld [vmem:[%s5 + $0x8] sm:$0xf]
    %v278 = vld [vmem:[%s5 + $0xc] sm:$0xf]
    %v279 = vld [vmem:[#allocation9] sm:$0xf]
    %v280 = vld [vmem:[#allocation9 + $0x4] sm:$0xf]
    %v281 = vld [vmem:[#allocation9 + $0x8] sm:$0xf]
    %v282 = vld [vmem:[#allocation9 + $0xc] sm:$0xf]
    %v283 = vld [vmem:[#allocation12] sm:$0xf]
    %v284 = vld [vmem:[#allocation12 + $0x4] sm:$0xf]
    %v285 = vld [vmem:[#allocation12 + $0x8] sm:$0xf]
    %v286 = vld [vmem:[#allocation12 + $0xc] sm:$0xf]
    %v287 = vld [vmem:[#allocation18] sm:$0xf]
    %v288 = vld [vmem:[#allocation18 + $0x4] sm:$0xf]
    %v289 = vld [vmem:[#allocation18 + $0x8] sm:$0xf]
    %v290 = vld [vmem:[#allocation18 + $0xc] sm:$0xf]
    %v291 = vld [vmem:[#allocation20] sm:$0xf]
    %v292 = vld [vmem:[#allocation20 + $0x4] sm:$0xf]
    %v293 = vld [vmem:[#allocation21] sm:$0xf]
    %v294 = vld [vmem:[#allocation21 + $0x4] sm:$0xf]
    %v295 = vld [vmem:[#allocation23] sm:$0xf]
    %v296 = vld [vmem:[#allocation23 + $0x4] sm:$0xf]
    %v297 = vld [vmem:[#allocation23 + $0x8] sm:$0xf]
    %v298 = vld [vmem:[#allocation23 + $0xc] sm:$0xf]
    %v299 = vld [vmem:[%s17] sm:$0xff]
    %v300 = vld [vmem:[%s17 + $0x8] sm:$0xff]
    %v301 = vld [vmem:[%s17 + $0x10] sm:$0xff]
    %v302 = vld [vmem:[%s17 + $0x18] sm:$0xff]
    %v303 = vld [vmem:[%s17 + $0x20] sm:$0xff]
    %v304 = vld [vmem:[%s17 + $0x28] sm:$0xff]
    %v305 = vld [vmem:[%s17 + $0x30] sm:$0xff]
    %v306 = vld [vmem:[%s17 + $0x38] sm:$0xff]
    %v307 = vld [vmem:[%s18] sm:$0xff]
    %v308 = vld [vmem:[%s18 + $0x8] sm:$0xff]
    %v309 = vld [vmem:[%s18 + $0x10] sm:$0xff]
    %v310 = vld [vmem:[%s18 + $0x18] sm:$0xff]
    %v311 = vld [vmem:[%s18 + $0x20] sm:$0xff]
    %v312 = vld [vmem:[%s18 + $0x28] sm:$0xff]
    %v313 = vld [vmem:[%s18 + $0x30] sm:$0xff]
    %v314 = vld [vmem:[%s18 + $0x38] sm:$0xff]
    %s315 = sld [smem:[#allocation2]]
    %vm316 = vcmp.gt.f32.partialorder %v307, 0.5
    %vm317 = vcmp.gt.f32.partialorder %v308, 0.5
    %vm318 = vcmp.gt.f32.partialorder %v309, 0.5
    %vm319 = vcmp.gt.f32.partialorder %v310, 0.5
    %vm320 = vcmp.gt.f32.partialorder %v311, 0.5
    %vm321 = vcmp.gt.f32.partialorder %v312, 0.5
    %vm322 = vcmp.gt.f32.partialorder %v313, 0.5
    %vm323 = vcmp.gt.f32.partialorder %v314, 0.5
    %v324 = vld [vmem:[%s0] sm:$0xf]
    %v325 = vld [vmem:[%s0 + $0x4] sm:$0xf]
    %v326 = vld [vmem:[%s0 + $0x8] sm:$0xf]
    %v327 = vld [vmem:[%s0 + $0xc] sm:$0xf]
    %v328 = vunpack.c.l.bf16 %v324
    %v329 = vunpack.c.l.bf16 %v325
    %v330 = vunpack.c.l.bf16 %v326
    %v331 = vunpack.c.l.bf16 %v327
    %332 = vxpose.xlu0.b32.start [1/16] %v328, 128
    %333 = vxpose.xlu0.b32.cont [2/16] %v329, 128
    %334 = vxpose.xlu0.b32.cont [3/16] %v330, 128
    %335 = vxpose.xlu0.b32.cont [4/16] %v331, 128
    %336 = vxpose.xlu0.b32.cont [5/16] 0.0, 128
    %337 = vxpose.xlu0.b32.cont [6/16] 0.0, 128
    %338 = vxpose.xlu0.b32.cont [7/16] 0.0, 128
    %339 = vxpose.xlu0.b32.cont [8/16] 0.0, 128
    %340 = vxpose.xlu0.b32.cont [9/16] 0.0, 128
    %341 = vxpose.xlu0.b32.cont [10/16] 0.0, 128
    %342 = vxpose.xlu0.b32.cont [11/16] 0.0, 128
    %343 = vxpose.xlu0.b32.cont [12/16] 0.0, 128
    %344 = vxpose.xlu0.b32.cont [13/16] 0.0, 128
    %345 = vxpose.xlu0.b32.cont [14/16] 0.0, 128
    %346 = vxpose.xlu0.b32.cont [15/16] 0.0, 128
    %347 = vxpose.xlu0.b32.end [16/16] 0.0, 128
    %v348 = vpop.trf.xlu0
    %v349 = vpop.trf.xlu0
    %v350 = vpop.trf.xlu0
    %v351 = vpop.trf.xlu0
    %v352 = vpop.trf.xlu0
    %v353 = vpop.trf.xlu0
    %v354 = vpop.trf.xlu0
    %v355 = vpop.trf.xlu0
    %v356 = vpop.trf.xlu0
    %v357 = vpop.trf.xlu0
    %v358 = vpop.trf.xlu0
    %v359 = vpop.trf.xlu0
    %v360 = vpop.trf.xlu0
    %v361 = vpop.trf.xlu0
    %v362 = vpop.trf.xlu0
    %v363 = vpop.trf.xlu0
    %vm364 = vcmask 261120
    %v365 = vsel %vm364, %v348, 0.0
    %v366 = vsel %vm364, %v349, 0.0
    %v367 = vadd.f32 %v365, %v366
    %v368 = vsel %vm364, %v350, 0.0
    %v369 = vadd.f32 %v367, %v368
    %v370 = vsel %vm364, %v351, 0.0
    %v371 = vadd.f32 %v369, %v370
    %v372 = vsel %vm364, %v352, 0.0
    %v373 = vadd.f32 %v371, %v372
    %v374 = vsel %vm364, %v353, 0.0
    %v375 = vadd.f32 %v373, %v374
    %v376 = vsel %vm364, %v354, 0.0
    %v377 = vadd.f32 %v375, %v376
    %v378 = vsel %vm364, %v355, 0.0
    %v379 = vadd.f32 %v377, %v378
    %v380 = vrot.slane %v379, 4
    %v381 = vadd.f32 %v379, %v380
    %v382 = vrot.slane %v381, 2
    %v383 = vadd.f32 %v381, %v382
    %v384 = vrot.slane %v383, 1
    %v385 = vadd.f32 %v383, %v384
    %v386 = vrcp.pop 64.0
    %v387 = vmul.f32 64.0, %v386
    %v388 = vsub.f32 1.0, %v387
    %v389 = vmul.f32 %v386, %v388
    %v390 = vadd.f32 %v386, %v389
    %vm391 = vweird.f32 %v386
    %v392 = vsel %vm391, %v386, %v390
    %v393 = vmul.f32 %v385, %v392
    %v394 = vmul.f32 %v348, %v348
    %v395 = vmul.f32 %v349, %v349
    %v396 = vmul.f32 %v350, %v350
    %v397 = vmul.f32 %v351, %v351
    %v398 = vmul.f32 %v352, %v352
    %v399 = vmul.f32 %v353, %v353
    %v400 = vmul.f32 %v354, %v354
    %v401 = vmul.f32 %v355, %v355
    %v402 = vsel %vm364, %v394, 0.0
    %v403 = vsel %vm364, %v395, 0.0
    %v404 = vadd.f32 %v402, %v403
    %v405 = vsel %vm364, %v396, 0.0
    %v406 = vadd.f32 %v404, %v405
    %v407 = vsel %vm364, %v397, 0.0
    %v408 = vadd.f32 %v406, %v407
    %v409 = vsel %vm364, %v398, 0.0
    %v410 = vadd.f32 %v408, %v409
    %v411 = vsel %vm364, %v399, 0.0
    %v412 = vadd.f32 %v410, %v411
    %v413 = vsel %vm364, %v400, 0.0
    %v414 = vadd.f32 %v412, %v413
    %v415 = vsel %vm364, %v401, 0.0
    %v416 = vadd.f32 %v414, %v415
    %v417 = vrot.slane %v416, 4
    %v418 = vadd.f32 %v416, %v417
    %v419 = vrot.slane %v418, 2
    %v420 = vadd.f32 %v418, %v419
    %v421 = vrot.slane %v420, 1
    %v422 = vadd.f32 %v420, %v421
    %v423 = vmul.f32 %v422, %v392
    %vm424 = vcmask 1040384
    %v425 = vsel %vm424, %v393, %v423
    %v426 = vpack.c.bf16 %v425, %v425
    %v427 = vpack.c.bf16 %v264, %v263
    %v428 = vpack.c.bf16 %v266, %v265
    %v430 = vsel %vm364, %v426, 0
    %432 = vmatpush.bf16.msra.mxu0 0
    %433 = vmatpush.bf16.msra.mxu0 0
    %434 = vmatpush.bf16.msra.mxu0 0
    %435 = vmatpush.bf16.msra.mxu0 0
    %436 = vmatpush.bf16.msra.mxu0 0
    %437 = vmatpush.bf16.msra.mxu0 0
    %438 = vmatpush.bf16.msra.mxu0 %v428
    %439 = vmatpush.bf16.msra.mxu0 %v427
    %440 = vmatmul.bf16.gmra.mxu0 %v430
    %v441 = vpop.f32.mrf.mxu0
    %v442 = vadd.f32 0.0, %v441
    %v443 = vpop.f32.mrf.mxu0
    %444 = vdwg.mxu0
    %v445 = vmul.f32 %v442, %v442
    %v447 = vrot.slane %v445, 7
    %v449 = vsub.f32 %v442, %v447
    %v450 = vmax.f32 %v449, 0.0
    %v451 = vperm.slane %v442, 0
    %v452 = vsub.f32 %v348, %v451
    %v453 = vsub.f32 %v349, %v451
    %v454 = vsub.f32 %v350, %v451
    %v455 = vsub.f32 %v351, %v451
    %v456 = vsub.f32 %v352, %v451
    %v457 = vsub.f32 %v353, %v451
    %v458 = vsub.f32 %v354, %v451
    %v459 = vsub.f32 %v355, %v451
    %v460 = vadd.f32 %v450, 1e-05
    %v461 = vrsqrt.pop %v460
    %v462 = vmul.f32 %v461, %v460
    %v463 = vmul.f32 %v462, %v461
    %v464 = vmul.f32 0.5, %v463
    %v465 = vsub.f32 1.5, %v464
    %v466 = vmul.f32 %v461, %v465
    %vm467 = vweird.f32 %v460
    %vm468 = vweird.f32 %v461
    %vm469 = vmor %vm467, %vm468
    %v470 = vsel %vm469, %v461, %v466
    %v471 = vperm.slane %v470, 1
    %v472 = vmul.f32 %v452, %v471
    %v473 = vmul.f32 %v453, %v471
    %v474 = vmul.f32 %v454, %v471
    %v475 = vmul.f32 %v455, %v471
    %v476 = vmul.f32 %v456, %v471
    %v477 = vmul.f32 %v457, %v471
    %v478 = vmul.f32 %v458, %v471
    %v479 = vmul.f32 %v459, %v471
    %v481 = vperm.slane %v267, 0
    %v483 = vmul.f32 %v472, %v481
    %v484 = vmul.f32 %v473, %v481
    %v485 = vmul.f32 %v474, %v481
    %v486 = vmul.f32 %v475, %v481
    %v487 = vmul.f32 %v476, %v481
    %v488 = vmul.f32 %v477, %v481
    %v489 = vmul.f32 %v478, %v481
    %v490 = vmul.f32 %v479, %v481
    %v492 = vperm.slane %v268, 0
    %v494 = vadd.f32 %v483, %v492
    %v495 = vadd.f32 %v484, %v492
    %v496 = vadd.f32 %v485, %v492
    %v497 = vadd.f32 %v486, %v492
    %v498 = vadd.f32 %v487, %v492
    %v499 = vadd.f32 %v488, %v492
    %v500 = vadd.f32 %v489, %v492
    %v501 = vadd.f32 %v490, %v492
    %v502 = vpack.c.bf16 %v495, %v494
    %v503 = vpack.c.bf16 %v497, %v496
    %v504 = vpack.c.bf16 %v499, %v498
    %v505 = vpack.c.bf16 %v501, %v500
    %v507 = vperm.slane %v271, 0
    %v513 = vunpack.c.l.b16 %v275
    %v514 = vunpack.c.l.b16 %v276
    %v515 = vunpack.c.l.b16 %v277
    %v516 = vunpack.c.l.b16 %v278
    %v517 = vpack.c.b16 %v514, %v513
    %v518 = vpack.c.b16 %v516, %v515
    %v522 = vsel %vm364, %v502, 0
    %v525 = vsel %vm364, %v503, 0
    %v528 = vsel %vm364, %v504, 0
    %v531 = vsel %vm364, %v505, 0
    %533 = vmatpush.bf16.msra.mxu0 0
    %534 = vmatpush.bf16.msra.mxu0 0
    %535 = vmatpush.bf16.msra.mxu0 0
    %536 = vmatpush.bf16.msra.mxu0 0
    %537 = vmatpush.bf16.msra.mxu0 0
    %538 = vmatpush.bf16.msra.mxu0 0
    %539 = vmatpush.bf16.msra.mxu0 %v518
    %540 = vmatpush.bf16.msra.mxu0 %v517
    %541 = vmatmul.bf16.gmra.mxu0 %v522
    %v542 = vpop.f32.mrf.mxu0
    %v543 = vadd.f32 %v507, %v542
    %v544 = vpop.f32.mrf.mxu0
    %v545 = vadd.f32 %v507, %v544
    %546 = vmatmul.bf16.gmra.mxu0 %v525
    %v547 = vpop.f32.mrf.mxu0
    %v548 = vadd.f32 %v507, %v547
    %v549 = vpop.f32.mrf.mxu0
    %v550 = vadd.f32 %v507, %v549
    %551 = vmatmul.bf16.gmra.mxu0 %v528
    %v552 = vpop.f32.mrf.mxu0
    %v553 = vadd.f32 %v507, %v552
    %v554 = vpop.f32.mrf.mxu0
    %v555 = vadd.f32 %v507, %v554
    %556 = vmatmul.bf16.gmra.mxu0 %v531
    %v557 = vpop.f32.mrf.mxu0
    %v558 = vadd.f32 %v507, %v557
    %v559 = vpop.f32.mrf.mxu0
    %v560 = vadd.f32 %v507, %v559
    %561 = vdwg.mxu0
    %v563 = vperm.slane %v272, 0
    %v569 = vunpack.c.l.b16 %v279
    %v570 = vunpack.c.l.b16 %v280
    %v571 = vunpack.c.l.b16 %v281
    %v572 = vunpack.c.l.b16 %v282
    %v573 = vpack.c.b16 %v570, %v569
    %v574 = vpack.c.b16 %v572, %v571
    %577 = vmatpush.bf16.msra.mxu0 0
    %578 = vmatpush.bf16.msra.mxu0 0
    %579 = vmatpush.bf16.msra.mxu0 0
    %580 = vmatpush.bf16.msra.mxu0 0
    %581 = vmatpush.bf16.msra.mxu0 0
    %582 = vmatpush.bf16.msra.mxu0 0
    %583 = vmatpush.bf16.msra.mxu0 %v574
    %584 = vmatpush.bf16.msra.mxu0 %v573
    %585 = vmatmul.bf16.gmra.mxu0 %v522
    %v586 = vpop.f32.mrf.mxu0
    %v587 = vadd.f32 %v563, %v586
    %v588 = vpop.f32.mrf.mxu0
    %v589 = vadd.f32 %v563, %v588
    %590 = vmatmul.bf16.gmra.mxu0 %v525
    %v591 = vpop.f32.mrf.mxu0
    %v592 = vadd.f32 %v563, %v591
    %v593 = vpop.f32.mrf.mxu0
    %v594 = vadd.f32 %v563, %v593
    %595 = vmatmul.bf16.gmra.mxu0 %v528
    %v596 = vpop.f32.mrf.mxu0
    %v597 = vadd.f32 %v563, %v596
    %v598 = vpop.f32.mrf.mxu0
    %v599 = vadd.f32 %v563, %v598
    %600 = vmatmul.bf16.gmra.mxu0 %v531
    %v601 = vpop.f32.mrf.mxu0
    %v602 = vadd.f32 %v563, %v601
    %v603 = vpop.f32.mrf.mxu0
    %v604 = vadd.f32 %v563, %v603
    %605 = vdwg.mxu0
    %v607 = vperm.slane %v273, 0
    %v613 = vunpack.c.l.b16 %v283
    %v614 = vunpack.c.l.b16 %v284
    %v615 = vunpack.c.l.b16 %v285
    %v616 = vunpack.c.l.b16 %v286
    %v617 = vpack.c.b16 %v614, %v613
    %v618 = vpack.c.b16 %v616, %v615
    %621 = vmatpush.bf16.msra.mxu0 0
    %622 = vmatpush.bf16.msra.mxu0 0
    %623 = vmatpush.bf16.msra.mxu0 0
    %624 = vmatpush.bf16.msra.mxu0 0
    %625 = vmatpush.bf16.msra.mxu0 0
    %626 = vmatpush.bf16.msra.mxu0 0
    %627 = vmatpush.bf16.msra.mxu0 %v618
    %628 = vmatpush.bf16.msra.mxu0 %v617
    %629 = vmatmul.bf16.gmra.mxu0 %v522
    %v630 = vpop.f32.mrf.mxu0
    %v631 = vadd.f32 %v607, %v630
    %v632 = vpop.f32.mrf.mxu0
    %v633 = vadd.f32 %v607, %v632
    %634 = vmatmul.bf16.gmra.mxu0 %v525
    %v635 = vpop.f32.mrf.mxu0
    %v636 = vadd.f32 %v607, %v635
    %v637 = vpop.f32.mrf.mxu0
    %v638 = vadd.f32 %v607, %v637
    %639 = vmatmul.bf16.gmra.mxu0 %v528
    %v640 = vpop.f32.mrf.mxu0
    %v641 = vadd.f32 %v607, %v640
    %v642 = vpop.f32.mrf.mxu0
    %v643 = vadd.f32 %v607, %v642
    %644 = vmatmul.bf16.gmra.mxu0 %v531
    %v645 = vpop.f32.mrf.mxu0
    %v646 = vadd.f32 %v607, %v645
    %v647 = vpop.f32.mrf.mxu0
    %v648 = vadd.f32 %v607, %v647
    %649 = vdwg.mxu0
    %v650 = vpack.c.bf16 %v545, %v543
    %v651 = vpack.c.bf16 %v550, %v548
    %v652 = vpack.c.bf16 %v555, %v553
    %v653 = vpack.c.bf16 %v560, %v558
    %v654 = vpack.c.bf16 %v589, %v587
    %v655 = vpack.c.bf16 %v594, %v592
    %v656 = vpack.c.bf16 %v599, %v597
    %v657 = vpack.c.bf16 %v604, %v602
    %v659 = vsel %vm364, %v650, 0
    %v662 = vsel %vm364, %v651, 0
    %v665 = vsel %vm364, %v652, 0
    %v668 = vsel %vm364, %v653, 0
    %v671 = vsel %vm364, %v654, 0
    %v674 = vsel %vm364, %v655, 0
    %v677 = vsel %vm364, %v656, 0
    %v680 = vsel %vm364, %v657, 0
    %682 = vmatpush.bf16.xpose.msra.mxu0 0
    %683 = vmatpush.bf16.xpose.msra.mxu0 0
    %684 = vmatpush.bf16.xpose.msra.mxu0 0
    %685 = vmatpush.bf16.xpose.msra.mxu0 0
    %686 = vmatpush.bf16.xpose.msra.mxu0 %v680
    %687 = vmatpush.bf16.xpose.msra.mxu0 %v677
    %688 = vmatpush.bf16.xpose.msra.mxu0 %v674
    %689 = vmatpush.bf16.xpose.msra.mxu0 %v671
    %690 = vmatmul.bf16.gmra.mxu0 %v659
    %v691 = vpop.f32.mrf.mxu0
    %v692 = vadd.f32 0.0, %v691
    %v693 = vpop.f32.mrf.mxu0
    %v694 = vadd.f32 0.0, %v693
    %695 = vmatmul.bf16.gmra.mxu0 %v662
    %v696 = vpop.f32.mrf.mxu0
    %v697 = vadd.f32 0.0, %v696
    %v698 = vpop.f32.mrf.mxu0
    %v699 = vadd.f32 0.0, %v698
    %700 = vmatmul.bf16.gmra.mxu0 %v665
    %v701 = vpop.f32.mrf.mxu0
    %v702 = vadd.f32 0.0, %v701
    %v703 = vpop.f32.mrf.mxu0
    %v704 = vadd.f32 0.0, %v703
    %705 = vmatmul.bf16.gmra.mxu0 %v668
    %v706 = vpop.f32.mrf.mxu0
    %v707 = vadd.f32 0.0, %v706
    %v708 = vpop.f32.mrf.mxu0
    %v709 = vadd.f32 0.0, %v708
    %710 = vdwg.mxu0
    %v711 = vmul.f32 %v692, 0.17677669
    %v712 = vmul.f32 %v694, 0.17677669
    %v713 = vmul.f32 %v697, 0.17677669
    %v714 = vmul.f32 %v699, 0.17677669
    %v715 = vmul.f32 %v702, 0.17677669
    %v716 = vmul.f32 %v704, 0.17677669
    %v717 = vmul.f32 %v707, 0.17677669
    %v718 = vmul.f32 %v709, 0.17677669
    %vm719 = vcmask 523264
    %v720 = vsel %vm719, %v711, -inf
    %721 = vmax.xlane.f32.xlu0 %v720
    %v722 = vpop.xlane.xlu0 %721
    %v723 = vsel %vm719, %v712, -inf
    %724 = vmax.xlane.f32.xlu0 %v723
    %v725 = vpop.xlane.xlu0 %724
    %v726 = vsel %vm719, %v713, -inf
    %727 = vmax.xlane.f32.xlu0 %v726
    %v728 = vpop.xlane.xlu0 %727
    %v729 = vsel %vm719, %v714, -inf
    %730 = vmax.xlane.f32.xlu0 %v729
    %v731 = vpop.xlane.xlu0 %730
    %v732 = vsel %vm719, %v715, -inf
    %733 = vmax.xlane.f32.xlu0 %v732
    %v734 = vpop.xlane.xlu0 %733
    %v735 = vsel %vm719, %v716, -inf
    %736 = vmax.xlane.f32.xlu0 %v735
    %v737 = vpop.xlane.xlu0 %736
    %v738 = vsel %vm719, %v717, -inf
    %739 = vmax.xlane.f32.xlu0 %v738
    %v740 = vpop.xlane.xlu0 %739
    %v741 = vsel %vm719, %v718, -inf
    %742 = vmax.xlane.f32.xlu0 %v741
    %v743 = vpop.xlane.xlu0 %742
    %v744 = vsub.f32 %v711, %v722
    %v745 = vsub.f32 %v712, %v725
    %v746 = vsub.f32 %v713, %v728
    %v747 = vsub.f32 %v714, %v731
    %v748 = vsub.f32 %v715, %v734
    %v749 = vsub.f32 %v716, %v737
    %v750 = vsub.f32 %v717, %v740
    %v751 = vsub.f32 %v718, %v743
    %v752 = vmul.f32 %v744, 1.442695
    %v753 = vpow.pop %v752
    %v754 = vmul.f32 %v745, 1.442695
    %v755 = vpow.pop %v754
    %v756 = vmul.f32 %v746, 1.442695
    %v757 = vpow.pop %v756
    %v758 = vmul.f32 %v747, 1.442695
    %v759 = vpow.pop %v758
    %v760 = vmul.f32 %v748, 1.442695
    %v761 = vpow.pop %v760
    %v762 = vmul.f32 %v749, 1.442695
    %v763 = vpow.pop %v762
    %v764 = vmul.f32 %v750, 1.442695
    %v765 = vpow.pop %v764
    %v766 = vmul.f32 %v751, 1.442695
    %v767 = vpow.pop %v766
    %v768 = vsel %vm719, %v753, 0.0
    %769 = vadd.xlane.f32.xlu0 %v768
    %v770 = vpop.xlane.xlu0 %769
    %v771 = vsel %vm719, %v755, 0.0
    %772 = vadd.xlane.f32.xlu0 %v771
    %v773 = vpop.xlane.xlu0 %772
    %v774 = vsel %vm719, %v757, 0.0
    %775 = vadd.xlane.f32.xlu0 %v774
    %v776 = vpop.xlane.xlu0 %775
    %v777 = vsel %vm719, %v759, 0.0
    %778 = vadd.xlane.f32.xlu0 %v777
    %v779 = vpop.xlane.xlu0 %778
    %v780 = vsel %vm719, %v761, 0.0
    %781 = vadd.xlane.f32.xlu0 %v780
    %v782 = vpop.xlane.xlu0 %781
    %v783 = vsel %vm719, %v763, 0.0
    %784 = vadd.xlane.f32.xlu0 %v783
    %v785 = vpop.xlane.xlu0 %784
    %v786 = vsel %vm719, %v765, 0.0
    %787 = vadd.xlane.f32.xlu0 %v786
    %v788 = vpop.xlane.xlu0 %787
    %v789 = vsel %vm719, %v767, 0.0
    %790 = vadd.xlane.f32.xlu0 %v789
    %v791 = vpop.xlane.xlu0 %790
    %v792 = vrcp.pop %v770
    %v793 = vrcp.pop %v773
    %v794 = vrcp.pop %v776
    %v795 = vrcp.pop %v779
    %v796 = vrcp.pop %v782
    %v797 = vrcp.pop %v785
    %v798 = vrcp.pop %v788
    %v799 = vrcp.pop %v791
    %v800 = vmul.f32 %v753, %v792
    %v801 = vmul.f32 %v755, %v793
    %v802 = vmul.f32 %v757, %v794
    %v803 = vmul.f32 %v759, %v795
    %v804 = vmul.f32 %v761, %v796
    %v805 = vmul.f32 %v763, %v797
    %v806 = vmul.f32 %v765, %v798
    %v807 = vmul.f32 %v767, %v799
    %v808 = vpack.c.bf16 %v801, %v800
    %v809 = vpack.c.bf16 %v803, %v802
    %v810 = vpack.c.bf16 %v805, %v804
    %v811 = vpack.c.bf16 %v807, %v806
    %v812 = vpack.c.bf16 %v633, %v631
    %v813 = vpack.c.bf16 %v638, %v636
    %v814 = vpack.c.bf16 %v643, %v641
    %v815 = vpack.c.bf16 %v648, %v646
    %v817 = vsel %vm719, %v808, 0
    %v820 = vsel %vm719, %v809, 0
    %v823 = vsel %vm719, %v810, 0
    %v826 = vsel %vm719, %v811, 0
    %828 = vmatpush.bf16.msra.mxu0 0
    %829 = vmatpush.bf16.msra.mxu0 0
    %830 = vmatpush.bf16.msra.mxu0 0
    %831 = vmatpush.bf16.msra.mxu0 0
    %832 = vmatpush.bf16.msra.mxu0 %v815
    %833 = vmatpush.bf16.msra.mxu0 %v814
    %834 = vmatpush.bf16.msra.mxu0 %v813
    %835 = vmatpush.bf16.msra.mxu0 %v812
    %836 = vmatmul.bf16.gmra.mxu0 %v817
    %v837 = vpop.f32.mrf.mxu0
    %v838 = vadd.f32 0.0, %v837
    %v839 = vpop.f32.mrf.mxu0
    %v840 = vadd.f32 0.0, %v839
    %841 = vmatmul.bf16.gmra.mxu0 %v820
    %v842 = vpop.f32.mrf.mxu0
    %v843 = vadd.f32 0.0, %v842
    %v844 = vpop.f32.mrf.mxu0
    %v845 = vadd.f32 0.0, %v844
    %846 = vmatmul.bf16.gmra.mxu0 %v823
    %v847 = vpop.f32.mrf.mxu0
    %v848 = vadd.f32 0.0, %v847
    %v849 = vpop.f32.mrf.mxu0
    %v850 = vadd.f32 0.0, %v849
    %851 = vmatmul.bf16.gmra.mxu0 %v826
    %v852 = vpop.f32.mrf.mxu0
    %v853 = vadd.f32 0.0, %v852
    %v854 = vpop.f32.mrf.mxu0
    %v855 = vadd.f32 0.0, %v854
    %856 = vdwg.mxu0
    %v857 = vstv %s315
    %v858 = vmul.f32 %v857, %v838
    %v859 = vmul.f32 %v857, %v840
    %v860 = vmul.f32 %v857, %v843
    %v861 = vmul.f32 %v857, %v845
    %v862 = vmul.f32 %v857, %v848
    %v863 = vmul.f32 %v857, %v850
    %v864 = vmul.f32 %v857, %v853
    %v865 = vmul.f32 %v857, %v855
    %v866 = vadd.f32 %v858, %v494
    %v867 = vadd.f32 %v859, %v495
    %v868 = vadd.f32 %v860, %v496
    %v869 = vadd.f32 %v861, %v497
    %v870 = vadd.f32 %v862, %v498
    %v871 = vadd.f32 %v863, %v499
    %v872 = vadd.f32 %v864, %v500
    %v873 = vadd.f32 %v865, %v501
    %v874 = vadd.f32 %v866, %v348
    %v875 = vadd.f32 %v867, %v349
    %v876 = vadd.f32 %v868, %v350
    %v877 = vadd.f32 %v869, %v351
    %v878 = vadd.f32 %v870, %v352
    %v879 = vadd.f32 %v871, %v353
    %v880 = vadd.f32 %v872, %v354
    %v881 = vadd.f32 %v873, %v355
    %v882 = vsel %vm364, %v874, 0.0
    %v883 = vsel %vm364, %v875, 0.0
    %v884 = vadd.f32 %v882, %v883
    %v885 = vsel %vm364, %v876, 0.0
    %v886 = vadd.f32 %v884, %v885
    %v887 = vsel %vm364, %v877, 0.0
    %v888 = vadd.f32 %v886, %v887
    %v889 = vsel %vm364, %v878, 0.0
    %v890 = vadd.f32 %v888, %v889
    %v891 = vsel %vm364, %v879, 0.0
    %v892 = vadd.f32 %v890, %v891
    %v893 = vsel %vm364, %v880, 0.0
    %v894 = vadd.f32 %v892, %v893
    %v895 = vsel %vm364, %v881, 0.0
    %v896 = vadd.f32 %v894, %v895
    %v897 = vrot.slane %v896, 4
    %v898 = vadd.f32 %v896, %v897
    %v899 = vrot.slane %v898, 2
    %v900 = vadd.f32 %v898, %v899
    %v901 = vrot.slane %v900, 1
    %v902 = vadd.f32 %v900, %v901
    %v903 = vmul.f32 %v902, %v392
    %v904 = vmul.f32 %v874, %v874
    %v905 = vmul.f32 %v875, %v875
    %v906 = vmul.f32 %v876, %v876
    %v907 = vmul.f32 %v877, %v877
    %v908 = vmul.f32 %v878, %v878
    %v909 = vmul.f32 %v879, %v879
    %v910 = vmul.f32 %v880, %v880
    %v911 = vmul.f32 %v881, %v881
    %v912 = vsel %vm364, %v904, 0.0
    %v913 = vsel %vm364, %v905, 0.0
    %v914 = vadd.f32 %v912, %v913
    %v915 = vsel %vm364, %v906, 0.0
    %v916 = vadd.f32 %v914, %v915
    %v917 = vsel %vm364, %v907, 0.0
    %v918 = vadd.f32 %v916, %v917
    %v919 = vsel %vm364, %v908, 0.0
    %v920 = vadd.f32 %v918, %v919
    %v921 = vsel %vm364, %v909, 0.0
    %v922 = vadd.f32 %v920, %v921
    %v923 = vsel %vm364, %v910, 0.0
    %v924 = vadd.f32 %v922, %v923
    %v925 = vsel %vm364, %v911, 0.0
    %v926 = vadd.f32 %v924, %v925
    %v927 = vrot.slane %v926, 4
    %v928 = vadd.f32 %v926, %v927
    %v929 = vrot.slane %v928, 2
    %v930 = vadd.f32 %v928, %v929
    %v931 = vrot.slane %v930, 1
    %v932 = vadd.f32 %v930, %v931
    %v933 = vmul.f32 %v932, %v392
    %v934 = vsel %vm424, %v903, %v933
    %v935 = vpack.c.bf16 %v934, %v934
    %v937 = vsel %vm364, %v935, 0
    %939 = vmatpush.bf16.msra.mxu0 0
    %940 = vmatpush.bf16.msra.mxu0 0
    %941 = vmatpush.bf16.msra.mxu0 0
    %942 = vmatpush.bf16.msra.mxu0 0
    %943 = vmatpush.bf16.msra.mxu0 0
    %944 = vmatpush.bf16.msra.mxu0 0
    %945 = vmatpush.bf16.msra.mxu0 %v428
    %946 = vmatpush.bf16.msra.mxu0 %v427
    %947 = vmatmul.bf16.gmra.mxu0 %v937
    %v948 = vpop.f32.mrf.mxu0
    %v949 = vadd.f32 0.0, %v948
    %v950 = vpop.f32.mrf.mxu0
    %951 = vdwg.mxu0
    %v952 = vmul.f32 %v949, %v949
    %v954 = vrot.slane %v952, 7
    %v956 = vsub.f32 %v949, %v954
    %v957 = vmax.f32 %v956, 0.0
    %v958 = vperm.slane %v949, 0
    %v959 = vsub.f32 %v874, %v958
    %v960 = vsub.f32 %v875, %v958
    %v961 = vsub.f32 %v876, %v958
    %v962 = vsub.f32 %v877, %v958
    %v963 = vsub.f32 %v878, %v958
    %v964 = vsub.f32 %v879, %v958
    %v965 = vsub.f32 %v880, %v958
    %v966 = vsub.f32 %v881, %v958
    %v967 = vadd.f32 %v957, 1e-05
    %v968 = vrsqrt.pop %v967
    %v969 = vmul.f32 %v968, %v967
    %v970 = vmul.f32 %v969, %v968
    %v971 = vmul.f32 0.5, %v970
    %v972 = vsub.f32 1.5, %v971
    %v973 = vmul.f32 %v968, %v972
    %vm974 = vweird.f32 %v967
    %vm975 = vweird.f32 %v968
    %vm976 = vmor %vm974, %vm975
    %v977 = vsel %vm976, %v968, %v973
    %v978 = vperm.slane %v977, 1
    %v979 = vmul.f32 %v959, %v978
    %v980 = vmul.f32 %v960, %v978
    %v981 = vmul.f32 %v961, %v978
    %v982 = vmul.f32 %v962, %v978
    %v983 = vmul.f32 %v963, %v978
    %v984 = vmul.f32 %v964, %v978
    %v985 = vmul.f32 %v965, %v978
    %v986 = vmul.f32 %v966, %v978
    %v988 = vperm.slane %v269, 0
    %v990 = vmul.f32 %v979, %v988
    %v991 = vmul.f32 %v980, %v988
    %v992 = vmul.f32 %v981, %v988
    %v993 = vmul.f32 %v982, %v988
    %v994 = vmul.f32 %v983, %v988
    %v995 = vmul.f32 %v984, %v988
    %v996 = vmul.f32 %v985, %v988
    %v997 = vmul.f32 %v986, %v988
    %v999 = vperm.slane %v270, 0
    %v1001 = vadd.f32 %v990, %v999
    %v1002 = vadd.f32 %v991, %v999
    %v1003 = vadd.f32 %v992, %v999
    %v1004 = vadd.f32 %v993, %v999
    %v1005 = vadd.f32 %v994, %v999
    %v1006 = vadd.f32 %v995, %v999
    %v1007 = vadd.f32 %v996, %v999
    %v1008 = vadd.f32 %v997, %v999
    %v1009 = vpack.c.bf16 %v1002, %v1001
    %v1010 = vpack.c.bf16 %v1004, %v1003
    %v1011 = vpack.c.bf16 %v1006, %v1005
    %v1012 = vpack.c.bf16 %v1008, %v1007
    %v1017 = vunpack.c.l.b16 %v287
    %v1018 = vunpack.c.l.b16 %v288
    %v1019 = vunpack.c.l.b16 %v289
    %v1020 = vunpack.c.l.b16 %v290
    %v1021 = vpack.c.b16 %v1018, %v1017
    %v1022 = vpack.c.b16 %v1020, %v1019
    %v1026 = vsel %vm364, %v1009, 0
    %v1029 = vsel %vm364, %v1010, 0
    %v1032 = vsel %vm364, %v1011, 0
    %v1035 = vsel %vm364, %v1012, 0
    %1037 = vmatpush.bf16.msra.mxu0 0
    %1038 = vmatpush.bf16.msra.mxu0 0
    %1039 = vmatpush.bf16.msra.mxu0 0
    %1040 = vmatpush.bf16.msra.mxu0 0
    %1041 = vmatpush.bf16.msra.mxu0 0
    %1042 = vmatpush.bf16.msra.mxu0 0
    %1043 = vmatpush.bf16.msra.mxu0 %v1022
    %1044 = vmatpush.bf16.msra.mxu0 %v1021
    %1045 = vmatmul.bf16.gmra.mxu0 %v1026
    %v1046 = vpop.f32.mrf.mxu0
    %v1047 = vadd.f32 0.0, %v1046
    %v1048 = vpop.f32.mrf.mxu0
    %v1049 = vadd.f32 0.0, %v1048
    %1050 = vmatmul.bf16.gmra.mxu0 %v1029
    %v1051 = vpop.f32.mrf.mxu0
    %v1052 = vadd.f32 0.0, %v1051
    %v1053 = vpop.f32.mrf.mxu0
    %v1054 = vadd.f32 0.0, %v1053
    %1055 = vmatmul.bf16.gmra.mxu0 %v1032
    %v1056 = vpop.f32.mrf.mxu0
    %v1057 = vadd.f32 0.0, %v1056
    %v1058 = vpop.f32.mrf.mxu0
    %v1059 = vadd.f32 0.0, %v1058
    %1060 = vmatmul.bf16.gmra.mxu0 %v1035
    %v1061 = vpop.f32.mrf.mxu0
    %v1062 = vadd.f32 0.0, %v1061
    %v1063 = vpop.f32.mrf.mxu0
    %v1064 = vadd.f32 0.0, %v1063
    %1065 = vdwg.mxu0
    %v1066 = vld [vmem:[#allocation3] sm:$0xf]
    %v1069 = vunpack.c.l.b16 %v291
    %v1070 = vunpack.c.l.b16 %v292
    %v1071 = vpack.c.b16 %v1070, %v1069
    %vm1073 = vcmask 130048
    %v1075 = vsel %vm1073, %v1066, 0
    %1077 = vmatpush.bf16.msra.mxu0 0
    %1078 = vmatpush.bf16.msra.mxu0 0
    %1079 = vmatpush.bf16.msra.mxu0 0
    %1080 = vmatpush.bf16.msra.mxu0 0
    %1081 = vmatpush.bf16.msra.mxu0 0
    %1082 = vmatpush.bf16.msra.mxu0 0
    %1083 = vmatpush.bf16.msra.mxu0 0
    %1084 = vmatpush.bf16.msra.mxu0 %v1071
    %1085 = vmatmul.bf16.gmra.mxu0 %v1075
    %v1086 = vpop.f32.mrf.mxu0
    %v1087 = vadd.f32 0.0, %v1086
    %v1088 = vpop.f32.mrf.mxu0
    %1089 = vdwg.mxu0
    %v1092 = vunpack.c.l.b16 %v293
    %v1093 = vunpack.c.l.b16 %v294
    %v1094 = vpack.c.b16 %v1093, %v1092
    %1096 = vmatpush.bf16.msra.mxu0 0
    %1097 = vmatpush.bf16.msra.mxu0 0
    %1098 = vmatpush.bf16.msra.mxu0 0
    %1099 = vmatpush.bf16.msra.mxu0 0
    %1100 = vmatpush.bf16.msra.mxu0 0
    %1101 = vmatpush.bf16.msra.mxu0 0
    %1102 = vmatpush.bf16.msra.mxu0 0
    %1103 = vmatpush.bf16.msra.mxu0 %v1094
    %1104 = vmatmul.bf16.gmra.mxu0 %v1075
    %v1105 = vpop.f32.mrf.mxu0
    %v1106 = vadd.f32 0.0, %v1105
    %v1107 = vpop.f32.mrf.mxu0
    %1108 = vdwg.mxu0
    %v1109 = vmul.f32 %v1087, %v299
    %v1110 = vmul.f32 %v1087, %v300
    %v1111 = vmul.f32 %v1087, %v301
    %v1112 = vmul.f32 %v1087, %v302
    %v1113 = vmul.f32 %v1087, %v303
    %v1114 = vmul.f32 %v1087, %v304
    %v1115 = vmul.f32 %v1087, %v305
    %v1116 = vmul.f32 %v1087, %v306
    %v1117 = vmul.f32 %v1106, %v299
    %v1118 = vmul.f32 %v1106, %v300
    %v1119 = vmul.f32 %v1106, %v301
    %v1120 = vmul.f32 %v1106, %v302
    %v1121 = vmul.f32 %v1106, %v303
    %v1122 = vmul.f32 %v1106, %v304
    %v1123 = vmul.f32 %v1106, %v305
    %v1124 = vmul.f32 %v1106, %v306
    %v1125 = vpack.c.bf16 %v1049, %v1047
    %v1126 = vpack.c.bf16 %v1054, %v1052
    %v1127 = vpack.c.bf16 %v1059, %v1057
    %v1128 = vpack.c.bf16 %v1064, %v1062
    %v1129 = vpack.c.bf16 %v1110, %v1109
    %v1130 = vpack.c.bf16 %v1112, %v1111
    %v1131 = vpack.c.bf16 %v1114, %v1113
    %v1132 = vpack.c.bf16 %v1116, %v1115
    %v1134 = vsel %vm364, %v1125, 0
    %v1137 = vsel %vm364, %v1126, 0
    %v1140 = vsel %vm364, %v1127, 0
    %v1143 = vsel %vm364, %v1128, 0
    %v1146 = vsel %vm364, %v1129, 0
    %v1149 = vsel %vm364, %v1130, 0
    %v1152 = vsel %vm364, %v1131, 0
    %v1155 = vsel %vm364, %v1132, 0
    %1157 = vmatpush.bf16.xpose.msra.mxu0 0
    %1158 = vmatpush.bf16.xpose.msra.mxu0 0
    %1159 = vmatpush.bf16.xpose.msra.mxu0 0
    %1160 = vmatpush.bf16.xpose.msra.mxu0 0
    %1161 = vmatpush.bf16.xpose.msra.mxu0 %v1155
    %1162 = vmatpush.bf16.xpose.msra.mxu0 %v1152
    %1163 = vmatpush.bf16.xpose.msra.mxu0 %v1149
    %1164 = vmatpush.bf16.xpose.msra.mxu0 %v1146
    %1165 = vmatmul.bf16.gmra.mxu0 %v1134
    %v1166 = vpop.f32.mrf.mxu0
    %v1167 = vadd.f32 0.0, %v1166
    %v1168 = vpop.f32.mrf.mxu0
    %v1169 = vadd.f32 0.0, %v1168
    %1170 = vmatmul.bf16.gmra.mxu0 %v1137
    %v1171 = vpop.f32.mrf.mxu0
    %v1172 = vadd.f32 0.0, %v1171
    %v1173 = vpop.f32.mrf.mxu0
    %v1174 = vadd.f32 0.0, %v1173
    %1175 = vmatmul.bf16.gmra.mxu0 %v1140
    %v1176 = vpop.f32.mrf.mxu0
    %v1177 = vadd.f32 0.0, %v1176
    %v1178 = vpop.f32.mrf.mxu0
    %v1179 = vadd.f32 0.0, %v1178
    %1180 = vmatmul.bf16.gmra.mxu0 %v1143
    %v1181 = vpop.f32.mrf.mxu0
    %v1182 = vadd.f32 0.0, %v1181
    %v1183 = vpop.f32.mrf.mxu0
    %v1184 = vadd.f32 0.0, %v1183
    %1185 = vdwg.mxu0
    %v1186 = vmul.f32 %v1167, 0.5
    %v1187 = vmul.f32 %v1169, 0.5
    %v1188 = vmul.f32 %v1172, 0.5
    %v1189 = vmul.f32 %v1174, 0.5
    %v1190 = vmul.f32 %v1177, 0.5
    %v1191 = vmul.f32 %v1179, 0.5
    %v1192 = vmul.f32 %v1182, 0.5
    %v1193 = vmul.f32 %v1184, 0.5
    %v1194 = vsel %vm316, 1, 0
    %v1195 = vperm.slane %v1194, 0
    %vm1196 = vcmp.eq.s32.totalorder %v1195, 1
    %v1197 = vsel %vm1196, %v1186, -1e+30
    %v1198 = vsel %vm1196, %v1187, -1e+30
    %v1199 = vsel %vm1196, %v1188, -1e+30
    %v1200 = vsel %vm1196, %v1189, -1e+30
    %v1201 = vsel %vm1196, %v1190, -1e+30
    %v1202 = vsel %vm1196, %v1191, -1e+30
    %v1203 = vsel %vm1196, %v1192, -1e+30
    %v1204 = vsel %vm1196, %v1193, -1e+30
    %v1205 = vsel %vm719, %v1197, -inf
    %1206 = vmax.xlane.f32.xlu0 %v1205
    %v1207 = vpop.xlane.xlu0 %1206
    %v1208 = vsel %vm719, %v1198, -inf
    %1209 = vmax.xlane.f32.xlu0 %v1208
    %v1210 = vpop.xlane.xlu0 %1209
    %v1211 = vsel %vm719, %v1199, -inf
    %1212 = vmax.xlane.f32.xlu0 %v1211
    %v1213 = vpop.xlane.xlu0 %1212
    %v1214 = vsel %vm719, %v1200, -inf
    %1215 = vmax.xlane.f32.xlu0 %v1214
    %v1216 = vpop.xlane.xlu0 %1215
    %v1217 = vsel %vm719, %v1201, -inf
    %1218 = vmax.xlane.f32.xlu0 %v1217
    %v1219 = vpop.xlane.xlu0 %1218
    %v1220 = vsel %vm719, %v1202, -inf
    %1221 = vmax.xlane.f32.xlu0 %v1220
    %v1222 = vpop.xlane.xlu0 %1221
    %v1223 = vsel %vm719, %v1203, -inf
    %1224 = vmax.xlane.f32.xlu0 %v1223
    %v1225 = vpop.xlane.xlu0 %1224
    %v1226 = vsel %vm719, %v1204, -inf
    %1227 = vmax.xlane.f32.xlu0 %v1226
    %v1228 = vpop.xlane.xlu0 %1227
    %v1229 = vsel %vm1196, %v1207, 0.0
    %v1230 = vsel %vm1196, %v1210, 0.0
    %v1231 = vsel %vm1196, %v1213, 0.0
    %v1232 = vsel %vm1196, %v1216, 0.0
    %v1233 = vsel %vm1196, %v1219, 0.0
    %v1234 = vsel %vm1196, %v1222, 0.0
    %v1235 = vsel %vm1196, %v1225, 0.0
    %v1236 = vsel %vm1196, %v1228, 0.0
    %v1237 = vsel %vm317, 1, 0
    %v1238 = vperm.slane %v1237, 0
    %vm1239 = vcmp.eq.s32.totalorder %v1238, 1
    %v1240 = vsel %vm1239, %v1186, -1e+30
    %v1241 = vsel %vm1239, %v1187, -1e+30
    %v1242 = vsel %vm1239, %v1188, -1e+30
    %v1243 = vsel %vm1239, %v1189, -1e+30
    %v1244 = vsel %vm1239, %v1190, -1e+30
    %v1245 = vsel %vm1239, %v1191, -1e+30
    %v1246 = vsel %vm1239, %v1192, -1e+30
    %v1247 = vsel %vm1239, %v1193, -1e+30
    %v1248 = vsel %vm719, %v1240, -inf
    %1249 = vmax.xlane.f32.xlu0 %v1248
    %v1250 = vpop.xlane.xlu0 %1249
    %v1251 = vsel %vm719, %v1241, -inf
    %1252 = vmax.xlane.f32.xlu0 %v1251
    %v1253 = vpop.xlane.xlu0 %1252
    %v1254 = vsel %vm719, %v1242, -inf
    %1255 = vmax.xlane.f32.xlu0 %v1254
    %v1256 = vpop.xlane.xlu0 %1255
    %v1257 = vsel %vm719, %v1243, -inf
    %1258 = vmax.xlane.f32.xlu0 %v1257
    %v1259 = vpop.xlane.xlu0 %1258
    %v1260 = vsel %vm719, %v1244, -inf
    %1261 = vmax.xlane.f32.xlu0 %v1260
    %v1262 = vpop.xlane.xlu0 %1261
    %v1263 = vsel %vm719, %v1245, -inf
    %1264 = vmax.xlane.f32.xlu0 %v1263
    %v1265 = vpop.xlane.xlu0 %1264
    %v1266 = vsel %vm719, %v1246, -inf
    %1267 = vmax.xlane.f32.xlu0 %v1266
    %v1268 = vpop.xlane.xlu0 %1267
    %v1269 = vsel %vm719, %v1247, -inf
    %1270 = vmax.xlane.f32.xlu0 %v1269
    %v1271 = vpop.xlane.xlu0 %1270
    %v1272 = vsel %vm1239, %v1250, %v1229
    %v1273 = vsel %vm1239, %v1253, %v1230
    %v1274 = vsel %vm1239, %v1256, %v1231
    %v1275 = vsel %vm1239, %v1259, %v1232
    %v1276 = vsel %vm1239, %v1262, %v1233
    %v1277 = vsel %vm1239, %v1265, %v1234
    %v1278 = vsel %vm1239, %v1268, %v1235
    %v1279 = vsel %vm1239, %v1271, %v1236
    %v1280 = vsel %vm318, 1, 0
    %v1281 = vperm.slane %v1280, 0
    %vm1282 = vcmp.eq.s32.totalorder %v1281, 1
    %v1283 = vsel %vm1282, %v1186, -1e+30
    %v1284 = vsel %vm1282, %v1187, -1e+30
    %v1285 = vsel %vm1282, %v1188, -1e+30
    %v1286 = vsel %vm1282, %v1189, -1e+30
    %v1287 = vsel %vm1282, %v1190, -1e+30
    %v1288 = vsel %vm1282, %v1191, -1e+30
    %v1289 = vsel %vm1282, %v1192, -1e+30
    %v1290 = vsel %vm1282, %v1193, -1e+30
    %v1291 = vsel %vm719, %v1283, -inf
    %1292 = vmax.xlane.f32.xlu0 %v1291
    %v1293 = vpop.xlane.xlu0 %1292
    %v1294 = vsel %vm719, %v1284, -inf
    %1295 = vmax.xlane.f32.xlu0 %v1294
    %v1296 = vpop.xlane.xlu0 %1295
    %v1297 = vsel %vm719, %v1285, -inf
    %1298 = vmax.xlane.f32.xlu0 %v1297
    %v1299 = vpop.xlane.xlu0 %1298
    %v1300 = vsel %vm719, %v1286, -inf
    %1301 = vmax.xlane.f32.xlu0 %v1300
    %v1302 = vpop.xlane.xlu0 %1301
    %v1303 = vsel %vm719, %v1287, -inf
    %1304 = vmax.xlane.f32.xlu0 %v1303
    %v1305 = vpop.xlane.xlu0 %1304
    %v1306 = vsel %vm719, %v1288, -inf
    %1307 = vmax.xlane.f32.xlu0 %v1306
    %v1308 = vpop.xlane.xlu0 %1307
    %v1309 = vsel %vm719, %v1289, -inf
    %1310 = vmax.xlane.f32.xlu0 %v1309
    %v1311 = vpop.xlane.xlu0 %1310
    %v1312 = vsel %vm719, %v1290, -inf
    %1313 = vmax.xlane.f32.xlu0 %v1312
    %v1314 = vpop.xlane.xlu0 %1313
    %v1315 = vsel %vm1282, %v1293, %v1272
    %v1316 = vsel %vm1282, %v1296, %v1273
    %v1317 = vsel %vm1282, %v1299, %v1274
    %v1318 = vsel %vm1282, %v1302, %v1275
    %v1319 = vsel %vm1282, %v1305, %v1276
    %v1320 = vsel %vm1282, %v1308, %v1277
    %v1321 = vsel %vm1282, %v1311, %v1278
    %v1322 = vsel %vm1282, %v1314, %v1279
    %v1323 = vsel %vm319, 1, 0
    %v1324 = vperm.slane %v1323, 0
    %vm1325 = vcmp.eq.s32.totalorder %v1324, 1
    %v1326 = vsel %vm1325, %v1186, -1e+30
    %v1327 = vsel %vm1325, %v1187, -1e+30
    %v1328 = vsel %vm1325, %v1188, -1e+30
    %v1329 = vsel %vm1325, %v1189, -1e+30
    %v1330 = vsel %vm1325, %v1190, -1e+30
    %v1331 = vsel %vm1325, %v1191, -1e+30
    %v1332 = vsel %vm1325, %v1192, -1e+30
    %v1333 = vsel %vm1325, %v1193, -1e+30
    %v1334 = vsel %vm719, %v1326, -inf
    %1335 = vmax.xlane.f32.xlu0 %v1334
    %v1336 = vpop.xlane.xlu0 %1335
    %v1337 = vsel %vm719, %v1327, -inf
    %1338 = vmax.xlane.f32.xlu0 %v1337
    %v1339 = vpop.xlane.xlu0 %1338
    %v1340 = vsel %vm719, %v1328, -inf
    %1341 = vmax.xlane.f32.xlu0 %v1340
    %v1342 = vpop.xlane.xlu0 %1341
    %v1343 = vsel %vm719, %v1329, -inf
    %1344 = vmax.xlane.f32.xlu0 %v1343
    %v1345 = vpop.xlane.xlu0 %1344
    %v1346 = vsel %vm719, %v1330, -inf
    %1347 = vmax.xlane.f32.xlu0 %v1346
    %v1348 = vpop.xlane.xlu0 %1347
    %v1349 = vsel %vm719, %v1331, -inf
    %1350 = vmax.xlane.f32.xlu0 %v1349
    %v1351 = vpop.xlane.xlu0 %1350
    %v1352 = vsel %vm719, %v1332, -inf
    %1353 = vmax.xlane.f32.xlu0 %v1352
    %v1354 = vpop.xlane.xlu0 %1353
    %v1355 = vsel %vm719, %v1333, -inf
    %1356 = vmax.xlane.f32.xlu0 %v1355
    %v1357 = vpop.xlane.xlu0 %1356
    %v1358 = vsel %vm1325, %v1336, %v1315
    %v1359 = vsel %vm1325, %v1339, %v1316
    %v1360 = vsel %vm1325, %v1342, %v1317
    %v1361 = vsel %vm1325, %v1345, %v1318
    %v1362 = vsel %vm1325, %v1348, %v1319
    %v1363 = vsel %vm1325, %v1351, %v1320
    %v1364 = vsel %vm1325, %v1354, %v1321
    %v1365 = vsel %vm1325, %v1357, %v1322
    %v1366 = vsel %vm320, 1, 0
    %v1367 = vperm.slane %v1366, 0
    %vm1368 = vcmp.eq.s32.totalorder %v1367, 1
    %v1369 = vsel %vm1368, %v1186, -1e+30
    %v1370 = vsel %vm1368, %v1187, -1e+30
    %v1371 = vsel %vm1368, %v1188, -1e+30
    %v1372 = vsel %vm1368, %v1189, -1e+30
    %v1373 = vsel %vm1368, %v1190, -1e+30
    %v1374 = vsel %vm1368, %v1191, -1e+30
    %v1375 = vsel %vm1368, %v1192, -1e+30
    %v1376 = vsel %vm1368, %v1193, -1e+30
    %v1377 = vsel %vm719, %v1369, -inf
    %1378 = vmax.xlane.f32.xlu0 %v1377
    %v1379 = vpop.xlane.xlu0 %1378
    %v1380 = vsel %vm719, %v1370, -inf
    %1381 = vmax.xlane.f32.xlu0 %v1380
    %v1382 = vpop.xlane.xlu0 %1381
    %v1383 = vsel %vm719, %v1371, -inf
    %1384 = vmax.xlane.f32.xlu0 %v1383
    %v1385 = vpop.xlane.xlu0 %1384
    %v1386 = vsel %vm719, %v1372, -inf
    %1387 = vmax.xlane.f32.xlu0 %v1386
    %v1388 = vpop.xlane.xlu0 %1387
    %v1389 = vsel %vm719, %v1373, -inf
    %1390 = vmax.xlane.f32.xlu0 %v1389
    %v1391 = vpop.xlane.xlu0 %1390
    %v1392 = vsel %vm719, %v1374, -inf
    %1393 = vmax.xlane.f32.xlu0 %v1392
    %v1394 = vpop.xlane.xlu0 %1393
    %v1395 = vsel %vm719, %v1375, -inf
    %1396 = vmax.xlane.f32.xlu0 %v1395
    %v1397 = vpop.xlane.xlu0 %1396
    %v1398 = vsel %vm719, %v1376, -inf
    %1399 = vmax.xlane.f32.xlu0 %v1398
    %v1400 = vpop.xlane.xlu0 %1399
    %v1401 = vsel %vm1368, %v1379, %v1358
    %v1402 = vsel %vm1368, %v1382, %v1359
    %v1403 = vsel %vm1368, %v1385, %v1360
    %v1404 = vsel %vm1368, %v1388, %v1361
    %v1405 = vsel %vm1368, %v1391, %v1362
    %v1406 = vsel %vm1368, %v1394, %v1363
    %v1407 = vsel %vm1368, %v1397, %v1364
    %v1408 = vsel %vm1368, %v1400, %v1365
    %v1409 = vsel %vm321, 1, 0
    %v1410 = vperm.slane %v1409, 0
    %vm1411 = vcmp.eq.s32.totalorder %v1410, 1
    %v1412 = vsel %vm1411, %v1186, -1e+30
    %v1413 = vsel %vm1411, %v1187, -1e+30
    %v1414 = vsel %vm1411, %v1188, -1e+30
    %v1415 = vsel %vm1411, %v1189, -1e+30
    %v1416 = vsel %vm1411, %v1190, -1e+30
    %v1417 = vsel %vm1411, %v1191, -1e+30
    %v1418 = vsel %vm1411, %v1192, -1e+30
    %v1419 = vsel %vm1411, %v1193, -1e+30
    %v1420 = vsel %vm719, %v1412, -inf
    %1421 = vmax.xlane.f32.xlu0 %v1420
    %v1422 = vpop.xlane.xlu0 %1421
    %v1423 = vsel %vm719, %v1413, -inf
    %1424 = vmax.xlane.f32.xlu0 %v1423
    %v1425 = vpop.xlane.xlu0 %1424
    %v1426 = vsel %vm719, %v1414, -inf
    %1427 = vmax.xlane.f32.xlu0 %v1426
    %v1428 = vpop.xlane.xlu0 %1427
    %v1429 = vsel %vm719, %v1415, -inf
    %1430 = vmax.xlane.f32.xlu0 %v1429
    %v1431 = vpop.xlane.xlu0 %1430
    %v1432 = vsel %vm719, %v1416, -inf
    %1433 = vmax.xlane.f32.xlu0 %v1432
    %v1434 = vpop.xlane.xlu0 %1433
    %v1435 = vsel %vm719, %v1417, -inf
    %1436 = vmax.xlane.f32.xlu0 %v1435
    %v1437 = vpop.xlane.xlu0 %1436
    %v1438 = vsel %vm719, %v1418, -inf
    %1439 = vmax.xlane.f32.xlu0 %v1438
    %v1440 = vpop.xlane.xlu0 %1439
    %v1441 = vsel %vm719, %v1419, -inf
    %1442 = vmax.xlane.f32.xlu0 %v1441
    %v1443 = vpop.xlane.xlu0 %1442
    %v1444 = vsel %vm1411, %v1422, %v1401
    %v1445 = vsel %vm1411, %v1425, %v1402
    %v1446 = vsel %vm1411, %v1428, %v1403
    %v1447 = vsel %vm1411, %v1431, %v1404
    %v1448 = vsel %vm1411, %v1434, %v1405
    %v1449 = vsel %vm1411, %v1437, %v1406
    %v1450 = vsel %vm1411, %v1440, %v1407
    %v1451 = vsel %vm1411, %v1443, %v1408
    %v1452 = vsel %vm322, 1, 0
    %v1453 = vperm.slane %v1452, 0
    %vm1454 = vcmp.eq.s32.totalorder %v1453, 1
    %v1455 = vsel %vm1454, %v1186, -1e+30
    %v1456 = vsel %vm1454, %v1187, -1e+30
    %v1457 = vsel %vm1454, %v1188, -1e+30
    %v1458 = vsel %vm1454, %v1189, -1e+30
    %v1459 = vsel %vm1454, %v1190, -1e+30
    %v1460 = vsel %vm1454, %v1191, -1e+30
    %v1461 = vsel %vm1454, %v1192, -1e+30
    %v1462 = vsel %vm1454, %v1193, -1e+30
    %v1463 = vsel %vm719, %v1455, -inf
    %1464 = vmax.xlane.f32.xlu0 %v1463
    %v1465 = vpop.xlane.xlu0 %1464
    %v1466 = vsel %vm719, %v1456, -inf
    %1467 = vmax.xlane.f32.xlu0 %v1466
    %v1468 = vpop.xlane.xlu0 %1467
    %v1469 = vsel %vm719, %v1457, -inf
    %1470 = vmax.xlane.f32.xlu0 %v1469
    %v1471 = vpop.xlane.xlu0 %1470
    %v1472 = vsel %vm719, %v1458, -inf
    %1473 = vmax.xlane.f32.xlu0 %v1472
    %v1474 = vpop.xlane.xlu0 %1473
    %v1475 = vsel %vm719, %v1459, -inf
    %1476 = vmax.xlane.f32.xlu0 %v1475
    %v1477 = vpop.xlane.xlu0 %1476
    %v1478 = vsel %vm719, %v1460, -inf
    %1479 = vmax.xlane.f32.xlu0 %v1478
    %v1480 = vpop.xlane.xlu0 %1479
    %v1481 = vsel %vm719, %v1461, -inf
    %1482 = vmax.xlane.f32.xlu0 %v1481
    %v1483 = vpop.xlane.xlu0 %1482
    %v1484 = vsel %vm719, %v1462, -inf
    %1485 = vmax.xlane.f32.xlu0 %v1484
    %v1486 = vpop.xlane.xlu0 %1485
    %v1487 = vsel %vm1454, %v1465, %v1444
    %v1488 = vsel %vm1454, %v1468, %v1445
    %v1489 = vsel %vm1454, %v1471, %v1446
    %v1490 = vsel %vm1454, %v1474, %v1447
    %v1491 = vsel %vm1454, %v1477, %v1448
    %v1492 = vsel %vm1454, %v1480, %v1449
    %v1493 = vsel %vm1454, %v1483, %v1450
    %v1494 = vsel %vm1454, %v1486, %v1451
    %v1495 = vsel %vm323, 1, 0
    %v1496 = vperm.slane %v1495, 0
    %vm1497 = vcmp.eq.s32.totalorder %v1496, 1
    %v1498 = vsel %vm1497, %v1186, -1e+30
    %v1499 = vsel %vm1497, %v1187, -1e+30
    %v1500 = vsel %vm1497, %v1188, -1e+30
    %v1501 = vsel %vm1497, %v1189, -1e+30
    %v1502 = vsel %vm1497, %v1190, -1e+30
    %v1503 = vsel %vm1497, %v1191, -1e+30
    %v1504 = vsel %vm1497, %v1192, -1e+30
    %v1505 = vsel %vm1497, %v1193, -1e+30
    %v1506 = vsel %vm719, %v1498, -inf
    %1507 = vmax.xlane.f32.xlu0 %v1506
    %v1508 = vpop.xlane.xlu0 %1507
    %v1509 = vsel %vm719, %v1499, -inf
    %1510 = vmax.xlane.f32.xlu0 %v1509
    %v1511 = vpop.xlane.xlu0 %1510
    %v1512 = vsel %vm719, %v1500, -inf
    %1513 = vmax.xlane.f32.xlu0 %v1512
    %v1514 = vpop.xlane.xlu0 %1513
    %v1515 = vsel %vm719, %v1501, -inf
    %1516 = vmax.xlane.f32.xlu0 %v1515
    %v1517 = vpop.xlane.xlu0 %1516
    %v1518 = vsel %vm719, %v1502, -inf
    %1519 = vmax.xlane.f32.xlu0 %v1518
    %v1520 = vpop.xlane.xlu0 %1519
    %v1521 = vsel %vm719, %v1503, -inf
    %1522 = vmax.xlane.f32.xlu0 %v1521
    %v1523 = vpop.xlane.xlu0 %1522
    %v1524 = vsel %vm719, %v1504, -inf
    %1525 = vmax.xlane.f32.xlu0 %v1524
    %v1526 = vpop.xlane.xlu0 %1525
    %v1527 = vsel %vm719, %v1505, -inf
    %1528 = vmax.xlane.f32.xlu0 %v1527
    %v1529 = vpop.xlane.xlu0 %1528
    %v1530 = vsel %vm1497, %v1508, %v1487
    %v1531 = vsel %vm1497, %v1511, %v1488
    %v1532 = vsel %vm1497, %v1514, %v1489
    %v1533 = vsel %vm1497, %v1517, %v1490
    %v1534 = vsel %vm1497, %v1520, %v1491
    %v1535 = vsel %vm1497, %v1523, %v1492
    %v1536 = vsel %vm1497, %v1526, %v1493
    %v1537 = vsel %vm1497, %v1529, %v1494
    %v1538 = vsub.f32 %v1186, %v1530
    %v1539 = vsub.f32 %v1187, %v1531
    %v1540 = vsub.f32 %v1188, %v1532
    %v1541 = vsub.f32 %v1189, %v1533
    %v1542 = vsub.f32 %v1190, %v1534
    %v1543 = vsub.f32 %v1191, %v1535
    %v1544 = vsub.f32 %v1192, %v1536
    %v1545 = vsub.f32 %v1193, %v1537
    %v1546 = vmul.f32 %v1538, 1.442695
    %v1547 = vpow.pop %v1546
    %v1548 = vmul.f32 %v1539, 1.442695
    %v1549 = vpow.pop %v1548
    %v1550 = vmul.f32 %v1540, 1.442695
    %v1551 = vpow.pop %v1550
    %v1552 = vmul.f32 %v1541, 1.442695
    %v1553 = vpow.pop %v1552
    %v1554 = vmul.f32 %v1542, 1.442695
    %v1555 = vpow.pop %v1554
    %v1556 = vmul.f32 %v1543, 1.442695
    %v1557 = vpow.pop %v1556
    %v1558 = vmul.f32 %v1544, 1.442695
    %v1559 = vpow.pop %v1558
    %v1560 = vmul.f32 %v1545, 1.442695
    %v1561 = vpow.pop %v1560
    %v1562 = vpack.c.bf16 %v1549, %v1547
    %v1563 = vpack.c.bf16 %v1553, %v1551
    %v1564 = vpack.c.bf16 %v1557, %v1555
    %v1565 = vpack.c.bf16 %v1561, %v1559
    %v1566 = vpack.c.bf16 %v308, %v307
    %v1567 = vpack.c.bf16 %v310, %v309
    %v1568 = vpack.c.bf16 %v312, %v311
    %v1569 = vpack.c.bf16 %v314, %v313
    %v1571 = vsel %vm719, %v1562, 0
    %v1574 = vsel %vm719, %v1563, 0
    %v1577 = vsel %vm719, %v1564, 0
    %v1580 = vsel %vm719, %v1565, 0
    %1582 = vmatpush.bf16.msra.mxu0 0
    %1583 = vmatpush.bf16.msra.mxu0 0
    %1584 = vmatpush.bf16.msra.mxu0 0
    %1585 = vmatpush.bf16.msra.mxu0 0
    %1586 = vmatpush.bf16.msra.mxu0 %v1569
    %1587 = vmatpush.bf16.msra.mxu0 %v1568
    %1588 = vmatpush.bf16.msra.mxu0 %v1567
    %1589 = vmatpush.bf16.msra.mxu0 %v1566
    %1590 = vmatmul.bf16.gmra.mxu0 %v1571
    %v1591 = vpop.f32.mrf.mxu0
    %v1592 = vadd.f32 0.0, %v1591
    %v1593 = vpop.f32.mrf.mxu0
    %v1594 = vadd.f32 0.0, %v1593
    %1595 = vmatmul.bf16.gmra.mxu0 %v1574
    %v1596 = vpop.f32.mrf.mxu0
    %v1597 = vadd.f32 0.0, %v1596
    %v1598 = vpop.f32.mrf.mxu0
    %v1599 = vadd.f32 0.0, %v1598
    %1600 = vmatmul.bf16.gmra.mxu0 %v1577
    %v1601 = vpop.f32.mrf.mxu0
    %v1602 = vadd.f32 0.0, %v1601
    %v1603 = vpop.f32.mrf.mxu0
    %v1604 = vadd.f32 0.0, %v1603
    %1605 = vmatmul.bf16.gmra.mxu0 %v1580
    %v1606 = vpop.f32.mrf.mxu0
    %v1607 = vadd.f32 0.0, %v1606
    %v1608 = vpop.f32.mrf.mxu0
    %v1609 = vadd.f32 0.0, %v1608
    %1610 = vdwg.mxu0
    %v1611 = vrcp.pop %v1592
    %v1612 = vrcp.pop %v1594
    %v1613 = vrcp.pop %v1597
    %v1614 = vrcp.pop %v1599
    %v1615 = vrcp.pop %v1602
    %v1616 = vrcp.pop %v1604
    %v1617 = vrcp.pop %v1607
    %v1618 = vrcp.pop %v1609
    %v1619 = vmul.f32 %v1547, %v1611
    %v1620 = vmul.f32 %v1549, %v1612
    %v1621 = vmul.f32 %v1551, %v1613
    %v1622 = vmul.f32 %v1553, %v1614
    %v1623 = vmul.f32 %v1555, %v1615
    %v1624 = vmul.f32 %v1557, %v1616
    %v1625 = vmul.f32 %v1559, %v1617
    %v1626 = vmul.f32 %v1561, %v1618
    %v1627 = vpack.c.bf16 %v1620, %v1619
    %v1628 = vpack.c.bf16 %v1622, %v1621
    %v1629 = vpack.c.bf16 %v1624, %v1623
    %v1630 = vpack.c.bf16 %v1626, %v1625
    %v1631 = vpack.c.bf16 %v1118, %v1117
    %v1632 = vpack.c.bf16 %v1120, %v1119
    %v1633 = vpack.c.bf16 %v1122, %v1121
    %v1634 = vpack.c.bf16 %v1124, %v1123
    %v1636 = vsel %vm719, %v1627, 0
    %v1639 = vsel %vm719, %v1628, 0
    %v1642 = vsel %vm719, %v1629, 0
    %v1645 = vsel %vm719, %v1630, 0
    %1647 = vmatpush.bf16.msra.mxu0 0
    %1648 = vmatpush.bf16.msra.mxu0 0
    %1649 = vmatpush.bf16.msra.mxu0 0
    %1650 = vmatpush.bf16.msra.mxu0 0
    %1651 = vmatpush.bf16.msra.mxu0 %v1634
    %1652 = vmatpush.bf16.msra.mxu0 %v1633
    %1653 = vmatpush.bf16.msra.mxu0 %v1632
    %1654 = vmatpush.bf16.msra.mxu0 %v1631
    %1655 = vmatmul.bf16.gmra.mxu0 %v1636
    %v1656 = vpop.f32.mrf.mxu0
    %v1657 = vadd.f32 0.0, %v1656
    %v1658 = vpop.f32.mrf.mxu0
    %v1659 = vadd.f32 0.0, %v1658
    %1660 = vmatmul.bf16.gmra.mxu0 %v1639
    %v1661 = vpop.f32.mrf.mxu0
    %v1662 = vadd.f32 0.0, %v1661
    %v1663 = vpop.f32.mrf.mxu0
    %v1664 = vadd.f32 0.0, %v1663
    %1665 = vmatmul.bf16.gmra.mxu0 %v1642
    %v1666 = vpop.f32.mrf.mxu0
    %v1667 = vadd.f32 0.0, %v1666
    %v1668 = vpop.f32.mrf.mxu0
    %v1669 = vadd.f32 0.0, %v1668
    %1670 = vmatmul.bf16.gmra.mxu0 %v1645
    %v1671 = vpop.f32.mrf.mxu0
    %v1672 = vadd.f32 0.0, %v1671
    %v1673 = vpop.f32.mrf.mxu0
    %v1674 = vadd.f32 0.0, %v1673
    %1675 = vdwg.mxu0
    %v1676 = vpack.c.bf16 %v1659, %v1657
    %v1677 = vpack.c.bf16 %v1664, %v1662
    %v1678 = vpack.c.bf16 %v1669, %v1667
    %v1679 = vpack.c.bf16 %v1674, %v1672
    %v1681 = vperm.slane %v274, 0
    %v1687 = vunpack.c.l.b16 %v295
    %v1688 = vunpack.c.l.b16 %v296
    %v1689 = vunpack.c.l.b16 %v297
    %v1690 = vunpack.c.l.b16 %v298
    %v1691 = vpack.c.b16 %v1688, %v1687
    %v1692 = vpack.c.b16 %v1690, %v1689
    %v1696 = vsel %vm364, %v1676, 0
    %v1699 = vsel %vm364, %v1677, 0
    %v1702 = vsel %vm364, %v1678, 0
    %v1705 = vsel %vm364, %v1679, 0
    %1707 = vmatpush.bf16.msra.mxu0 0
    %1708 = vmatpush.bf16.msra.mxu0 0
    %1709 = vmatpush.bf16.msra.mxu0 0
    %1710 = vmatpush.bf16.msra.mxu0 0
    %1711 = vmatpush.bf16.msra.mxu0 0
    %1712 = vmatpush.bf16.msra.mxu0 0
    %1713 = vmatpush.bf16.msra.mxu0 %v1692
    %1714 = vmatpush.bf16.msra.mxu0 %v1691
    %1715 = vmatmul.bf16.gmra.mxu0 %v1696
    %v1716 = vpop.f32.mrf.mxu0
    %v1717 = vadd.f32 %v1681, %v1716
    %v1718 = vpop.f32.mrf.mxu0
    %v1719 = vadd.f32 %v1681, %v1718
    %1720 = vmatmul.bf16.gmra.mxu0 %v1699
    %v1721 = vpop.f32.mrf.mxu0
    %v1722 = vadd.f32 %v1681, %v1721
    %v1723 = vpop.f32.mrf.mxu0
    %v1724 = vadd.f32 %v1681, %v1723
    %1725 = vmatmul.bf16.gmra.mxu0 %v1702
    %v1726 = vpop.f32.mrf.mxu0
    %v1727 = vadd.f32 %v1681, %v1726
    %v1728 = vpop.f32.mrf.mxu0
    %v1729 = vadd.f32 %v1681, %v1728
    %1730 = vmatmul.bf16.gmra.mxu0 %v1705
    %v1731 = vpop.f32.mrf.mxu0
    %v1732 = vadd.f32 %v1681, %v1731
    %v1733 = vpop.f32.mrf.mxu0
    %v1734 = vadd.f32 %v1681, %v1733
    %1735 = vdwg.mxu0
    %v1736 = vadd.f32 %v1717, %v874
    %v1737 = vadd.f32 %v1719, %v875
    %v1738 = vadd.f32 %v1722, %v876
    %v1739 = vadd.f32 %v1724, %v877
    %v1740 = vadd.f32 %v1727, %v878
    %v1741 = vadd.f32 %v1729, %v879
    %v1742 = vadd.f32 %v1732, %v880
    %v1743 = vadd.f32 %v1734, %v881
    %1744 = vxpose.xlu0.b32.start [1/16] %v1736, 128
    %1745 = vxpose.xlu0.b32.cont [2/16] %v1737, 128
    %1746 = vxpose.xlu0.b32.cont [3/16] %v1738, 128
    %1747 = vxpose.xlu0.b32.cont [4/16] %v1739, 128
    %1748 = vxpose.xlu0.b32.cont [5/16] %v1740, 128
    %1749 = vxpose.xlu0.b32.cont [6/16] %v1741, 128
    %1750 = vxpose.xlu0.b32.cont [7/16] %v1742, 128
    %1751 = vxpose.xlu0.b32.cont [8/16] %v1743, 128
    %1752 = vxpose.xlu0.b32.cont [9/16] 0.0, 128
    %1753 = vxpose.xlu0.b32.cont [10/16] 0.0, 128
    %1754 = vxpose.xlu0.b32.cont [11/16] 0.0, 128
    %1755 = vxpose.xlu0.b32.cont [12/16] 0.0, 128
    %1756 = vxpose.xlu0.b32.cont [13/16] 0.0, 128
    %1757 = vxpose.xlu0.b32.cont [14/16] 0.0, 128
    %1758 = vxpose.xlu0.b32.cont [15/16] 0.0, 128
    %1759 = vxpose.xlu0.b32.end [16/16] 0.0, 128
    %v1760 = vpop.trf.xlu0
    %v1761 = vpop.trf.xlu0
    %v1762 = vpop.trf.xlu0
    %v1763 = vpop.trf.xlu0
    %v1764 = vpop.trf.xlu0
    %v1765 = vpop.trf.xlu0
    %v1766 = vpop.trf.xlu0
    %v1767 = vpop.trf.xlu0
    %v1768 = vpop.trf.xlu0
    %v1769 = vpop.trf.xlu0
    %v1770 = vpop.trf.xlu0
    %v1771 = vpop.trf.xlu0
    %v1772 = vpop.trf.xlu0
    %v1773 = vpop.trf.xlu0
    %v1774 = vpop.trf.xlu0
    %v1775 = vpop.trf.xlu0
    %1776 = vst.msk [vmem:[#allocation24] sm:$0xff] %vm719, %v1760
    %1777 = vst.msk [vmem:[#allocation24 + $0x8] sm:$0xff] %vm719, %v1761
    %1778 = vst.msk [vmem:[#allocation24 + $0x10] sm:$0xff] %vm719, %v1762
    %1779 = vst.msk [vmem:[#allocation24 + $0x18] sm:$0xff] %vm719, %v1763
    %s1780 = scalar_lea.vmem %s0, 16
    %v1781 = vld [vmem:[%s1780] sm:$0xf]
    %v1782 = vld [vmem:[%s1780 + $0x4] sm:$0xf]
    %v1783 = vld [vmem:[%s1780 + $0x8] sm:$0xf]
    %v1784 = vld [vmem:[%s1780 + $0xc] sm:$0xf]
    %v1785 = vunpack.c.l.bf16 %v1781
    %v1786 = vunpack.c.l.bf16 %v1782
    %v1787 = vunpack.c.l.bf16 %v1783
    %v1788 = vunpack.c.l.bf16 %v1784
    %1789 = vxpose.xlu0.b32.start [1/16] %v1785, 128
    %1790 = vxpose.xlu0.b32.cont [2/16] %v1786, 128
    %1791 = vxpose.xlu0.b32.cont [3/16] %v1787, 128
    %1792 = vxpose.xlu0.b32.cont [4/16] %v1788, 128
    %1793 = vxpose.xlu0.b32.cont [5/16] 0.0, 128
    %1794 = vxpose.xlu0.b32.cont [6/16] 0.0, 128
    %1795 = vxpose.xlu0.b32.cont [7/16] 0.0, 128
    %1796 = vxpose.xlu0.b32.cont [8/16] 0.0, 128
    %1797 = vxpose.xlu0.b32.cont [9/16] 0.0, 128
    %1798 = vxpose.xlu0.b32.cont [10/16] 0.0, 128
    %1799 = vxpose.xlu0.b32.cont [11/16] 0.0, 128
    %1800 = vxpose.xlu0.b32.cont [12/16] 0.0, 128
    %1801 = vxpose.xlu0.b32.cont [13/16] 0.0, 128
    %1802 = vxpose.xlu0.b32.cont [14/16] 0.0, 128
    %1803 = vxpose.xlu0.b32.cont [15/16] 0.0, 128
    %1804 = vxpose.xlu0.b32.end [16/16] 0.0, 128
    %v1805 = vpop.trf.xlu0
    %v1806 = vpop.trf.xlu0
    %v1807 = vpop.trf.xlu0
    %v1808 = vpop.trf.xlu0
    %v1809 = vpop.trf.xlu0
    %v1810 = vpop.trf.xlu0
    %v1811 = vpop.trf.xlu0
    %v1812 = vpop.trf.xlu0
    %v1813 = vpop.trf.xlu0
    %v1814 = vpop.trf.xlu0
    %v1815 = vpop.trf.xlu0
    %v1816 = vpop.trf.xlu0
    %v1817 = vpop.trf.xlu0
    %v1818 = vpop.trf.xlu0
    %v1819 = vpop.trf.xlu0
    %v1820 = vpop.trf.xlu0
    %v1821 = vsel %vm364, %v1805, 0.0
    %v1822 = vsel %vm364, %v1806, 0.0
    %v1823 = vadd.f32 %v1821, %v1822
    %v1824 = vsel %vm364, %v1807, 0.0
    %v1825 = vadd.f32 %v1823, %v1824
    %v1826 = vsel %vm364, %v1808, 0.0
    %v1827 = vadd.f32 %v1825, %v1826
    %v1828 = vsel %vm364, %v1809, 0.0
    %v1829 = vadd.f32 %v1827, %v1828
    %v1830 = vsel %vm364, %v1810, 0.0
    %v1831 = vadd.f32 %v1829, %v1830
    %v1832 = vsel %vm364, %v1811, 0.0
    %v1833 = vadd.f32 %v1831, %v1832
    %v1834 = vsel %vm364, %v1812, 0.0
    %v1835 = vadd.f32 %v1833, %v1834
    %v1836 = vrot.slane %v1835, 4
    %v1837 = vadd.f32 %v1835, %v1836
    %v1838 = vrot.slane %v1837, 2
    %v1839 = vadd.f32 %v1837, %v1838
    %v1840 = vrot.slane %v1839, 1
    %v1841 = vadd.f32 %v1839, %v1840
    %v1842 = vmul.f32 %v1841, %v392
    %v1843 = vmul.f32 %v1805, %v1805
    %v1844 = vmul.f32 %v1806, %v1806
    %v1845 = vmul.f32 %v1807, %v1807
    %v1846 = vmul.f32 %v1808, %v1808
    %v1847 = vmul.f32 %v1809, %v1809
    %v1848 = vmul.f32 %v1810, %v1810
    %v1849 = vmul.f32 %v1811, %v1811
    %v1850 = vmul.f32 %v1812, %v1812
    %v1851 = vsel %vm364, %v1843, 0.0
    %v1852 = vsel %vm364, %v1844, 0.0
    %v1853 = vadd.f32 %v1851, %v1852
    %v1854 = vsel %vm364, %v1845, 0.0
    %v1855 = vadd.f32 %v1853, %v1854
    %v1856 = vsel %vm364, %v1846, 0.0
    %v1857 = vadd.f32 %v1855, %v1856
    %v1858 = vsel %vm364, %v1847, 0.0
    %v1859 = vadd.f32 %v1857, %v1858
    %v1860 = vsel %vm364, %v1848, 0.0
    %v1861 = vadd.f32 %v1859, %v1860
    %v1862 = vsel %vm364, %v1849, 0.0
    %v1863 = vadd.f32 %v1861, %v1862
    %v1864 = vsel %vm364, %v1850, 0.0
    %v1865 = vadd.f32 %v1863, %v1864
    %v1866 = vrot.slane %v1865, 4
    %v1867 = vadd.f32 %v1865, %v1866
    %v1868 = vrot.slane %v1867, 2
    %v1869 = vadd.f32 %v1867, %v1868
    %v1870 = vrot.slane %v1869, 1
    %v1871 = vadd.f32 %v1869, %v1870
    %v1872 = vmul.f32 %v1871, %v392
    %v1873 = vsel %vm424, %v1842, %v1872
    %v1874 = vpack.c.bf16 %v1873, %v1873
    %v1876 = vsel %vm364, %v1874, 0
    %1878 = vmatpush.bf16.msra.mxu0 0
    %1879 = vmatpush.bf16.msra.mxu0 0
    %1880 = vmatpush.bf16.msra.mxu0 0
    %1881 = vmatpush.bf16.msra.mxu0 0
    %1882 = vmatpush.bf16.msra.mxu0 0
    %1883 = vmatpush.bf16.msra.mxu0 0
    %1884 = vmatpush.bf16.msra.mxu0 %v428
    %1885 = vmatpush.bf16.msra.mxu0 %v427
    %1886 = vmatmul.bf16.gmra.mxu0 %v1876
    %v1887 = vpop.f32.mrf.mxu0
    %v1888 = vadd.f32 0.0, %v1887
    %v1889 = vpop.f32.mrf.mxu0
    %1890 = vdwg.mxu0
    %v1891 = vmul.f32 %v1888, %v1888
    %v1893 = vrot.slane %v1891, 7
    %v1895 = vsub.f32 %v1888, %v1893
    %v1896 = vmax.f32 %v1895, 0.0
    %v1897 = vperm.slane %v1888, 0
    %v1898 = vsub.f32 %v1805, %v1897
    %v1899 = vsub.f32 %v1806, %v1897
    %v1900 = vsub.f32 %v1807, %v1897
    %v1901 = vsub.f32 %v1808, %v1897
    %v1902 = vsub.f32 %v1809, %v1897
    %v1903 = vsub.f32 %v1810, %v1897
    %v1904 = vsub.f32 %v1811, %v1897
    %v1905 = vsub.f32 %v1812, %v1897
    %v1906 = vadd.f32 %v1896, 1e-05
    %v1907 = vrsqrt.pop %v1906
    %v1908 = vmul.f32 %v1907, %v1906
    %v1909 = vmul.f32 %v1908, %v1907
    %v1910 = vmul.f32 0.5, %v1909
    %v1911 = vsub.f32 1.5, %v1910
    %v1912 = vmul.f32 %v1907, %v1911
    %vm1913 = vweird.f32 %v1906
    %vm1914 = vweird.f32 %v1907
    %vm1915 = vmor %vm1913, %vm1914
    %v1916 = vsel %vm1915, %v1907, %v1912
    %v1917 = vperm.slane %v1916, 1
    %v1918 = vmul.f32 %v1898, %v1917
    %v1919 = vmul.f32 %v1899, %v1917
    %v1920 = vmul.f32 %v1900, %v1917
    %v1921 = vmul.f32 %v1901, %v1917
    %v1922 = vmul.f32 %v1902, %v1917
    %v1923 = vmul.f32 %v1903, %v1917
    %v1924 = vmul.f32 %v1904, %v1917
    %v1925 = vmul.f32 %v1905, %v1917
    %v1926 = vmul.f32 %v1918, %v481
    %v1927 = vmul.f32 %v1919, %v481
    %v1928 = vmul.f32 %v1920, %v481
    %v1929 = vmul.f32 %v1921, %v481
    %v1930 = vmul.f32 %v1922, %v481
    %v1931 = vmul.f32 %v1923, %v481
    %v1932 = vmul.f32 %v1924, %v481
    %v1933 = vmul.f32 %v1925, %v481
    %v1934 = vadd.f32 %v1926, %v492
    %v1935 = vadd.f32 %v1927, %v492
    %v1936 = vadd.f32 %v1928, %v492
    %v1937 = vadd.f32 %v1929, %v492
    %v1938 = vadd.f32 %v1930, %v492
    %v1939 = vadd.f32 %v1931, %v492
    %v1940 = vadd.f32 %v1932, %v492
    %v1941 = vadd.f32 %v1933, %v492
    %v1942 = vpack.c.bf16 %v1935, %v1934
    %v1943 = vpack.c.bf16 %v1937, %v1936
    %v1944 = vpack.c.bf16 %v1939, %v1938
    %v1945 = vpack.c.bf16 %v1941, %v1940
    %v1947 = vsel %vm364, %v1942, 0
    %v1950 = vsel %vm364, %v1943, 0
    %v1953 = vsel %vm364, %v1944, 0
    %v1956 = vsel %vm364, %v1945, 0
    %1958 = vmatpush.bf16.msra.mxu0 0
    %1959 = vmatpush.bf16.msra.mxu0 0
    %1960 = vmatpush.bf16.msra.mxu0 0
    %1961 = vmatpush.bf16.msra.mxu0 0
    %1962 = vmatpush.bf16.msra.mxu0 0
    %1963 = vmatpush.bf16.msra.mxu0 0
    %1964 = vmatpush.bf16.msra.mxu0 %v518
    %1965 = vmatpush.bf16.msra.mxu0 %v517
    %1966 = vmatmul.bf16.gmra.mxu0 %v1947
    %v1967 = vpop.f32.mrf.mxu0
    %v1968 = vadd.f32 %v507, %v1967
    %v1969 = vpop.f32.mrf.mxu0
    %v1970 = vadd.f32 %v507, %v1969
    %1971 = vmatmul.bf16.gmra.mxu0 %v1950
    %v1972 = vpop.f32.mrf.mxu0
    %v1973 = vadd.f32 %v507, %v1972
    %v1974 = vpop.f32.mrf.mxu0
    %v1975 = vadd.f32 %v507, %v1974
    %1976 = vmatmul.bf16.gmra.mxu0 %v1953
    %v1977 = vpop.f32.mrf.mxu0
    %v1978 = vadd.f32 %v507, %v1977
    %v1979 = vpop.f32.mrf.mxu0
    %v1980 = vadd.f32 %v507, %v1979
    %1981 = vmatmul.bf16.gmra.mxu0 %v1956
    %v1982 = vpop.f32.mrf.mxu0
    %v1983 = vadd.f32 %v507, %v1982
    %v1984 = vpop.f32.mrf.mxu0
    %v1985 = vadd.f32 %v507, %v1984
    %1986 = vdwg.mxu0
    %1987 = vmatpush.bf16.msra.mxu0 0
    %1988 = vmatpush.bf16.msra.mxu0 0
    %1989 = vmatpush.bf16.msra.mxu0 0
    %1990 = vmatpush.bf16.msra.mxu0 0
    %1991 = vmatpush.bf16.msra.mxu0 0
    %1992 = vmatpush.bf16.msra.mxu0 0
    %1993 = vmatpush.bf16.msra.mxu0 %v574
    %1994 = vmatpush.bf16.msra.mxu0 %v573
    %1995 = vmatmul.bf16.gmra.mxu0 %v1947
    %v1996 = vpop.f32.mrf.mxu0
    %v1997 = vadd.f32 %v563, %v1996
    %v1998 = vpop.f32.mrf.mxu0
    %v1999 = vadd.f32 %v563, %v1998
    %2000 = vmatmul.bf16.gmra.mxu0 %v1950
    %v2001 = vpop.f32.mrf.mxu0
    %v2002 = vadd.f32 %v563, %v2001
    %v2003 = vpop.f32.mrf.mxu0
    %v2004 = vadd.f32 %v563, %v2003
    %2005 = vmatmul.bf16.gmra.mxu0 %v1953
    %v2006 = vpop.f32.mrf.mxu0
    %v2007 = vadd.f32 %v563, %v2006
    %v2008 = vpop.f32.mrf.mxu0
    %v2009 = vadd.f32 %v563, %v2008
    %2010 = vmatmul.bf16.gmra.mxu0 %v1956
    %v2011 = vpop.f32.mrf.mxu0
    %v2012 = vadd.f32 %v563, %v2011
    %v2013 = vpop.f32.mrf.mxu0
    %v2014 = vadd.f32 %v563, %v2013
    %2015 = vdwg.mxu0
    %2016 = vmatpush.bf16.msra.mxu0 0
    %2017 = vmatpush.bf16.msra.mxu0 0
    %2018 = vmatpush.bf16.msra.mxu0 0
    %2019 = vmatpush.bf16.msra.mxu0 0
    %2020 = vmatpush.bf16.msra.mxu0 0
    %2021 = vmatpush.bf16.msra.mxu0 0
    %2022 = vmatpush.bf16.msra.mxu0 %v618
    %2023 = vmatpush.bf16.msra.mxu0 %v617
    %2024 = vmatmul.bf16.gmra.mxu0 %v1947
    %v2025 = vpop.f32.mrf.mxu0
    %v2026 = vadd.f32 %v607, %v2025
    %v2027 = vpop.f32.mrf.mxu0
    %v2028 = vadd.f32 %v607, %v2027
    %2029 = vmatmul.bf16.gmra.mxu0 %v1950
    %v2030 = vpop.f32.mrf.mxu0
    %v2031 = vadd.f32 %v607, %v2030
    %v2032 = vpop.f32.mrf.mxu0
    %v2033 = vadd.f32 %v607, %v2032
    %2034 = vmatmul.bf16.gmra.mxu0 %v1953
    %v2035 = vpop.f32.mrf.mxu0
    %v2036 = vadd.f32 %v607, %v2035
    %v2037 = vpop.f32.mrf.mxu0
    %v2038 = vadd.f32 %v607, %v2037
    %2039 = vmatmul.bf16.gmra.mxu0 %v1956
    %v2040 = vpop.f32.mrf.mxu0
    %v2041 = vadd.f32 %v607, %v2040
    %v2042 = vpop.f32.mrf.mxu0
    %v2043 = vadd.f32 %v607, %v2042
    %2044 = vdwg.mxu0
    %v2045 = vpack.c.bf16 %v1970, %v1968
    %v2046 = vpack.c.bf16 %v1975, %v1973
    %v2047 = vpack.c.bf16 %v1980, %v1978
    %v2048 = vpack.c.bf16 %v1985, %v1983
    %v2049 = vpack.c.bf16 %v1999, %v1997
    %v2050 = vpack.c.bf16 %v2004, %v2002
    %v2051 = vpack.c.bf16 %v2009, %v2007
    %v2052 = vpack.c.bf16 %v2014, %v2012
    %v2054 = vsel %vm364, %v2045, 0
    %v2057 = vsel %vm364, %v2046, 0
    %v2060 = vsel %vm364, %v2047, 0
    %v2063 = vsel %vm364, %v2048, 0
    %v2066 = vsel %vm364, %v2049, 0
    %v2069 = vsel %vm364, %v2050, 0
    %v2072 = vsel %vm364, %v2051, 0
    %v2075 = vsel %vm364, %v2052, 0
    %2077 = vmatpush.bf16.xpose.msra.mxu0 0
    %2078 = vmatpush.bf16.xpose.msra.mxu0 0
    %2079 = vmatpush.bf16.xpose.msra.mxu0 0
    %2080 = vmatpush.bf16.xpose.msra.mxu0 0
    %2081 = vmatpush.bf16.xpose.msra.mxu0 %v2075
    %2082 = vmatpush.bf16.xpose.msra.mxu0 %v2072
    %2083 = vmatpush.bf16.xpose.msra.mxu0 %v2069
    %2084 = vmatpush.bf16.xpose.msra.mxu0 %v2066
    %2085 = vmatmul.bf16.gmra.mxu0 %v2054
    %v2086 = vpop.f32.mrf.mxu0
    %v2087 = vadd.f32 0.0, %v2086
    %v2088 = vpop.f32.mrf.mxu0
    %v2089 = vadd.f32 0.0, %v2088
    %2090 = vmatmul.bf16.gmra.mxu0 %v2057
    %v2091 = vpop.f32.mrf.mxu0
    %v2092 = vadd.f32 0.0, %v2091
    %v2093 = vpop.f32.mrf.mxu0
    %v2094 = vadd.f32 0.0, %v2093
    %2095 = vmatmul.bf16.gmra.mxu0 %v2060
    %v2096 = vpop.f32.mrf.mxu0
    %v2097 = vadd.f32 0.0, %v2096
    %v2098 = vpop.f32.mrf.mxu0
    %v2099 = vadd.f32 0.0, %v2098
    %2100 = vmatmul.bf16.gmra.mxu0 %v2063
    %v2101 = vpop.f32.mrf.mxu0
    %v2102 = vadd.f32 0.0, %v2101
    %v2103 = vpop.f32.mrf.mxu0
    %v2104 = vadd.f32 0.0, %v2103
    %2105 = vdwg.mxu0
    %v2106 = vmul.f32 %v2087, 0.17677669
    %v2107 = vmul.f32 %v2089, 0.17677669
    %v2108 = vmul.f32 %v2092, 0.17677669
    %v2109 = vmul.f32 %v2094, 0.17677669
    %v2110 = vmul.f32 %v2097, 0.17677669
    %v2111 = vmul.f32 %v2099, 0.17677669
    %v2112 = vmul.f32 %v2102, 0.17677669
    %v2113 = vmul.f32 %v2104, 0.17677669
    %v2114 = vsel %vm719, %v2106, -inf
    %2115 = vmax.xlane.f32.xlu0 %v2114
    %v2116 = vpop.xlane.xlu0 %2115
    %v2117 = vsel %vm719, %v2107, -inf
    %2118 = vmax.xlane.f32.xlu0 %v2117
    %v2119 = vpop.xlane.xlu0 %2118
    %v2120 = vsel %vm719, %v2108, -inf
    %2121 = vmax.xlane.f32.xlu0 %v2120
    %v2122 = vpop.xlane.xlu0 %2121
    %v2123 = vsel %vm719, %v2109, -inf
    %2124 = vmax.xlane.f32.xlu0 %v2123
    %v2125 = vpop.xlane.xlu0 %2124
    %v2126 = vsel %vm719, %v2110, -inf
    %2127 = vmax.xlane.f32.xlu0 %v2126
    %v2128 = vpop.xlane.xlu0 %2127
    %v2129 = vsel %vm719, %v2111, -inf
    %2130 = vmax.xlane.f32.xlu0 %v2129
    %v2131 = vpop.xlane.xlu0 %2130
    %v2132 = vsel %vm719, %v2112, -inf
    %2133 = vmax.xlane.f32.xlu0 %v2132
    %v2134 = vpop.xlane.xlu0 %2133
    %v2135 = vsel %vm719, %v2113, -inf
    %2136 = vmax.xlane.f32.xlu0 %v2135
    %v2137 = vpop.xlane.xlu0 %2136
    %v2138 = vsub.f32 %v2106, %v2116
    %v2139 = vsub.f32 %v2107, %v2119
    %v2140 = vsub.f32 %v2108, %v2122
    %v2141 = vsub.f32 %v2109, %v2125
    %v2142 = vsub.f32 %v2110, %v2128
    %v2143 = vsub.f32 %v2111, %v2131
    %v2144 = vsub.f32 %v2112, %v2134
    %v2145 = vsub.f32 %v2113, %v2137
    %v2146 = vmul.f32 %v2138, 1.442695
    %v2147 = vpow.pop %v2146
    %v2148 = vmul.f32 %v2139, 1.442695
    %v2149 = vpow.pop %v2148
    %v2150 = vmul.f32 %v2140, 1.442695
    %v2151 = vpow.pop %v2150
    %v2152 = vmul.f32 %v2141, 1.442695
    %v2153 = vpow.pop %v2152
    %v2154 = vmul.f32 %v2142, 1.442695
    %v2155 = vpow.pop %v2154
    %v2156 = vmul.f32 %v2143, 1.442695
    %v2157 = vpow.pop %v2156
    %v2158 = vmul.f32 %v2144, 1.442695
    %v2159 = vpow.pop %v2158
    %v2160 = vmul.f32 %v2145, 1.442695
    %v2161 = vpow.pop %v2160
    %v2162 = vsel %vm719, %v2147, 0.0
    %2163 = vadd.xlane.f32.xlu0 %v2162
    %v2164 = vpop.xlane.xlu0 %2163
    %v2165 = vsel %vm719, %v2149, 0.0
    %2166 = vadd.xlane.f32.xlu0 %v2165
    %v2167 = vpop.xlane.xlu0 %2166
    %v2168 = vsel %vm719, %v2151, 0.0
    %2169 = vadd.xlane.f32.xlu0 %v2168
    %v2170 = vpop.xlane.xlu0 %2169
    %v2171 = vsel %vm719, %v2153, 0.0
    %2172 = vadd.xlane.f32.xlu0 %v2171
    %v2173 = vpop.xlane.xlu0 %2172
    %v2174 = vsel %vm719, %v2155, 0.0
    %2175 = vadd.xlane.f32.xlu0 %v2174
    %v2176 = vpop.xlane.xlu0 %2175
    %v2177 = vsel %vm719, %v2157, 0.0
    %2178 = vadd.xlane.f32.xlu0 %v2177
    %v2179 = vpop.xlane.xlu0 %2178
    %v2180 = vsel %vm719, %v2159, 0.0
    %2181 = vadd.xlane.f32.xlu0 %v2180
    %v2182 = vpop.xlane.xlu0 %2181
    %v2183 = vsel %vm719, %v2161, 0.0
    %2184 = vadd.xlane.f32.xlu0 %v2183
    %v2185 = vpop.xlane.xlu0 %2184
    %v2186 = vrcp.pop %v2164
    %v2187 = vrcp.pop %v2167
    %v2188 = vrcp.pop %v2170
    %v2189 = vrcp.pop %v2173
    %v2190 = vrcp.pop %v2176
    %v2191 = vrcp.pop %v2179
    %v2192 = vrcp.pop %v2182
    %v2193 = vrcp.pop %v2185
    %v2194 = vmul.f32 %v2147, %v2186
    %v2195 = vmul.f32 %v2149, %v2187
    %v2196 = vmul.f32 %v2151, %v2188
    %v2197 = vmul.f32 %v2153, %v2189
    %v2198 = vmul.f32 %v2155, %v2190
    %v2199 = vmul.f32 %v2157, %v2191
    %v2200 = vmul.f32 %v2159, %v2192
    %v2201 = vmul.f32 %v2161, %v2193
    %v2202 = vpack.c.bf16 %v2195, %v2194
    %v2203 = vpack.c.bf16 %v2197, %v2196
    %v2204 = vpack.c.bf16 %v2199, %v2198
    %v2205 = vpack.c.bf16 %v2201, %v2200
    %v2206 = vpack.c.bf16 %v2028, %v2026
    %v2207 = vpack.c.bf16 %v2033, %v2031
    %v2208 = vpack.c.bf16 %v2038, %v2036
    %v2209 = vpack.c.bf16 %v2043, %v2041
    %v2211 = vsel %vm719, %v2202, 0
    %v2214 = vsel %vm719, %v2203, 0
    %v2217 = vsel %vm719, %v2204, 0
    %v2220 = vsel %vm719, %v2205, 0
    %2222 = vmatpush.bf16.msra.mxu0 0
    %2223 = vmatpush.bf16.msra.mxu0 0
    %2224 = vmatpush.bf16.msra.mxu0 0
    %2225 = vmatpush.bf16.msra.mxu0 0
    %2226 = vmatpush.bf16.msra.mxu0 %v2209
    %2227 = vmatpush.bf16.msra.mxu0 %v2208
    %2228 = vmatpush.bf16.msra.mxu0 %v2207
    %2229 = vmatpush.bf16.msra.mxu0 %v2206
    %2230 = vmatmul.bf16.gmra.mxu0 %v2211
    %v2231 = vpop.f32.mrf.mxu0
    %v2232 = vadd.f32 0.0, %v2231
    %v2233 = vpop.f32.mrf.mxu0
    %v2234 = vadd.f32 0.0, %v2233
    %2235 = vmatmul.bf16.gmra.mxu0 %v2214
    %v2236 = vpop.f32.mrf.mxu0
    %v2237 = vadd.f32 0.0, %v2236
    %v2238 = vpop.f32.mrf.mxu0
    %v2239 = vadd.f32 0.0, %v2238
    %2240 = vmatmul.bf16.gmra.mxu0 %v2217
    %v2241 = vpop.f32.mrf.mxu0
    %v2242 = vadd.f32 0.0, %v2241
    %v2243 = vpop.f32.mrf.mxu0
    %v2244 = vadd.f32 0.0, %v2243
    %2245 = vmatmul.bf16.gmra.mxu0 %v2220
    %v2246 = vpop.f32.mrf.mxu0
    %v2247 = vadd.f32 0.0, %v2246
    %v2248 = vpop.f32.mrf.mxu0
    %v2249 = vadd.f32 0.0, %v2248
    %2250 = vdwg.mxu0
    %v2251 = vmul.f32 %v857, %v2232
    %v2252 = vmul.f32 %v857, %v2234
    %v2253 = vmul.f32 %v857, %v2237
    %v2254 = vmul.f32 %v857, %v2239
    %v2255 = vmul.f32 %v857, %v2242
    %v2256 = vmul.f32 %v857, %v2244
    %v2257 = vmul.f32 %v857, %v2247
    %v2258 = vmul.f32 %v857, %v2249
    %v2259 = vadd.f32 %v2251, %v1934
    %v2260 = vadd.f32 %v2252, %v1935
    %v2261 = vadd.f32 %v2253, %v1936
    %v2262 = vadd.f32 %v2254, %v1937
    %v2263 = vadd.f32 %v2255, %v1938
    %v2264 = vadd.f32 %v2256, %v1939
    %v2265 = vadd.f32 %v2257, %v1940
    %v2266 = vadd.f32 %v2258, %v1941
    %v2267 = vadd.f32 %v2259, %v1805
    %v2268 = vadd.f32 %v2260, %v1806
    %v2269 = vadd.f32 %v2261, %v1807
    %v2270 = vadd.f32 %v2262, %v1808
    %v2271 = vadd.f32 %v2263, %v1809
    %v2272 = vadd.f32 %v2264, %v1810
    %v2273 = vadd.f32 %v2265, %v1811
    %v2274 = vadd.f32 %v2266, %v1812
    %v2275 = vsel %vm364, %v2267, 0.0
    %v2276 = vsel %vm364, %v2268, 0.0
    %v2277 = vadd.f32 %v2275, %v2276
    %v2278 = vsel %vm364, %v2269, 0.0
    %v2279 = vadd.f32 %v2277, %v2278
    %v2280 = vsel %vm364, %v2270, 0.0
    %v2281 = vadd.f32 %v2279, %v2280
    %v2282 = vsel %vm364, %v2271, 0.0
    %v2283 = vadd.f32 %v2281, %v2282
    %v2284 = vsel %vm364, %v2272, 0.0
    %v2285 = vadd.f32 %v2283, %v2284
    %v2286 = vsel %vm364, %v2273, 0.0
    %v2287 = vadd.f32 %v2285, %v2286
    %v2288 = vsel %vm364, %v2274, 0.0
    %v2289 = vadd.f32 %v2287, %v2288
    %v2290 = vrot.slane %v2289, 4
    %v2291 = vadd.f32 %v2289, %v2290
    %v2292 = vrot.slane %v2291, 2
    %v2293 = vadd.f32 %v2291, %v2292
    %v2294 = vrot.slane %v2293, 1
    %v2295 = vadd.f32 %v2293, %v2294
    %v2296 = vmul.f32 %v2295, %v392
    %v2297 = vmul.f32 %v2267, %v2267
    %v2298 = vmul.f32 %v2268, %v2268
    %v2299 = vmul.f32 %v2269, %v2269
    %v2300 = vmul.f32 %v2270, %v2270
    %v2301 = vmul.f32 %v2271, %v2271
    %v2302 = vmul.f32 %v2272, %v2272
    %v2303 = vmul.f32 %v2273, %v2273
    %v2304 = vmul.f32 %v2274, %v2274
    %v2305 = vsel %vm364, %v2297, 0.0
    %v2306 = vsel %vm364, %v2298, 0.0
    %v2307 = vadd.f32 %v2305, %v2306
    %v2308 = vsel %vm364, %v2299, 0.0
    %v2309 = vadd.f32 %v2307, %v2308
    %v2310 = vsel %vm364, %v2300, 0.0
    %v2311 = vadd.f32 %v2309, %v2310
    %v2312 = vsel %vm364, %v2301, 0.0
    %v2313 = vadd.f32 %v2311, %v2312
    %v2314 = vsel %vm364, %v2302, 0.0
    %v2315 = vadd.f32 %v2313, %v2314
    %v2316 = vsel %vm364, %v2303, 0.0
    %v2317 = vadd.f32 %v2315, %v2316
    %v2318 = vsel %vm364, %v2304, 0.0
    %v2319 = vadd.f32 %v2317, %v2318
    %v2320 = vrot.slane %v2319, 4
    %v2321 = vadd.f32 %v2319, %v2320
    %v2322 = vrot.slane %v2321, 2
    %v2323 = vadd.f32 %v2321, %v2322
    %v2324 = vrot.slane %v2323, 1
    %v2325 = vadd.f32 %v2323, %v2324
    %v2326 = vmul.f32 %v2325, %v392
    %v2327 = vsel %vm424, %v2296, %v2326
    %v2328 = vpack.c.bf16 %v2327, %v2327
    %v2330 = vsel %vm364, %v2328, 0
    %2332 = vmatpush.bf16.msra.mxu0 0
    %2333 = vmatpush.bf16.msra.mxu0 0
    %2334 = vmatpush.bf16.msra.mxu0 0
    %2335 = vmatpush.bf16.msra.mxu0 0
    %2336 = vmatpush.bf16.msra.mxu0 0
    %2337 = vmatpush.bf16.msra.mxu0 0
    %2338 = vmatpush.bf16.msra.mxu0 %v428
    %2339 = vmatpush.bf16.msra.mxu0 %v427
    %2340 = vmatmul.bf16.gmra.mxu0 %v2330
    %v2341 = vpop.f32.mrf.mxu0
    %v2342 = vadd.f32 0.0, %v2341
    %v2343 = vpop.f32.mrf.mxu0
    %2344 = vdwg.mxu0
    %v2345 = vmul.f32 %v2342, %v2342
    %v2347 = vrot.slane %v2345, 7
    %v2349 = vsub.f32 %v2342, %v2347
    %v2350 = vmax.f32 %v2349, 0.0
    %v2351 = vperm.slane %v2342, 0
    %v2352 = vsub.f32 %v2267, %v2351
    %v2353 = vsub.f32 %v2268, %v2351
    %v2354 = vsub.f32 %v2269, %v2351
    %v2355 = vsub.f32 %v2270, %v2351
    %v2356 = vsub.f32 %v2271, %v2351
    %v2357 = vsub.f32 %v2272, %v2351
    %v2358 = vsub.f32 %v2273, %v2351
    %v2359 = vsub.f32 %v2274, %v2351
    %v2360 = vadd.f32 %v2350, 1e-05
    %v2361 = vrsqrt.pop %v2360
    %v2362 = vmul.f32 %v2361, %v2360
    %v2363 = vmul.f32 %v2362, %v2361
    %v2364 = vmul.f32 0.5, %v2363
    %v2365 = vsub.f32 1.5, %v2364
    %v2366 = vmul.f32 %v2361, %v2365
    %vm2367 = vweird.f32 %v2360
    %vm2368 = vweird.f32 %v2361
    %vm2369 = vmor %vm2367, %vm2368
    %v2370 = vsel %vm2369, %v2361, %v2366
    %v2371 = vperm.slane %v2370, 1
    %v2372 = vmul.f32 %v2352, %v2371
    %v2373 = vmul.f32 %v2353, %v2371
    %v2374 = vmul.f32 %v2354, %v2371
    %v2375 = vmul.f32 %v2355, %v2371
    %v2376 = vmul.f32 %v2356, %v2371
    %v2377 = vmul.f32 %v2357, %v2371
    %v2378 = vmul.f32 %v2358, %v2371
    %v2379 = vmul.f32 %v2359, %v2371
    %v2380 = vmul.f32 %v2372, %v988
    %v2381 = vmul.f32 %v2373, %v988
    %v2382 = vmul.f32 %v2374, %v988
    %v2383 = vmul.f32 %v2375, %v988
    %v2384 = vmul.f32 %v2376, %v988
    %v2385 = vmul.f32 %v2377, %v988
    %v2386 = vmul.f32 %v2378, %v988
    %v2387 = vmul.f32 %v2379, %v988
    %v2388 = vadd.f32 %v2380, %v999
    %v2389 = vadd.f32 %v2381, %v999
    %v2390 = vadd.f32 %v2382, %v999
    %v2391 = vadd.f32 %v2383, %v999
    %v2392 = vadd.f32 %v2384, %v999
    %v2393 = vadd.f32 %v2385, %v999
    %v2394 = vadd.f32 %v2386, %v999
    %v2395 = vadd.f32 %v2387, %v999
    %v2396 = vpack.c.bf16 %v2389, %v2388
    %v2397 = vpack.c.bf16 %v2391, %v2390
    %v2398 = vpack.c.bf16 %v2393, %v2392
    %v2399 = vpack.c.bf16 %v2395, %v2394
    %v2401 = vsel %vm364, %v2396, 0
    %v2404 = vsel %vm364, %v2397, 0
    %v2407 = vsel %vm364, %v2398, 0
    %v2410 = vsel %vm364, %v2399, 0
    %2412 = vmatpush.bf16.msra.mxu0 0
    %2413 = vmatpush.bf16.msra.mxu0 0
    %2414 = vmatpush.bf16.msra.mxu0 0
    %2415 = vmatpush.bf16.msra.mxu0 0
    %2416 = vmatpush.bf16.msra.mxu0 0
    %2417 = vmatpush.bf16.msra.mxu0 0
    %2418 = vmatpush.bf16.msra.mxu0 %v1022
    %2419 = vmatpush.bf16.msra.mxu0 %v1021
    %2420 = vmatmul.bf16.gmra.mxu0 %v2401
    %v2421 = vpop.f32.mrf.mxu0
    %v2422 = vadd.f32 0.0, %v2421
    %v2423 = vpop.f32.mrf.mxu0
    %v2424 = vadd.f32 0.0, %v2423
    %2425 = vmatmul.bf16.gmra.mxu0 %v2404
    %v2426 = vpop.f32.mrf.mxu0
    %v2427 = vadd.f32 0.0, %v2426
    %v2428 = vpop.f32.mrf.mxu0
    %v2429 = vadd.f32 0.0, %v2428
    %2430 = vmatmul.bf16.gmra.mxu0 %v2407
    %v2431 = vpop.f32.mrf.mxu0
    %v2432 = vadd.f32 0.0, %v2431
    %v2433 = vpop.f32.mrf.mxu0
    %v2434 = vadd.f32 0.0, %v2433
    %2435 = vmatmul.bf16.gmra.mxu0 %v2410
    %v2436 = vpop.f32.mrf.mxu0
    %v2437 = vadd.f32 0.0, %v2436
    %v2438 = vpop.f32.mrf.mxu0
    %v2439 = vadd.f32 0.0, %v2438
    %2440 = vdwg.mxu0
    %s2441 = scalar_lea.vmem [#allocation3], 4
    %v2442 = vld [vmem:[%s2441] sm:$0xf]
    %v2444 = vsel %vm1073, %v2442, 0
    %2446 = vmatpush.bf16.msra.mxu0 0
    %2447 = vmatpush.bf16.msra.mxu0 0
    %2448 = vmatpush.bf16.msra.mxu0 0
    %2449 = vmatpush.bf16.msra.mxu0 0
    %2450 = vmatpush.bf16.msra.mxu0 0
    %2451 = vmatpush.bf16.msra.mxu0 0
    %2452 = vmatpush.bf16.msra.mxu0 0
    %2453 = vmatpush.bf16.msra.mxu0 %v1071
    %2454 = vmatmul.bf16.gmra.mxu0 %v2444
    %v2455 = vpop.f32.mrf.mxu0
    %v2456 = vadd.f32 0.0, %v2455
    %v2457 = vpop.f32.mrf.mxu0
    %2458 = vdwg.mxu0
    %2459 = vmatpush.bf16.msra.mxu0 0
    %2460 = vmatpush.bf16.msra.mxu0 0
    %2461 = vmatpush.bf16.msra.mxu0 0
    %2462 = vmatpush.bf16.msra.mxu0 0
    %2463 = vmatpush.bf16.msra.mxu0 0
    %2464 = vmatpush.bf16.msra.mxu0 0
    %2465 = vmatpush.bf16.msra.mxu0 0
    %2466 = vmatpush.bf16.msra.mxu0 %v1094
    %2467 = vmatmul.bf16.gmra.mxu0 %v2444
    %v2468 = vpop.f32.mrf.mxu0
    %v2469 = vadd.f32 0.0, %v2468
    %v2470 = vpop.f32.mrf.mxu0
    %2471 = vdwg.mxu0
    %v2472 = vmul.f32 %v2456, %v299
    %v2473 = vmul.f32 %v2456, %v300
    %v2474 = vmul.f32 %v2456, %v301
    %v2475 = vmul.f32 %v2456, %v302
    %v2476 = vmul.f32 %v2456, %v303
    %v2477 = vmul.f32 %v2456, %v304
    %v2478 = vmul.f32 %v2456, %v305
    %v2479 = vmul.f32 %v2456, %v306
    %v2480 = vmul.f32 %v2469, %v299
    %v2481 = vmul.f32 %v2469, %v300
    %v2482 = vmul.f32 %v2469, %v301
    %v2483 = vmul.f32 %v2469, %v302
    %v2484 = vmul.f32 %v2469, %v303
    %v2485 = vmul.f32 %v2469, %v304
    %v2486 = vmul.f32 %v2469, %v305
    %v2487 = vmul.f32 %v2469, %v306
    %v2488 = vpack.c.bf16 %v2424, %v2422
    %v2489 = vpack.c.bf16 %v2429, %v2427
    %v2490 = vpack.c.bf16 %v2434, %v2432
    %v2491 = vpack.c.bf16 %v2439, %v2437
    %v2492 = vpack.c.bf16 %v2473, %v2472
    %v2493 = vpack.c.bf16 %v2475, %v2474
    %v2494 = vpack.c.bf16 %v2477, %v2476
    %v2495 = vpack.c.bf16 %v2479, %v2478
    %v2497 = vsel %vm364, %v2488, 0
    %v2500 = vsel %vm364, %v2489, 0
    %v2503 = vsel %vm364, %v2490, 0
    %v2506 = vsel %vm364, %v2491, 0
    %v2509 = vsel %vm364, %v2492, 0
    %v2512 = vsel %vm364, %v2493, 0
    %v2515 = vsel %vm364, %v2494, 0
    %v2518 = vsel %vm364, %v2495, 0
    %2520 = vmatpush.bf16.xpose.msra.mxu0 0
    %2521 = vmatpush.bf16.xpose.msra.mxu0 0
    %2522 = vmatpush.bf16.xpose.msra.mxu0 0
    %2523 = vmatpush.bf16.xpose.msra.mxu0 0
    %2524 = vmatpush.bf16.xpose.msra.mxu0 %v2518
    %2525 = vmatpush.bf16.xpose.msra.mxu0 %v2515
    %2526 = vmatpush.bf16.xpose.msra.mxu0 %v2512
    %2527 = vmatpush.bf16.xpose.msra.mxu0 %v2509
    %2528 = vmatmul.bf16.gmra.mxu0 %v2497
    %v2529 = vpop.f32.mrf.mxu0
    %v2530 = vadd.f32 0.0, %v2529
    %v2531 = vpop.f32.mrf.mxu0
    %v2532 = vadd.f32 0.0, %v2531
    %2533 = vmatmul.bf16.gmra.mxu0 %v2500
    %v2534 = vpop.f32.mrf.mxu0
    %v2535 = vadd.f32 0.0, %v2534
    %v2536 = vpop.f32.mrf.mxu0
    %v2537 = vadd.f32 0.0, %v2536
    %2538 = vmatmul.bf16.gmra.mxu0 %v2503
    %v2539 = vpop.f32.mrf.mxu0
    %v2540 = vadd.f32 0.0, %v2539
    %v2541 = vpop.f32.mrf.mxu0
    %v2542 = vadd.f32 0.0, %v2541
    %2543 = vmatmul.bf16.gmra.mxu0 %v2506
    %v2544 = vpop.f32.mrf.mxu0
    %v2545 = vadd.f32 0.0, %v2544
    %v2546 = vpop.f32.mrf.mxu0
    %v2547 = vadd.f32 0.0, %v2546
    %2548 = vdwg.mxu0
    %v2549 = vmul.f32 %v2530, 0.5
    %v2550 = vmul.f32 %v2532, 0.5
    %v2551 = vmul.f32 %v2535, 0.5
    %v2552 = vmul.f32 %v2537, 0.5
    %v2553 = vmul.f32 %v2540, 0.5
    %v2554 = vmul.f32 %v2542, 0.5
    %v2555 = vmul.f32 %v2545, 0.5
    %v2556 = vmul.f32 %v2547, 0.5
    %v2557 = vsel %vm1196, %v2549, -1e+30
    %v2558 = vsel %vm1196, %v2550, -1e+30
    %v2559 = vsel %vm1196, %v2551, -1e+30
    %v2560 = vsel %vm1196, %v2552, -1e+30
    %v2561 = vsel %vm1196, %v2553, -1e+30
    %v2562 = vsel %vm1196, %v2554, -1e+30
    %v2563 = vsel %vm1196, %v2555, -1e+30
    %v2564 = vsel %vm1196, %v2556, -1e+30
    %v2565 = vsel %vm719, %v2557, -inf
    %2566 = vmax.xlane.f32.xlu0 %v2565
    %v2567 = vpop.xlane.xlu0 %2566
    %v2568 = vsel %vm719, %v2558, -inf
    %2569 = vmax.xlane.f32.xlu0 %v2568
    %v2570 = vpop.xlane.xlu0 %2569
    %v2571 = vsel %vm719, %v2559, -inf
    %2572 = vmax.xlane.f32.xlu0 %v2571
    %v2573 = vpop.xlane.xlu0 %2572
    %v2574 = vsel %vm719, %v2560, -inf
    %2575 = vmax.xlane.f32.xlu0 %v2574
    %v2576 = vpop.xlane.xlu0 %2575
    %v2577 = vsel %vm719, %v2561, -inf
    %2578 = vmax.xlane.f32.xlu0 %v2577
    %v2579 = vpop.xlane.xlu0 %2578
    %v2580 = vsel %vm719, %v2562, -inf
    %2581 = vmax.xlane.f32.xlu0 %v2580
    %v2582 = vpop.xlane.xlu0 %2581
    %v2583 = vsel %vm719, %v2563, -inf
    %2584 = vmax.xlane.f32.xlu0 %v2583
    %v2585 = vpop.xlane.xlu0 %2584
    %v2586 = vsel %vm719, %v2564, -inf
    %2587 = vmax.xlane.f32.xlu0 %v2586
    %v2588 = vpop.xlane.xlu0 %2587
    %v2589 = vsel %vm1196, %v2567, 0.0
    %v2590 = vsel %vm1196, %v2570, 0.0
    %v2591 = vsel %vm1196, %v2573, 0.0
    %v2592 = vsel %vm1196, %v2576, 0.0
    %v2593 = vsel %vm1196, %v2579, 0.0
    %v2594 = vsel %vm1196, %v2582, 0.0
    %v2595 = vsel %vm1196, %v2585, 0.0
    %v2596 = vsel %vm1196, %v2588, 0.0
    %v2597 = vsel %vm1239, %v2549, -1e+30
    %v2598 = vsel %vm1239, %v2550, -1e+30
    %v2599 = vsel %vm1239, %v2551, -1e+30
    %v2600 = vsel %vm1239, %v2552, -1e+30
    %v2601 = vsel %vm1239, %v2553, -1e+30
    %v2602 = vsel %vm1239, %v2554, -1e+30
    %v2603 = vsel %vm1239, %v2555, -1e+30
    %v2604 = vsel %vm1239, %v2556, -1e+30
    %v2605 = vsel %vm719, %v2597, -inf
    %2606 = vmax.xlane.f32.xlu0 %v2605
    %v2607 = vpop.xlane.xlu0 %2606
    %v2608 = vsel %vm719, %v2598, -inf
    %2609 = vmax.xlane.f32.xlu0 %v2608
    %v2610 = vpop.xlane.xlu0 %2609
    %v2611 = vsel %vm719, %v2599, -inf
    %2612 = vmax.xlane.f32.xlu0 %v2611
    %v2613 = vpop.xlane.xlu0 %2612
    %v2614 = vsel %vm719, %v2600, -inf
    %2615 = vmax.xlane.f32.xlu0 %v2614
    %v2616 = vpop.xlane.xlu0 %2615
    %v2617 = vsel %vm719, %v2601, -inf
    %2618 = vmax.xlane.f32.xlu0 %v2617
    %v2619 = vpop.xlane.xlu0 %2618
    %v2620 = vsel %vm719, %v2602, -inf
    %2621 = vmax.xlane.f32.xlu0 %v2620
    %v2622 = vpop.xlane.xlu0 %2621
    %v2623 = vsel %vm719, %v2603, -inf
    %2624 = vmax.xlane.f32.xlu0 %v2623
    %v2625 = vpop.xlane.xlu0 %2624
    %v2626 = vsel %vm719, %v2604, -inf
    %2627 = vmax.xlane.f32.xlu0 %v2626
    %v2628 = vpop.xlane.xlu0 %2627
    %v2629 = vsel %vm1239, %v2607, %v2589
    %v2630 = vsel %vm1239, %v2610, %v2590
    %v2631 = vsel %vm1239, %v2613, %v2591
    %v2632 = vsel %vm1239, %v2616, %v2592
    %v2633 = vsel %vm1239, %v2619, %v2593
    %v2634 = vsel %vm1239, %v2622, %v2594
    %v2635 = vsel %vm1239, %v2625, %v2595
    %v2636 = vsel %vm1239, %v2628, %v2596
    %v2637 = vsel %vm1282, %v2549, -1e+30
    %v2638 = vsel %vm1282, %v2550, -1e+30
    %v2639 = vsel %vm1282, %v2551, -1e+30
    %v2640 = vsel %vm1282, %v2552, -1e+30
    %v2641 = vsel %vm1282, %v2553, -1e+30
    %v2642 = vsel %vm1282, %v2554, -1e+30
    %v2643 = vsel %vm1282, %v2555, -1e+30
    %v2644 = vsel %vm1282, %v2556, -1e+30
    %v2645 = vsel %vm719, %v2637, -inf
    %2646 = vmax.xlane.f32.xlu0 %v2645
    %v2647 = vpop.xlane.xlu0 %2646
    %v2648 = vsel %vm719, %v2638, -inf
    %2649 = vmax.xlane.f32.xlu0 %v2648
    %v2650 = vpop.xlane.xlu0 %2649
    %v2651 = vsel %vm719, %v2639, -inf
    %2652 = vmax.xlane.f32.xlu0 %v2651
    %v2653 = vpop.xlane.xlu0 %2652
    %v2654 = vsel %vm719, %v2640, -inf
    %2655 = vmax.xlane.f32.xlu0 %v2654
    %v2656 = vpop.xlane.xlu0 %2655
    %v2657 = vsel %vm719, %v2641, -inf
    %2658 = vmax.xlane.f32.xlu0 %v2657
    %v2659 = vpop.xlane.xlu0 %2658
    %v2660 = vsel %vm719, %v2642, -inf
    %2661 = vmax.xlane.f32.xlu0 %v2660
    %v2662 = vpop.xlane.xlu0 %2661
    %v2663 = vsel %vm719, %v2643, -inf
    %2664 = vmax.xlane.f32.xlu0 %v2663
    %v2665 = vpop.xlane.xlu0 %2664
    %v2666 = vsel %vm719, %v2644, -inf
    %2667 = vmax.xlane.f32.xlu0 %v2666
    %v2668 = vpop.xlane.xlu0 %2667
    %v2669 = vsel %vm1282, %v2647, %v2629
    %v2670 = vsel %vm1282, %v2650, %v2630
    %v2671 = vsel %vm1282, %v2653, %v2631
    %v2672 = vsel %vm1282, %v2656, %v2632
    %v2673 = vsel %vm1282, %v2659, %v2633
    %v2674 = vsel %vm1282, %v2662, %v2634
    %v2675 = vsel %vm1282, %v2665, %v2635
    %v2676 = vsel %vm1282, %v2668, %v2636
    %v2677 = vsel %vm1325, %v2549, -1e+30
    %v2678 = vsel %vm1325, %v2550, -1e+30
    %v2679 = vsel %vm1325, %v2551, -1e+30
    %v2680 = vsel %vm1325, %v2552, -1e+30
    %v2681 = vsel %vm1325, %v2553, -1e+30
    %v2682 = vsel %vm1325, %v2554, -1e+30
    %v2683 = vsel %vm1325, %v2555, -1e+30
    %v2684 = vsel %vm1325, %v2556, -1e+30
    %v2685 = vsel %vm719, %v2677, -inf
    %2686 = vmax.xlane.f32.xlu0 %v2685
    %v2687 = vpop.xlane.xlu0 %2686
    %v2688 = vsel %vm719, %v2678, -inf
    %2689 = vmax.xlane.f32.xlu0 %v2688
    %v2690 = vpop.xlane.xlu0 %2689
    %v2691 = vsel %vm719, %v2679, -inf
    %2692 = vmax.xlane.f32.xlu0 %v2691
    %v2693 = vpop.xlane.xlu0 %2692
    %v2694 = vsel %vm719, %v2680, -inf
    %2695 = vmax.xlane.f32.xlu0 %v2694
    %v2696 = vpop.xlane.xlu0 %2695
    %v2697 = vsel %vm719, %v2681, -inf
    %2698 = vmax.xlane.f32.xlu0 %v2697
    %v2699 = vpop.xlane.xlu0 %2698
    %v2700 = vsel %vm719, %v2682, -inf
    %2701 = vmax.xlane.f32.xlu0 %v2700
    %v2702 = vpop.xlane.xlu0 %2701
    %v2703 = vsel %vm719, %v2683, -inf
    %2704 = vmax.xlane.f32.xlu0 %v2703
    %v2705 = vpop.xlane.xlu0 %2704
    %v2706 = vsel %vm719, %v2684, -inf
    %2707 = vmax.xlane.f32.xlu0 %v2706
    %v2708 = vpop.xlane.xlu0 %2707
    %v2709 = vsel %vm1325, %v2687, %v2669
    %v2710 = vsel %vm1325, %v2690, %v2670
    %v2711 = vsel %vm1325, %v2693, %v2671
    %v2712 = vsel %vm1325, %v2696, %v2672
    %v2713 = vsel %vm1325, %v2699, %v2673
    %v2714 = vsel %vm1325, %v2702, %v2674
    %v2715 = vsel %vm1325, %v2705, %v2675
    %v2716 = vsel %vm1325, %v2708, %v2676
    %v2717 = vsel %vm1368, %v2549, -1e+30
    %v2718 = vsel %vm1368, %v2550, -1e+30
    %v2719 = vsel %vm1368, %v2551, -1e+30
    %v2720 = vsel %vm1368, %v2552, -1e+30
    %v2721 = vsel %vm1368, %v2553, -1e+30
    %v2722 = vsel %vm1368, %v2554, -1e+30
    %v2723 = vsel %vm1368, %v2555, -1e+30
    %v2724 = vsel %vm1368, %v2556, -1e+30
    %v2725 = vsel %vm719, %v2717, -inf
    %2726 = vmax.xlane.f32.xlu0 %v2725
    %v2727 = vpop.xlane.xlu0 %2726
    %v2728 = vsel %vm719, %v2718, -inf
    %2729 = vmax.xlane.f32.xlu0 %v2728
    %v2730 = vpop.xlane.xlu0 %2729
    %v2731 = vsel %vm719, %v2719, -inf
    %2732 = vmax.xlane.f32.xlu0 %v2731
    %v2733 = vpop.xlane.xlu0 %2732
    %v2734 = vsel %vm719, %v2720, -inf
    %2735 = vmax.xlane.f32.xlu0 %v2734
    %v2736 = vpop.xlane.xlu0 %2735
    %v2737 = vsel %vm719, %v2721, -inf
    %2738 = vmax.xlane.f32.xlu0 %v2737
    %v2739 = vpop.xlane.xlu0 %2738
    %v2740 = vsel %vm719, %v2722, -inf
    %2741 = vmax.xlane.f32.xlu0 %v2740
    %v2742 = vpop.xlane.xlu0 %2741
    %v2743 = vsel %vm719, %v2723, -inf
    %2744 = vmax.xlane.f32.xlu0 %v2743
    %v2745 = vpop.xlane.xlu0 %2744
    %v2746 = vsel %vm719, %v2724, -inf
    %2747 = vmax.xlane.f32.xlu0 %v2746
    %v2748 = vpop.xlane.xlu0 %2747
    %v2749 = vsel %vm1368, %v2727, %v2709
    %v2750 = vsel %vm1368, %v2730, %v2710
    %v2751 = vsel %vm1368, %v2733, %v2711
    %v2752 = vsel %vm1368, %v2736, %v2712
    %v2753 = vsel %vm1368, %v2739, %v2713
    %v2754 = vsel %vm1368, %v2742, %v2714
    %v2755 = vsel %vm1368, %v2745, %v2715
    %v2756 = vsel %vm1368, %v2748, %v2716
    %v2757 = vsel %vm1411, %v2549, -1e+30
    %v2758 = vsel %vm1411, %v2550, -1e+30
    %v2759 = vsel %vm1411, %v2551, -1e+30
    %v2760 = vsel %vm1411, %v2552, -1e+30
    %v2761 = vsel %vm1411, %v2553, -1e+30
    %v2762 = vsel %vm1411, %v2554, -1e+30
    %v2763 = vsel %vm1411, %v2555, -1e+30
    %v2764 = vsel %vm1411, %v2556, -1e+30
    %v2765 = vsel %vm719, %v2757, -inf
    %2766 = vmax.xlane.f32.xlu0 %v2765
    %v2767 = vpop.xlane.xlu0 %2766
    %v2768 = vsel %vm719, %v2758, -inf
    %2769 = vmax.xlane.f32.xlu0 %v2768
    %v2770 = vpop.xlane.xlu0 %2769
    %v2771 = vsel %vm719, %v2759, -inf
    %2772 = vmax.xlane.f32.xlu0 %v2771
    %v2773 = vpop.xlane.xlu0 %2772
    %v2774 = vsel %vm719, %v2760, -inf
    %2775 = vmax.xlane.f32.xlu0 %v2774
    %v2776 = vpop.xlane.xlu0 %2775
    %v2777 = vsel %vm719, %v2761, -inf
    %2778 = vmax.xlane.f32.xlu0 %v2777
    %v2779 = vpop.xlane.xlu0 %2778
    %v2780 = vsel %vm719, %v2762, -inf
    %2781 = vmax.xlane.f32.xlu0 %v2780
    %v2782 = vpop.xlane.xlu0 %2781
    %v2783 = vsel %vm719, %v2763, -inf
    %2784 = vmax.xlane.f32.xlu0 %v2783
    %v2785 = vpop.xlane.xlu0 %2784
    %v2786 = vsel %vm719, %v2764, -inf
    %2787 = vmax.xlane.f32.xlu0 %v2786
    %v2788 = vpop.xlane.xlu0 %2787
    %v2789 = vsel %vm1411, %v2767, %v2749
    %v2790 = vsel %vm1411, %v2770, %v2750
    %v2791 = vsel %vm1411, %v2773, %v2751
    %v2792 = vsel %vm1411, %v2776, %v2752
    %v2793 = vsel %vm1411, %v2779, %v2753
    %v2794 = vsel %vm1411, %v2782, %v2754
    %v2795 = vsel %vm1411, %v2785, %v2755
    %v2796 = vsel %vm1411, %v2788, %v2756
    %v2797 = vsel %vm1454, %v2549, -1e+30
    %v2798 = vsel %vm1454, %v2550, -1e+30
    %v2799 = vsel %vm1454, %v2551, -1e+30
    %v2800 = vsel %vm1454, %v2552, -1e+30
    %v2801 = vsel %vm1454, %v2553, -1e+30
    %v2802 = vsel %vm1454, %v2554, -1e+30
    %v2803 = vsel %vm1454, %v2555, -1e+30
    %v2804 = vsel %vm1454, %v2556, -1e+30
    %v2805 = vsel %vm719, %v2797, -inf
    %2806 = vmax.xlane.f32.xlu0 %v2805
    %v2807 = vpop.xlane.xlu0 %2806
    %v2808 = vsel %vm719, %v2798, -inf
    %2809 = vmax.xlane.f32.xlu0 %v2808
    %v2810 = vpop.xlane.xlu0 %2809
    %v2811 = vsel %vm719, %v2799, -inf
    %2812 = vmax.xlane.f32.xlu0 %v2811
    %v2813 = vpop.xlane.xlu0 %2812
    %v2814 = vsel %vm719, %v2800, -inf
    %2815 = vmax.xlane.f32.xlu0 %v2814
    %v2816 = vpop.xlane.xlu0 %2815
    %v2817 = vsel %vm719, %v2801, -inf
    %2818 = vmax.xlane.f32.xlu0 %v2817
    %v2819 = vpop.xlane.xlu0 %2818
    %v2820 = vsel %vm719, %v2802, -inf
    %2821 = vmax.xlane.f32.xlu0 %v2820
    %v2822 = vpop.xlane.xlu0 %2821
    %v2823 = vsel %vm719, %v2803, -inf
    %2824 = vmax.xlane.f32.xlu0 %v2823
    %v2825 = vpop.xlane.xlu0 %2824
    %v2826 = vsel %vm719, %v2804, -inf
    %2827 = vmax.xlane.f32.xlu0 %v2826
    %v2828 = vpop.xlane.xlu0 %2827
    %v2829 = vsel %vm1454, %v2807, %v2789
    %v2830 = vsel %vm1454, %v2810, %v2790
    %v2831 = vsel %vm1454, %v2813, %v2791
    %v2832 = vsel %vm1454, %v2816, %v2792
    %v2833 = vsel %vm1454, %v2819, %v2793
    %v2834 = vsel %vm1454, %v2822, %v2794
    %v2835 = vsel %vm1454, %v2825, %v2795
    %v2836 = vsel %vm1454, %v2828, %v2796
    %v2837 = vsel %vm1497, %v2549, -1e+30
    %v2838 = vsel %vm1497, %v2550, -1e+30
    %v2839 = vsel %vm1497, %v2551, -1e+30
    %v2840 = vsel %vm1497, %v2552, -1e+30
    %v2841 = vsel %vm1497, %v2553, -1e+30
    %v2842 = vsel %vm1497, %v2554, -1e+30
    %v2843 = vsel %vm1497, %v2555, -1e+30
    %v2844 = vsel %vm1497, %v2556, -1e+30
    %v2845 = vsel %vm719, %v2837, -inf
    %2846 = vmax.xlane.f32.xlu0 %v2845
    %v2847 = vpop.xlane.xlu0 %2846
    %v2848 = vsel %vm719, %v2838, -inf
    %2849 = vmax.xlane.f32.xlu0 %v2848
    %v2850 = vpop.xlane.xlu0 %2849
    %v2851 = vsel %vm719, %v2839, -inf
    %2852 = vmax.xlane.f32.xlu0 %v2851
    %v2853 = vpop.xlane.xlu0 %2852
    %v2854 = vsel %vm719, %v2840, -inf
    %2855 = vmax.xlane.f32.xlu0 %v2854
    %v2856 = vpop.xlane.xlu0 %2855
    %v2857 = vsel %vm719, %v2841, -inf
    %2858 = vmax.xlane.f32.xlu0 %v2857
    %v2859 = vpop.xlane.xlu0 %2858
    %v2860 = vsel %vm719, %v2842, -inf
    %2861 = vmax.xlane.f32.xlu0 %v2860
    %v2862 = vpop.xlane.xlu0 %2861
    %v2863 = vsel %vm719, %v2843, -inf
    %2864 = vmax.xlane.f32.xlu0 %v2863
    %v2865 = vpop.xlane.xlu0 %2864
    %v2866 = vsel %vm719, %v2844, -inf
    %2867 = vmax.xlane.f32.xlu0 %v2866
    %v2868 = vpop.xlane.xlu0 %2867
    %v2869 = vsel %vm1497, %v2847, %v2829
    %v2870 = vsel %vm1497, %v2850, %v2830
    %v2871 = vsel %vm1497, %v2853, %v2831
    %v2872 = vsel %vm1497, %v2856, %v2832
    %v2873 = vsel %vm1497, %v2859, %v2833
    %v2874 = vsel %vm1497, %v2862, %v2834
    %v2875 = vsel %vm1497, %v2865, %v2835
    %v2876 = vsel %vm1497, %v2868, %v2836
    %v2877 = vsub.f32 %v2549, %v2869
    %v2878 = vsub.f32 %v2550, %v2870
    %v2879 = vsub.f32 %v2551, %v2871
    %v2880 = vsub.f32 %v2552, %v2872
    %v2881 = vsub.f32 %v2553, %v2873
    %v2882 = vsub.f32 %v2554, %v2874
    %v2883 = vsub.f32 %v2555, %v2875
    %v2884 = vsub.f32 %v2556, %v2876
    %v2885 = vmul.f32 %v2877, 1.442695
    %v2886 = vpow.pop %v2885
    %v2887 = vmul.f32 %v2878, 1.442695
    %v2888 = vpow.pop %v2887
    %v2889 = vmul.f32 %v2879, 1.442695
    %v2890 = vpow.pop %v2889
    %v2891 = vmul.f32 %v2880, 1.442695
    %v2892 = vpow.pop %v2891
    %v2893 = vmul.f32 %v2881, 1.442695
    %v2894 = vpow.pop %v2893
    %v2895 = vmul.f32 %v2882, 1.442695
    %v2896 = vpow.pop %v2895
    %v2897 = vmul.f32 %v2883, 1.442695
    %v2898 = vpow.pop %v2897
    %v2899 = vmul.f32 %v2884, 1.442695
    %v2900 = vpow.pop %v2899
    %v2901 = vpack.c.bf16 %v2888, %v2886
    %v2902 = vpack.c.bf16 %v2892, %v2890
    %v2903 = vpack.c.bf16 %v2896, %v2894
    %v2904 = vpack.c.bf16 %v2900, %v2898
    %v2906 = vsel %vm719, %v2901, 0
    %v2909 = vsel %vm719, %v2902, 0
    %v2912 = vsel %vm719, %v2903, 0
    %v2915 = vsel %vm719, %v2904, 0
    %2917 = vmatpush.bf16.msra.mxu0 0
    %2918 = vmatpush.bf16.msra.mxu0 0
    %2919 = vmatpush.bf16.msra.mxu0 0
    %2920 = vmatpush.bf16.msra.mxu0 0
    %2921 = vmatpush.bf16.msra.mxu0 %v1569
    %2922 = vmatpush.bf16.msra.mxu0 %v1568
    %2923 = vmatpush.bf16.msra.mxu0 %v1567
    %2924 = vmatpush.bf16.msra.mxu0 %v1566
    %2925 = vmatmul.bf16.gmra.mxu0 %v2906
    %v2926 = vpop.f32.mrf.mxu0
    %v2927 = vadd.f32 0.0, %v2926
    %v2928 = vpop.f32.mrf.mxu0
    %v2929 = vadd.f32 0.0, %v2928
    %2930 = vmatmul.bf16.gmra.mxu0 %v2909
    %v2931 = vpop.f32.mrf.mxu0
    %v2932 = vadd.f32 0.0, %v2931
    %v2933 = vpop.f32.mrf.mxu0
    %v2934 = vadd.f32 0.0, %v2933
    %2935 = vmatmul.bf16.gmra.mxu0 %v2912
    %v2936 = vpop.f32.mrf.mxu0
    %v2937 = vadd.f32 0.0, %v2936
    %v2938 = vpop.f32.mrf.mxu0
    %v2939 = vadd.f32 0.0, %v2938
    %2940 = vmatmul.bf16.gmra.mxu0 %v2915
    %v2941 = vpop.f32.mrf.mxu0
    %v2942 = vadd.f32 0.0, %v2941
    %v2943 = vpop.f32.mrf.mxu0
    %v2944 = vadd.f32 0.0, %v2943
    %2945 = vdwg.mxu0
    %v2946 = vrcp.pop %v2927
    %v2947 = vrcp.pop %v2929
    %v2948 = vrcp.pop %v2932
    %v2949 = vrcp.pop %v2934
    %v2950 = vrcp.pop %v2937
    %v2951 = vrcp.pop %v2939
    %v2952 = vrcp.pop %v2942
    %v2953 = vrcp.pop %v2944
    %v2954 = vmul.f32 %v2886, %v2946
    %v2955 = vmul.f32 %v2888, %v2947
    %v2956 = vmul.f32 %v2890, %v2948
    %v2957 = vmul.f32 %v2892, %v2949
    %v2958 = vmul.f32 %v2894, %v2950
    %v2959 = vmul.f32 %v2896, %v2951
    %v2960 = vmul.f32 %v2898, %v2952
    %v2961 = vmul.f32 %v2900, %v2953
    %v2962 = vpack.c.bf16 %v2955, %v2954
    %v2963 = vpack.c.bf16 %v2957, %v2956
    %v2964 = vpack.c.bf16 %v2959, %v2958
    %v2965 = vpack.c.bf16 %v2961, %v2960
    %v2966 = vpack.c.bf16 %v2481, %v2480
    %v2967 = vpack.c.bf16 %v2483, %v2482
    %v2968 = vpack.c.bf16 %v2485, %v2484
    %v2969 = vpack.c.bf16 %v2487, %v2486
    %v2971 = vsel %vm719, %v2962, 0
    %v2974 = vsel %vm719, %v2963, 0
    %v2977 = vsel %vm719, %v2964, 0
    %v2980 = vsel %vm719, %v2965, 0
    %2982 = vmatpush.bf16.msra.mxu0 0
    %2983 = vmatpush.bf16.msra.mxu0 0
    %2984 = vmatpush.bf16.msra.mxu0 0
    %2985 = vmatpush.bf16.msra.mxu0 0
    %2986 = vmatpush.bf16.msra.mxu0 %v2969
    %2987 = vmatpush.bf16.msra.mxu0 %v2968
    %2988 = vmatpush.bf16.msra.mxu0 %v2967
    %2989 = vmatpush.bf16.msra.mxu0 %v2966
    %2990 = vmatmul.bf16.gmra.mxu0 %v2971
    %v2991 = vpop.f32.mrf.mxu0
    %v2992 = vadd.f32 0.0, %v2991
    %v2993 = vpop.f32.mrf.mxu0
    %v2994 = vadd.f32 0.0, %v2993
    %2995 = vmatmul.bf16.gmra.mxu0 %v2974
    %v2996 = vpop.f32.mrf.mxu0
    %v2997 = vadd.f32 0.0, %v2996
    %v2998 = vpop.f32.mrf.mxu0
    %v2999 = vadd.f32 0.0, %v2998
    %3000 = vmatmul.bf16.gmra.mxu0 %v2977
    %v3001 = vpop.f32.mrf.mxu0
    %v3002 = vadd.f32 0.0, %v3001
    %v3003 = vpop.f32.mrf.mxu0
    %v3004 = vadd.f32 0.0, %v3003
    %3005 = vmatmul.bf16.gmra.mxu0 %v2980
    %v3006 = vpop.f32.mrf.mxu0
    %v3007 = vadd.f32 0.0, %v3006
    %v3008 = vpop.f32.mrf.mxu0
    %v3009 = vadd.f32 0.0, %v3008
    %3010 = vdwg.mxu0
    %v3011 = vpack.c.bf16 %v2994, %v2992
    %v3012 = vpack.c.bf16 %v2999, %v2997
    %v3013 = vpack.c.bf16 %v3004, %v3002
    %v3014 = vpack.c.bf16 %v3009, %v3007
    %v3016 = vsel %vm364, %v3011, 0
    %v3019 = vsel %vm364, %v3012, 0
    %v3022 = vsel %vm364, %v3013, 0
    %v3025 = vsel %vm364, %v3014, 0
    %3027 = vmatpush.bf16.msra.mxu0 0
    %3028 = vmatpush.bf16.msra.mxu0 0
    %3029 = vmatpush.bf16.msra.mxu0 0
    %3030 = vmatpush.bf16.msra.mxu0 0
    %3031 = vmatpush.bf16.msra.mxu0 0
    %3032 = vmatpush.bf16.msra.mxu0 0
    %3033 = vmatpush.bf16.msra.mxu0 %v1692
    %3034 = vmatpush.bf16.msra.mxu0 %v1691
    %3035 = vmatmul.bf16.gmra.mxu0 %v3016
    %v3036 = vpop.f32.mrf.mxu0
    %v3037 = vadd.f32 %v1681, %v3036
    %v3038 = vpop.f32.mrf.mxu0
    %v3039 = vadd.f32 %v1681, %v3038
    %3040 = vmatmul.bf16.gmra.mxu0 %v3019
    %v3041 = vpop.f32.mrf.mxu0
    %v3042 = vadd.f32 %v1681, %v3041
    %v3043 = vpop.f32.mrf.mxu0
    %v3044 = vadd.f32 %v1681, %v3043
    %3045 = vmatmul.bf16.gmra.mxu0 %v3022
    %v3046 = vpop.f32.mrf.mxu0
    %v3047 = vadd.f32 %v1681, %v3046
    %v3048 = vpop.f32.mrf.mxu0
    %v3049 = vadd.f32 %v1681, %v3048
    %3050 = vmatmul.bf16.gmra.mxu0 %v3025
    %v3051 = vpop.f32.mrf.mxu0
    %v3052 = vadd.f32 %v1681, %v3051
    %v3053 = vpop.f32.mrf.mxu0
    %v3054 = vadd.f32 %v1681, %v3053
    %3055 = vdwg.mxu0
    %v3056 = vadd.f32 %v3037, %v2267
    %v3057 = vadd.f32 %v3039, %v2268
    %v3058 = vadd.f32 %v3042, %v2269
    %v3059 = vadd.f32 %v3044, %v2270
    %v3060 = vadd.f32 %v3047, %v2271
    %v3061 = vadd.f32 %v3049, %v2272
    %v3062 = vadd.f32 %v3052, %v2273
    %v3063 = vadd.f32 %v3054, %v2274
    %3064 = vxpose.xlu0.b32.start [1/16] %v3056, 128
    %3065 = vxpose.xlu0.b32.cont [2/16] %v3057, 128
    %3066 = vxpose.xlu0.b32.cont [3/16] %v3058, 128
    %3067 = vxpose.xlu0.b32.cont [4/16] %v3059, 128
    %3068 = vxpose.xlu0.b32.cont [5/16] %v3060, 128
    %3069 = vxpose.xlu0.b32.cont [6/16] %v3061, 128
    %3070 = vxpose.xlu0.b32.cont [7/16] %v3062, 128
    %3071 = vxpose.xlu0.b32.cont [8/16] %v3063, 128
    %3072 = vxpose.xlu0.b32.cont [9/16] 0.0, 128
    %3073 = vxpose.xlu0.b32.cont [10/16] 0.0, 128
    %3074 = vxpose.xlu0.b32.cont [11/16] 0.0, 128
    %3075 = vxpose.xlu0.b32.cont [12/16] 0.0, 128
    %3076 = vxpose.xlu0.b32.cont [13/16] 0.0, 128
    %3077 = vxpose.xlu0.b32.cont [14/16] 0.0, 128
    %3078 = vxpose.xlu0.b32.cont [15/16] 0.0, 128
    %3079 = vxpose.xlu0.b32.end [16/16] 0.0, 128
    %v3080 = vpop.trf.xlu0
    %v3081 = vpop.trf.xlu0
    %v3082 = vpop.trf.xlu0
    %v3083 = vpop.trf.xlu0
    %v3084 = vpop.trf.xlu0
    %v3085 = vpop.trf.xlu0
    %v3086 = vpop.trf.xlu0
    %v3087 = vpop.trf.xlu0
    %v3088 = vpop.trf.xlu0
    %v3089 = vpop.trf.xlu0
    %v3090 = vpop.trf.xlu0
    %v3091 = vpop.trf.xlu0
    %v3092 = vpop.trf.xlu0
    %v3093 = vpop.trf.xlu0
    %v3094 = vpop.trf.xlu0
    %v3095 = vpop.trf.xlu0
    %s3096 = scalar_lea.vmem [#allocation24], 32
    %3097 = vst.msk [vmem:[%s3096] sm:$0xff] %vm719, %v3080
    %3098 = vst.msk [vmem:[%s3096 + $0x8] sm:$0xff] %vm719, %v3081
    %3099 = vst.msk [vmem:[%s3096 + $0x10] sm:$0xff] %vm719, %v3082
    %3100 = vst.msk [vmem:[%s3096 + $0x18] sm:$0xff] %vm719, %v3083
    // Predicated region
    $region138: #{tpu_custom_call.1} parent=1 // pred_check
      _
    $region139: #{tpu_custom_call.1} parent=1 // pred_check_branch
      %3102 = sbr.rel (0) target = $region141
    $region140: #{tpu_custom_call.1} parent=1 // pred_region
      %3104 = vsyncadd [#allocation5], 0
      %s3105 = sshll.u32 [#allocation24], 4
      %s3106 = int_to_ptr.vmem [resolvable:$true] %s3105
      %s3107 = sshll.u32 %s21, 4
      %s3108 = int_to_ptr.hbm [resolvable:$true] %s3107
      %3113 = dma.vmem_to_hbm [thread:$0]  %s3106, 1024, %s3108, [#allocation5], 128, 128, 8
    $region141: #{tpu_custom_call.1} parent=1 // pred_fallthru
      _
    // Predicated region
    $region142: #{tpu_custom_call.1} parent=1 // pred_check
      _
    $region143: #{tpu_custom_call.1} parent=1 // pred_check_branch
      %3115 = sbr.rel (0) target = $region145
    $region144: #{tpu_custom_call.1} parent=1 // pred_region
      %3117 = dma.done [#allocation5], 1024
    $region145: #{tpu_custom_call.1} parent=1 // pred_fallthru
      _
    %3118 = vsyncpa [#allocation4], 1
    %3119 = vsyncpa [#allocation7], 1
    %3120 = vsyncpa [#allocation10], 1
    %3121 = vsyncpa [#allocation13], 1
    %3122 = vsyncpa [#allocation16], 1
    %3123 = vsyncpa [#allocation19], 1
    %3124 = vsyncpa [#allocation22], 1
    %3125 = vsyncpa [#allocation5], 1

</llo_original>
